<compile_context>
chip_gen: v5e
topology: v5e:2x2
jax: 0.10.0
libtpu: 0.0.40
codegen_flags: <defaults>
</compile_context>

<pallas_src>
import jax
import jax.numpy as jnp
from jax.experimental import pallas as pl
from jax.experimental.pallas import tpu as pltpu


# ----------------------------------------------------------------------------
# Fused forward kernel
# ----------------------------------------------------------------------------

def _full_spec(shape):
    # Whole-array-in-VMEM BlockSpec (block == full array, exempt from the
    # (8,128) divisibility rule).
    nd = len(shape)
    return pl.BlockSpec(shape, lambda *_: (0,) * nd)


def _make_fused_kernel(num_layers, win, num_nodes, hidden):
    """Build the fused STGSN_Enc forward kernel (static layer/window unroll)."""
    G = win + 1  # graph 0 = global graph, graphs 1..win = snapshots

    def kernel(*refs):
        sup_ref, feat_ref, gts_ref = refs[:3]
        w_refs = refs[3:3 + num_layers]
        pack_ref, dyn_ref, loss_ref = refs[3 + num_layers:]

        n = sup_ref.shape[1]
        H = hidden

        sup = sup_ref[...]                                   # (G, N, N)
        h = feat_ref[...]                                    # (G, N, D0)

        # ---- stacked GNN layers over {global graph} + {win snapshot graphs} ----
        # GNN layer: L2-row-normalize( ReLU( (sup @ x) @ W ) )   (dropout = identity, eval)
        for l in range(num_layers):
            w = w_refs[l][...]                               # (Din, Dout)
            # Batched per-graph neighborhood aggregation (one dot_general).
            agg = jnp.einsum('gij,gjd->gid', sup, h,
                             preferred_element_type=jnp.float32)   # (G, N, Din)
            # One flat MXU matmul for the shared layer weight.
            z = jnp.dot(agg.reshape(G * n, agg.shape[-1]), w,
                        preferred_element_type=jnp.float32)        # (G*N, Dout)
            z = jnp.maximum(z, 0.0)
            # F.normalize(h, p=2, dim=1) = h * rsqrt(max(sum(h^2), 1e-24))  (EUP rsqrt)
            sumsq = jnp.sum(z * z, axis=1, keepdims=True)
            z = z * jax.lax.rsqrt(jnp.maximum(sumsq, 1e-24))
            h = z.reshape(G, n, z.shape[-1])

        gbl = h[0]                                           # (N, H)
        # In eval mode (dropout = identity) the 'cites' branch equals the 'ind'
        # branch at every layer; alias it (bit-identical, halves GNN work).
        h_ind = h[1:]                                        # (win, N, H)

        # ---- packed small parameters (static row offsets) ----
        mlp_w = pack_ref[0:H, :]                             # (H, H)  (transposed Linear weight)
        mlp_b = pack_ref[H:H + 1, :]                         # (1, H)
        att_wq = pack_ref[H + 1:2 * H + 1, :]                # (H, H)
        att_wk = pack_ref[2 * H + 1:3 * H + 1, :]            # (H, H)
        pred_w = pack_ref[3 * H + 1:3 * H + 2, :]            # (1, H)
        pred_b = pack_ref[3 * H + 2:3 * H + 3, 0:1]          # (1, 1)

        # ---- fusion ('add') + shared MLP, batched over all snapshots ----
        # fusion(ind, cites) = ind + cites = 2 * ind  (cites aliased to ind)
        fused = (2.0 * h_ind).reshape(win * n, H)
        emb = jnp.dot(fused, mlp_w,
                      preferred_element_type=jnp.float32) + mlp_b   # (win*N, H)
        emb3 = emb.reshape(win, n, H)

        # ---- node-prediction loss (FcPredictor ~ Linear(H, 1)) ----
        # VPU lane-reduce instead of a lane-1 MXU matmul; gt is lane-dense (win, N).
        pred = jnp.sum(h_ind * pred_w, axis=-1) + pred_b              # (win, N)
        diff = pred - gts_ref[...]                                    # (win, N)
        # mean_t[ mean_n (pred-gt)^2 ] == sum over all (t,n) / (win*N)
        d2 = jnp.sum(diff * diff, axis=1, keepdims=True)              # (win, 1)
        loss_ref[...] = jnp.sum(d2, axis=0, keepdims=True) / (win * n)

        # ---- temporal attention aggregation (vectorized over the window) ----
        q = jnp.dot(gbl, att_wq, preferred_element_type=jnp.float32)  # (N, H)
        keys = jnp.dot(emb, att_wk,
                       preferred_element_type=jnp.float32).reshape(win, n, H)
        logits = jnp.sum(q[None, :, :] * keys, axis=-1, keepdims=True)  # (win, N, 1)
        att = jax.nn.sigmoid(logits) / num_nodes
        acc = jnp.sum(att * emb3, axis=0)                              # (N, H)

        # dyn_emb = concat([agg_emb, gbl_emb], dim=1) -> two direct sub-slice stores.
        dyn_ref[:, :H] = acc
        dyn_ref[:, H:] = gbl

    return kernel


# ----------------------------------------------------------------------------
# Parameter init (deterministic, xavier-uniform style)
# ----------------------------------------------------------------------------

def _xavier(key, shape):
    fan_in, fan_out = shape[0], shape[1]
    lim = jnp.sqrt(6.0 / (fan_in + fan_out))
    return jax.random.uniform(key, shape, jnp.float32, -lim, lim)


def init_params(key, enc_dims):
    hidden = enc_dims[-1]
    keys = jax.random.split(key, 8 + len(enc_dims))
    params = {}
    params["gnn_ws"] = [
        _xavier(keys[l], (enc_dims[l], enc_dims[l + 1]))
        for l in range(len(enc_dims) - 1)
    ]
    params["mlp_w_t"] = _xavier(keys[-1], (hidden, hidden))      # stored transposed: x @ W^T
    params["mlp_b"] = jnp.zeros((1, hidden), jnp.float32)
    params["att_wq"] = _xavier(keys[-2], (hidden, hidden))
    params["att_wk"] = _xavier(keys[-3], (hidden, hidden))
    params["pred_w_row"] = _xavier(keys[-4], (hidden, 1)).T       # (1, hidden); FcPredictor ~ Linear(hidden, 1)
    params["pred_b"] = jnp.zeros((1, 1), jnp.float32)
    return params


# ----------------------------------------------------------------------------
# STGSN_Enc forward (fusion_mode = 'add')
# ----------------------------------------------------------------------------

def build_cites(sup_list):
    # TODO(synk): cites_loader.build_cites is external; synthesize ground truth
    # as per-snapshot normalized in-degree (column sums of the support),
    # shipped lane-dense as (win, N).
    gts = []
    for sup in sup_list:
        indeg = jnp.sum(sup, axis=0)                              # (N,)
        gts.append(indeg / (jnp.max(indeg) + 1e-12))
    return jnp.stack(gts, axis=0)                                 # (win, N)


def stgsn_enc_forward(params, sup_list, feat_list, gbl_sup, gbl_feat, num_nodes):
    win = len(sup_list)
    ws = params["gnn_ws"]
    num_layers = len(ws)
    n = gbl_sup.shape[0]
    hidden = ws[-1].shape[1]

    # Pre-stack global + per-snapshot graphs (graph 0 = global).
    sup_all = jnp.stack([gbl_sup] + list(sup_list), axis=0)       # (win+1, N, N)
    feat_all = jnp.stack([gbl_feat] + list(feat_list), axis=0)    # (win+1, N, D0)
    gts = build_cites(sup_list)                                   # (win, N)

    # Pack the six small post-GNN parameter tensors into one buffer (one DMA).
    packed = jnp.concatenate([
        params["mlp_w_t"],                                        # rows [0, H)
        params["mlp_b"],                                          # row  [H]
        params["att_wq"],                                         # rows [H+1, 2H+1)
        params["att_wk"],                                         # rows [2H+1, 3H+1)
        params["pred_w_row"],                                     # row  [3H+1]
        jnp.full((1, hidden), params["pred_b"][0, 0], jnp.float32),  # row [3H+2] (bias in col 0)
    ], axis=0)                                                    # (3H+3, H)

    inputs = [sup_all, feat_all, gts] + list(ws) + [packed]

    kernel = _make_fused_kernel(num_layers, win, num_nodes, hidden)
    dyn_emb, loss = pl.pallas_call(
        kernel,
        out_shape=(
            jax.ShapeDtypeStruct((n, 2 * hidden), jnp.float32),
            jax.ShapeDtypeStruct((1, 1), jnp.float32),
        ),
        grid=(1,),
        in_specs=[_full_spec(x.shape) for x in inputs],
        out_specs=(
            _full_spec((n, 2 * hidden)),
            _full_spec((1, 1)),
        ),
        compiler_params=pltpu.CompilerParams(
            dimension_semantics=("arbitrary",)),
    )(*inputs)

    return dyn_emb, loss[0, 0]


# ----------------------------------------------------------------------------
# Example run
# ----------------------------------------------------------------------------

def _make_support(key, n):
    u = jax.random.uniform(key, (n, n))
    adj = (u > 0.75).astype(jnp.float32)
    adj = jnp.maximum(adj, adj.T) + jnp.eye(n, dtype=jnp.float32)  # symmetric + self loops
    deg = jnp.sum(adj, axis=1, keepdims=True)
    return adj / jnp.maximum(deg, 1.0)                             # row-normalized support


if __name__ == "__main__":
    N = 64                 # num_nodes
    ENC_DIMS = [16, 32, 32]
    WIN = 3                # window size (len(sup_list))

    key = jax.random.PRNGKey(0)
    k_par, k_sup, k_feat, k_gsup, k_gfeat = jax.random.split(key, 5)

    params = init_params(k_par, ENC_DIMS)

    sup_keys = jax.random.split(k_sup, WIN)
    feat_keys = jax.random.split(k_feat, WIN)
    sup_list = [_make_support(sup_keys[t], N) for t in range(WIN)]
    feat_list = [jax.random.normal(feat_keys[t], (N, ENC_DIMS[0]), jnp.float32) for t in range(WIN)]
    gbl_sup = _make_support(k_gsup, N)
    gbl_feat = jax.random.normal(k_gfeat, (N, ENC_DIMS[0]), jnp.float32)

    fwd = jax.jit(stgsn_enc_forward, static_argnums=(5,))
    dyn_emb, node_loss = fwd(params, sup_list, feat_list, gbl_sup, gbl_feat, N)
    jax.block_until_ready(dyn_emb)
    jax.block_until_ready(node_loss)

    assert dyn_emb.shape == (N, 2 * ENC_DIMS[-1])
    assert node_loss.shape == ()
    print("KERNEL_OK")
</pallas_src>

<mosaic_0001>
module attributes {stable_mosaic.version = 11 : i64} {
  func.func @kernel(%arg0: i32, %arg1: memref<4x64x64xf32, #tpu.memory_space<vmem>>, %arg2: memref<4x64x16xf32, #tpu.memory_space<vmem>>, %arg3: memref<3x64xf32, #tpu.memory_space<vmem>>, %arg4: memref<16x32xf32, #tpu.memory_space<vmem>>, %arg5: memref<32x32xf32, #tpu.memory_space<vmem>>, %arg6: memref<99x32xf32, #tpu.memory_space<vmem>>, %arg7: memref<64x64xf32, #tpu.memory_space<vmem>>, %arg8: memref<1x1xf32, #tpu.memory_space<vmem>>) attributes {dimension_semantics = [#tpu.dimension_semantics<arbitrary>], iteration_bounds = array<i64: 1>, scalar_prefetch = 0 : i64, scratch_operands = 0 : i64, tpu.core_type = #tpu.core_type<tc>, window_params = [{pipeline_mode = #tpu.pipeline_mode<synchronous>, transform_indices = @transform_0, window_bounds = array<i64: 4, 64, 64>}, {pipeline_mode = #tpu.pipeline_mode<synchronous>, transform_indices = @transform_1, window_bounds = array<i64: 4, 64, 16>}, {pipeline_mode = #tpu.pipeline_mode<synchronous>, transform_indices = @transform_2, window_bounds = array<i64: 3, 64>}, {pipeline_mode = #tpu.pipeline_mode<synchronous>, transform_indices = @transform_3, window_bounds = array<i64: 16, 32>}, {pipeline_mode = #tpu.pipeline_mode<synchronous>, transform_indices = @transform_4, window_bounds = array<i64: 32, 32>}, {pipeline_mode = #tpu.pipeline_mode<synchronous>, transform_indices = @transform_5, window_bounds = array<i64: 99, 32>}, {pipeline_mode = #tpu.pipeline_mode<synchronous>, transform_indices = @transform_6, window_bounds = array<i64: 64, 64>}, {pipeline_mode = #tpu.pipeline_mode<synchronous>, transform_indices = @transform_7, window_bounds = array<i64: 1, 1>}]} {
    %c0 = arith.constant 0 : index
    %c0_0 = arith.constant 0 : index
    %c0_1 = arith.constant 0 : index
    %0 = vector.load %arg1[%c0, %c0_0, %c0_1] : memref<4x64x64xf32, #tpu.memory_space<vmem>>, vector<4x64x64xf32>
    %c0_2 = arith.constant 0 : index
    %c0_3 = arith.constant 0 : index
    %c0_4 = arith.constant 0 : index
    %1 = vector.load %arg2[%c0_2, %c0_3, %c0_4] : memref<4x64x16xf32, #tpu.memory_space<vmem>>, vector<4x64x16xf32>
    %c0_5 = arith.constant 0 : index
    %c0_6 = arith.constant 0 : index
    %2 = vector.load %arg4[%c0_5, %c0_6] : memref<16x32xf32, #tpu.memory_space<vmem>>, vector<16x32xf32>
    "tpu.trace_start"() <{level = 10 : i32, message = "gij,gjd->gid"}> : () -> ()
    %cst = arith.constant dense<0.000000e+00> : vector<4x64x16xf32>
    %3 = tpu.matmul %0, %1, %cst {dimension_numbers = #tpu.dot_dimension_numbers<[2], [1], [1], [2], [0, 0, 0, 1, 1, 2], [0], [0]>} : vector<4x64x64xf32>, vector<4x64x16xf32>, vector<4x64x16xf32> -> vector<4x64x16xf32>
    "tpu.trace_stop"() : () -> ()
    %4 = vector.shape_cast %3 : vector<4x64x16xf32> to vector<256x16xf32>
    %cst_7 = arith.constant dense<0.000000e+00> : vector<256x32xf32>
    %5 = tpu.matmul %4, %2, %cst_7 {dimension_numbers = #tpu.dot_dimension_numbers<[1], [0], [0], [1], [0, 0, 1, 1], [], []>} : vector<256x16xf32>, vector<16x32xf32>, vector<256x32xf32> -> vector<256x32xf32>
    %cst_8 = arith.constant 0.000000e+00 : f32
    %6 = vector.broadcast %cst_8 : f32 to vector<256x32xf32>
    %7 = arith.maximumf %5, %6 : vector<256x32xf32>
    %8 = arith.mulf %7, %7 : vector<256x32xf32>
    %cst_9 = arith.constant dense<0.000000e+00> : vector<256xf32>
    %9 = vector.multi_reduction <add>, %8, %cst_9 [1] : vector<256x32xf32> to vector<256xf32>
    %10 = vector.shape_cast %9 : vector<256xf32> to vector<256x1xf32>
    %cst_10 = arith.constant 1.000000e-24 : f32
    %11 = vector.broadcast %cst_10 : f32 to vector<256x1xf32>
    %12 = arith.maximumf %10, %11 : vector<256x1xf32>
    %13 = math.rsqrt %12 : vector<256x1xf32>
    %14 = vector.broadcast %13 : vector<256x1xf32> to vector<256x32xf32>
    %15 = arith.mulf %7, %14 : vector<256x32xf32>
    %16 = vector.shape_cast %15 : vector<256x32xf32> to vector<4x64x32xf32>
    %c0_11 = arith.constant 0 : index
    %c0_12 = arith.constant 0 : index
    %17 = vector.load %arg5[%c0_11, %c0_12] : memref<32x32xf32, #tpu.memory_space<vmem>>, vector<32x32xf32>
    "tpu.trace_start"() <{level = 10 : i32, message = "gij,gjd->gid"}> : () -> ()
    %cst_13 = arith.constant dense<0.000000e+00> : vector<4x64x32xf32>
    %18 = tpu.matmul %0, %16, %cst_13 {dimension_numbers = #tpu.dot_dimension_numbers<[2], [1], [1], [2], [0, 0, 0, 1, 1, 2], [0], [0]>} : vector<4x64x64xf32>, vector<4x64x32xf32>, vector<4x64x32xf32> -> vector<4x64x32xf32>
    "tpu.trace_stop"() : () -> ()
    %19 = vector.shape_cast %18 : vector<4x64x32xf32> to vector<256x32xf32>
    %cst_14 = arith.constant dense<0.000000e+00> : vector<256x32xf32>
    %20 = tpu.matmul %19, %17, %cst_14 {dimension_numbers = #tpu.dot_dimension_numbers<[1], [0], [0], [1], [0, 0, 1, 1], [], []>} : vector<256x32xf32>, vector<32x32xf32>, vector<256x32xf32> -> vector<256x32xf32>
    %cst_15 = arith.constant 0.000000e+00 : f32
    %21 = vector.broadcast %cst_15 : f32 to vector<256x32xf32>
    %22 = arith.maximumf %20, %21 : vector<256x32xf32>
    %23 = arith.mulf %22, %22 : vector<256x32xf32>
    %cst_16 = arith.constant dense<0.000000e+00> : vector<256xf32>
    %24 = vector.multi_reduction <add>, %23, %cst_16 [1] : vector<256x32xf32> to vector<256xf32>
    %25 = vector.shape_cast %24 : vector<256xf32> to vector<256x1xf32>
    %cst_17 = arith.constant 1.000000e-24 : f32
    %26 = vector.broadcast %cst_17 : f32 to vector<256x1xf32>
    %27 = arith.maximumf %25, %26 : vector<256x1xf32>
    %28 = math.rsqrt %27 : vector<256x1xf32>
    %29 = vector.broadcast %28 : vector<256x1xf32> to vector<256x32xf32>
    %30 = arith.mulf %22, %29 : vector<256x32xf32>
    %31 = vector.shape_cast %30 : vector<256x32xf32> to vector<4x64x32xf32>
    %32 = vector.extract_strided_slice %31 {offsets = [0, 0, 0], sizes = [1, 64, 32], strides = [1, 1, 1]} : vector<4x64x32xf32> to vector<1x64x32xf32>
    %33 = vector.shape_cast %32 : vector<1x64x32xf32> to vector<64x32xf32>
    %34 = vector.extract_strided_slice %31 {offsets = [1, 0, 0], sizes = [3, 64, 32], strides = [1, 1, 1]} : vector<4x64x32xf32> to vector<3x64x32xf32>
    %c0_18 = arith.constant 0 : index
    %c0_19 = arith.constant 0 : index
    %35 = vector.load %arg6[%c0_18, %c0_19] : memref<99x32xf32, #tpu.memory_space<vmem>>, vector<32x32xf32>
    %c32 = arith.constant 32 : index
    %c0_20 = arith.constant 0 : index
    %36 = vector.load %arg6[%c32, %c0_20] : memref<99x32xf32, #tpu.memory_space<vmem>>, vector<1x32xf32>
    %c33 = arith.constant 33 : index
    %c0_21 = arith.constant 0 : index
    %37 = vector.load %arg6[%c33, %c0_21] : memref<99x32xf32, #tpu.memory_space<vmem>>, vector<32x32xf32>
    %c65 = arith.constant 65 : index
    %c0_22 = arith.constant 0 : index
    %38 = vector.load %arg6[%c65, %c0_22] : memref<99x32xf32, #tpu.memory_space<vmem>>, vector<32x32xf32>
    %c97 = arith.constant 97 : index
    %c0_23 = arith.constant 0 : index
    %39 = vector.load %arg6[%c97, %c0_23] : memref<99x32xf32, #tpu.memory_space<vmem>>, vector<1x32xf32>
    %c98 = arith.constant 98 : index
    %c0_24 = arith.constant 0 : index
    %40 = vector.load %arg6[%c98, %c0_24] : memref<99x32xf32, #tpu.memory_space<vmem>>, vector<1x1xf32>
    %cst_25 = arith.constant 2.000000e+00 : f32
    %41 = vector.broadcast %cst_25 : f32 to vector<3x64x32xf32>
    %42 = arith.mulf %41, %34 : vector<3x64x32xf32>
    %43 = vector.shape_cast %42 : vector<3x64x32xf32> to vector<192x32xf32>
    %cst_26 = arith.constant dense<0.000000e+00> : vector<192x32xf32>
    %44 = tpu.matmul %43, %35, %cst_26 {dimension_numbers = #tpu.dot_dimension_numbers<[1], [0], [0], [1], [0, 0, 1, 1], [], []>} : vector<192x32xf32>, vector<32x32xf32>, vector<192x32xf32> -> vector<192x32xf32>
    %45 = vector.broadcast %36 : vector<1x32xf32> to vector<192x32xf32>
    %46 = arith.addf %44, %45 : vector<192x32xf32>
    %47 = vector.shape_cast %46 : vector<192x32xf32> to vector<3x64x32xf32>
    %48 = vector.shape_cast %39 : vector<1x32xf32> to vector<1x1x32xf32>
    %49 = vector.broadcast %48 : vector<1x1x32xf32> to vector<3x64x32xf32>
    %50 = arith.mulf %34, %49 : vector<3x64x32xf32>
    %cst_27 = arith.constant dense<0.000000e+00> : vector<3x64xf32>
    %51 = vector.multi_reduction <add>, %50, %cst_27 [2] : vector<3x64x32xf32> to vector<3x64xf32>
    %52 = vector.broadcast %40 : vector<1x1xf32> to vector<3x64xf32>
    %53 = arith.addf %51, %52 : vector<3x64xf32>
    %c0_28 = arith.constant 0 : index
    %c0_29 = arith.constant 0 : index
    %54 = vector.load %arg3[%c0_28, %c0_29] : memref<3x64xf32, #tpu.memory_space<vmem>>, vector<3x64xf32>
    %55 = arith.subf %53, %54 : vector<3x64xf32>
    %56 = arith.mulf %55, %55 : vector<3x64xf32>
    %cst_30 = arith.constant dense<0.000000e+00> : vector<3xf32>
    %57 = vector.multi_reduction <add>, %56, %cst_30 [1] : vector<3x64xf32> to vector<3xf32>
    %58 = vector.shape_cast %57 : vector<3xf32> to vector<3x1xf32>
    %cst_31 = arith.constant dense<0.000000e+00> : vector<1xf32>
    %59 = vector.multi_reduction <add>, %58, %cst_31 [0] : vector<3x1xf32> to vector<1xf32>
    %60 = vector.shape_cast %59 : vector<1xf32> to vector<1x1xf32>
    %cst_32 = arith.constant 1.920000e+02 : f32
    %61 = vector.broadcast %cst_32 : f32 to vector<1x1xf32>
    %62 = arith.divf %60, %61 : vector<1x1xf32>
    %c0_33 = arith.constant 0 : index
    %c0_34 = arith.constant 0 : index
    %63 = vector.load %arg8[%c0_33, %c0_34] : memref<1x1xf32, #tpu.memory_space<vmem>>, vector<1x1xf32>
    tpu.vector_store %arg8[%c0_33, %c0_34], %62 {strides = array<i32>} : memref<1x1xf32, #tpu.memory_space<vmem>>, vector<1x1xf32>,
    %cst_35 = arith.constant dense<0.000000e+00> : vector<64x32xf32>
    %64 = tpu.matmul %33, %37, %cst_35 {dimension_numbers = #tpu.dot_dimension_numbers<[1], [0], [0], [1], [0, 0, 1, 1], [], []>} : vector<64x32xf32>, vector<32x32xf32>, vector<64x32xf32> -> vector<64x32xf32>
    %cst_36 = arith.constant dense<0.000000e+00> : vector<192x32xf32>
    %65 = tpu.matmul %46, %38, %cst_36 {dimension_numbers = #tpu.dot_dimension_numbers<[1], [0], [0], [1], [0, 0, 1, 1], [], []>} : vector<192x32xf32>, vector<32x32xf32>, vector<192x32xf32> -> vector<192x32xf32>
    %66 = vector.shape_cast %65 : vector<192x32xf32> to vector<3x64x32xf32>
    %67 = vector.shape_cast %64 : vector<64x32xf32> to vector<1x64x32xf32>
    %68 = vector.broadcast %67 : vector<1x64x32xf32> to vector<3x64x32xf32>
    %69 = arith.mulf %68, %66 : vector<3x64x32xf32>
    %cst_37 = arith.constant dense<0.000000e+00> : vector<3x64xf32>
    %70 = vector.multi_reduction <add>, %69, %cst_37 [2] : vector<3x64x32xf32> to vector<3x64xf32>
    %71 = vector.shape_cast %70 : vector<3x64xf32> to vector<3x64x1xf32>
    %72 = arith.negf %71 : vector<3x64x1xf32>
    %73 = math.exp %72 : vector<3x64x1xf32>
    %cst_38 = arith.constant 1.000000e+00 : f32
    %74 = vector.broadcast %cst_38 : f32 to vector<3x64x1xf32>
    %75 = arith.addf %74, %73 : vector<3x64x1xf32>
    %76 = arith.divf %74, %75 : vector<3x64x1xf32>
    %cst_39 = arith.constant 6.400000e+01 : f32
    %77 = vector.broadcast %cst_39 : f32 to vector<3x64x1xf32>
    %78 = arith.divf %76, %77 : vector<3x64x1xf32>
    %79 = vector.broadcast %78 : vector<3x64x1xf32> to vector<3x64x32xf32>
    %80 = arith.mulf %79, %47 : vector<3x64x32xf32>
    %cst_40 = arith.constant dense<0.000000e+00> : vector<64x32xf32>
    %81 = vector.multi_reduction <add>, %80, %cst_40 [0] : vector<3x64x32xf32> to vector<64x32xf32>
    %c0_41 = arith.constant 0 : index
    %c0_42 = arith.constant 0 : index
    %82 = vector.load %arg7[%c0_41, %c0_42] : memref<64x64xf32, #tpu.memory_space<vmem>>, vector<64x32xf32>
    tpu.vector_store %arg7[%c0_41, %c0_42], %81 {strides = array<i32>} : memref<64x64xf32, #tpu.memory_space<vmem>>, vector<64x32xf32>,
    %c0_43 = arith.constant 0 : index
    %c32_44 = arith.constant 32 : index
    %83 = vector.load %arg7[%c0_43, %c32_44] : memref<64x64xf32, #tpu.memory_space<vmem>>, vector<64x32xf32>
    tpu.vector_store %arg7[%c0_43, %c32_44], %33 {strides = array<i32>} : memref<64x64xf32, #tpu.memory_space<vmem>>, vector<64x32xf32>,
    return
  }
  func.func @transform_0(%arg0: i32) -> (i32, i32, i32) {
    %c0_i32 = arith.constant 0 : i32
    %c0_i32_0 = arith.constant 0 : i32
    %c0_i32_1 = arith.constant 0 : i32
    %c0_i32_2 = arith.constant 0 : i32
    return %c0_i32, %c0_i32_0, %c0_i32_1 : i32, i32, i32
  }
  func.func @transform_1(%arg0: i32) -> (i32, i32, i32) {
    %c0_i32 = arith.constant 0 : i32
    %c0_i32_0 = arith.constant 0 : i32
    %c0_i32_1 = arith.constant 0 : i32
    %c0_i32_2 = arith.constant 0 : i32
    return %c0_i32, %c0_i32_0, %c0_i32_1 : i32, i32, i32
  }
  func.func @transform_2(%arg0: i32) -> (i32, i32) {
    %c0_i32 = arith.constant 0 : i32
    %c0_i32_0 = arith.constant 0 : i32
    %c0_i32_1 = arith.constant 0 : i32
    return %c0_i32, %c0_i32_0 : i32, i32
  }
  func.func @transform_3(%arg0: i32) -> (i32, i32) {
    %c0_i32 = arith.constant 0 : i32
    %c0_i32_0 = arith.constant 0 : i32
    %c0_i32_1 = arith.constant 0 : i32
    return %c0_i32, %c0_i32_0 : i32, i32
  }
  func.func @transform_4(%arg0: i32) -> (i32, i32) {
    %c0_i32 = arith.constant 0 : i32
    %c0_i32_0 = arith.constant 0 : i32
    %c0_i32_1 = arith.constant 0 : i32
    return %c0_i32, %c0_i32_0 : i32, i32
  }
  func.func @transform_5(%arg0: i32) -> (i32, i32) {
    %c0_i32 = arith.constant 0 : i32
    %c0_i32_0 = arith.constant 0 : i32
    %c0_i32_1 = arith.constant 0 : i32
    return %c0_i32, %c0_i32_0 : i32, i32
  }
  func.func @transform_6(%arg0: i32) -> (i32, i32) {
    %c0_i32 = arith.constant 0 : i32
    %c0_i32_0 = arith.constant 0 : i32
    %c0_i32_1 = arith.constant 0 : i32
    return %c0_i32, %c0_i32_0 : i32, i32
  }
  func.func @transform_7(%arg0: i32) -> (i32, i32) {
    %c0_i32 = arith.constant 0 : i32
    %c0_i32_0 = arith.constant 0 : i32
    %c0_i32_1 = arith.constant 0 : i32
    return %c0_i32, %c0_i32_0 : i32, i32
  }
}

</mosaic_0001>

<llo_original>
// kernel: stgsn_enc_forward.1
$region0: #{stgsn_enc_forward.1}
  #allocation0 [shape = 'u32[]', space=smem, size = 0x4, offset = 0x4, fixed_abs, tag = 'smem constant byte address 0x4 - core index']
  #allocation1 [shape = 'u32[72,128]{1,0:T(1,128)}', space=vmem, size = 0x9000, scoped, tag = 'internal scratch']
  %s0 = inlined_call_operand.vmem [shape: f32[4,64,64], index: 0, kind: input, shape index: {}]
  %s1 = inlined_call_operand.vmem [shape: f32[4,64,16], index: 1, kind: input, shape index: {}]
  %s2 = inlined_call_operand.vmem [shape: f32[3,64], index: 2, kind: input, shape index: {}]
  %s3 = inlined_call_operand.vmem [shape: f32[16,32], index: 3, kind: input, shape index: {}]
  %s4 = inlined_call_operand.vmem [shape: f32[32,32], index: 4, kind: input, shape index: {}]
  %s5 = inlined_call_operand.vmem [shape: f32[99,32], index: 5, kind: input, shape index: {}]
  %s6 = inlined_call_operand.hbm [shape: f32[64,64], index: 6, kind: output, shape index: {0}]
  %s7 = inlined_call_operand.hbm [shape: f32[1,1], index: 7, kind: output, shape index: {1}]
  %8 = xla_tuple %s6, %s7
  %s9 = sld [smem:[#allocation0]]
  $region42: #{stgsn_enc_forward.1} parent=0
    _
  %s11 = ssub.s32 1, %s9
  %s12 = scalar_select 0, %s11, %s9
  $region1: #{stgsn_enc_forward.1} parent=0
    #allocation2 [shape = 'u8[32768]{0}', space=vmem, size = 0x8000, scoped, tag = 'output window, operand 0, single buffered']
    #allocation3 [shape = 's32[1]{0}', space=sflag, size = 0x4, scoped, tag = 'scoped memory for stgsn_enc_forward.1']
    #allocation4 [shape = 'u8[512]{0}', space=vmem, size = 0x400, scoped, tag = 'output window, operand 1, single buffered']
    #allocation5 [shape = 's32[1]{0}', space=sflag, size = 0x4, scoped, tag = 'scoped memory for stgsn_enc_forward.1']
    %13 = vsyncpa [#allocation3], 0
    %14 = vsyncpa [#allocation5], 0
    // Predicated region
    $region2: #{stgsn_enc_forward.1} parent=1 // pred_check
      _
    $region3: #{stgsn_enc_forward.1} parent=1 // pred_check_branch
      %16 = sbr.rel (0) target = $region5
    $region4: #{stgsn_enc_forward.1} parent=1 // pred_region
      _
    $region5: #{stgsn_enc_forward.1} parent=1 // pred_fallthru
      _
    // Predicated region
    $region6: #{stgsn_enc_forward.1} parent=1 // pred_check
      _
    $region7: #{stgsn_enc_forward.1} parent=1 // pred_check_branch
      %18 = sbr.rel (0) target = $region9
    $region8: #{stgsn_enc_forward.1} parent=1 // pred_region
      _
    $region9: #{stgsn_enc_forward.1} parent=1 // pred_fallthru
      _
    // Predicated region
    $region10: #{stgsn_enc_forward.1} parent=1 // pred_check
      _
    $region11: #{stgsn_enc_forward.1} parent=1 // pred_check_branch
      %20 = sbr.rel (0) target = $region13
    $region12: #{stgsn_enc_forward.1} parent=1 // pred_region
      _
    $region13: #{stgsn_enc_forward.1} parent=1 // pred_fallthru
      _
    // Predicated region
    $region14: #{stgsn_enc_forward.1} parent=1 // pred_check
      _
    $region15: #{stgsn_enc_forward.1} parent=1 // pred_check_branch
      %22 = sbr.rel (0) target = $region17
    $region16: #{stgsn_enc_forward.1} parent=1 // pred_region
      _
    $region17: #{stgsn_enc_forward.1} parent=1 // pred_fallthru
      _
    // Predicated region
    $region18: #{stgsn_enc_forward.1} parent=1 // pred_check
      _
    $region19: #{stgsn_enc_forward.1} parent=1 // pred_check_branch
      %24 = sbr.rel (0) target = $region21
    $region20: #{stgsn_enc_forward.1} parent=1 // pred_region
      _
    $region21: #{stgsn_enc_forward.1} parent=1 // pred_fallthru
      _
    // Predicated region
    $region22: #{stgsn_enc_forward.1} parent=1 // pred_check
      _
    $region23: #{stgsn_enc_forward.1} parent=1 // pred_check_branch
      %26 = sbr.rel (0) target = $region25
    $region24: #{stgsn_enc_forward.1} parent=1 // pred_region
      _
    $region25: #{stgsn_enc_forward.1} parent=1 // pred_fallthru
      _
    %v27 = vld [vmem:[%s0] sm:$0xff]
    %v28 = vld [vmem:[%s0 + $0x8] sm:$0xff]
    %v29 = vld [vmem:[%s0 + $0x10] sm:$0xff]
    %v30 = vld [vmem:[%s0 + $0x18] sm:$0xff]
    %v31 = vld [vmem:[%s0 + $0x20] sm:$0xff]
    %v32 = vld [vmem:[%s0 + $0x28] sm:$0xff]
    %v33 = vld [vmem:[%s0 + $0x30] sm:$0xff]
    %v34 = vld [vmem:[%s0 + $0x38] sm:$0xff]
    %v35 = vld [vmem:[%s0 + $0x40] sm:$0xff]
    %v36 = vld [vmem:[%s0 + $0x48] sm:$0xff]
    %v37 = vld [vmem:[%s0 + $0x50] sm:$0xff]
    %v38 = vld [vmem:[%s0 + $0x58] sm:$0xff]
    %v39 = vld [vmem:[%s0 + $0x60] sm:$0xff]
    %v40 = vld [vmem:[%s0 + $0x68] sm:$0xff]
    %v41 = vld [vmem:[%s0 + $0x70] sm:$0xff]
    %v42 = vld [vmem:[%s0 + $0x78] sm:$0xff]
    %v43 = vld [vmem:[%s0 + $0x80] sm:$0xff]
    %v44 = vld [vmem:[%s0 + $0x88] sm:$0xff]
    %v45 = vld [vmem:[%s0 + $0x90] sm:$0xff]
    %v46 = vld [vmem:[%s0 + $0x98] sm:$0xff]
    %v47 = vld [vmem:[%s0 + $0xa0] sm:$0xff]
    %v48 = vld [vmem:[%s0 + $0xa8] sm:$0xff]
    %v49 = vld [vmem:[%s0 + $0xb0] sm:$0xff]
    %v50 = vld [vmem:[%s0 + $0xb8] sm:$0xff]
    %v51 = vld [vmem:[%s0 + $0xc0] sm:$0xff]
    %v52 = vld [vmem:[%s0 + $0xc8] sm:$0xff]
    %v53 = vld [vmem:[%s0 + $0xd0] sm:$0xff]
    %v54 = vld [vmem:[%s0 + $0xd8] sm:$0xff]
    %v55 = vld [vmem:[%s0 + $0xe0] sm:$0xff]
    %v56 = vld [vmem:[%s0 + $0xe8] sm:$0xff]
    %v57 = vld [vmem:[%s0 + $0xf0] sm:$0xff]
    %v58 = vld [vmem:[%s0 + $0xf8] sm:$0xff]
    %v59 = vld [vmem:[%s1] sm:$0xff]
    %v60 = vld [vmem:[%s1 + $0x8] sm:$0xff]
    %v61 = vld [vmem:[%s1 + $0x10] sm:$0xff]
    %v62 = vld [vmem:[%s1 + $0x18] sm:$0xff]
    %v63 = vld [vmem:[%s1 + $0x20] sm:$0xff]
    %v64 = vld [vmem:[%s1 + $0x28] sm:$0xff]
    %v65 = vld [vmem:[%s1 + $0x30] sm:$0xff]
    %v66 = vld [vmem:[%s1 + $0x38] sm:$0xff]
    %v67 = vld [vmem:[%s1 + $0x40] sm:$0xff]
    %v68 = vld [vmem:[%s1 + $0x48] sm:$0xff]
    %v69 = vld [vmem:[%s1 + $0x50] sm:$0xff]
    %v70 = vld [vmem:[%s1 + $0x58] sm:$0xff]
    %v71 = vld [vmem:[%s1 + $0x60] sm:$0xff]
    %v72 = vld [vmem:[%s1 + $0x68] sm:$0xff]
    %v73 = vld [vmem:[%s1 + $0x70] sm:$0xff]
    %v74 = vld [vmem:[%s1 + $0x78] sm:$0xff]
    %v75 = vld [vmem:[%s1 + $0x80] sm:$0xff]
    %v76 = vld [vmem:[%s1 + $0x88] sm:$0xff]
    %v77 = vld [vmem:[%s1 + $0x90] sm:$0xff]
    %v78 = vld [vmem:[%s1 + $0x98] sm:$0xff]
    %v79 = vld [vmem:[%s1 + $0xa0] sm:$0xff]
    %v80 = vld [vmem:[%s1 + $0xa8] sm:$0xff]
    %v81 = vld [vmem:[%s1 + $0xb0] sm:$0xff]
    %v82 = vld [vmem:[%s1 + $0xb8] sm:$0xff]
    %v83 = vld [vmem:[%s1 + $0xc0] sm:$0xff]
    %v84 = vld [vmem:[%s1 + $0xc8] sm:$0xff]
    %v85 = vld [vmem:[%s1 + $0xd0] sm:$0xff]
    %v86 = vld [vmem:[%s1 + $0xd8] sm:$0xff]
    %v87 = vld [vmem:[%s1 + $0xe0] sm:$0xff]
    %v88 = vld [vmem:[%s1 + $0xe8] sm:$0xff]
    %v89 = vld [vmem:[%s1 + $0xf0] sm:$0xff]
    %v90 = vld [vmem:[%s1 + $0xf8] sm:$0xff]
    %v91 = vld [vmem:[%s3] sm:$0xff]
    %v92 = vld [vmem:[%s3 + $0x8] sm:$0xff]
    %vm93 = vcmask 523264
    %v95 = vsel %vm93, %v27, 0
    %v98 = vsel %vm93, %v28, 0
    %v101 = vsel %vm93, %v29, 0
    %v104 = vsel %vm93, %v30, 0
    %v107 = vsel %vm93, %v31, 0
    %v110 = vsel %vm93, %v32, 0
    %v113 = vsel %vm93, %v33, 0
    %v116 = vsel %vm93, %v34, 0
    %118 = vmatpush.msra.mxu0 0.0
    %119 = vmatpush.msra.mxu0 0.0
    %120 = vmatpush.msra.mxu0 0.0
    %121 = vmatpush.msra.mxu0 0.0
    %122 = vmatpush.msra.mxu0 0.0
    %123 = vmatpush.msra.mxu0 0.0
    %124 = vmatpush.msra.mxu0 0.0
    %125 = vmatpush.msra.mxu0 0.0
    %126 = vmatpush.msra.mxu0 %v66
    %127 = vmatpush.msra.mxu0 %v65
    %128 = vmatpush.msra.mxu0 %v64
    %129 = vmatpush.msra.mxu0 %v63
    %130 = vmatpush.msra.mxu0 %v62
    %131 = vmatpush.msra.mxu0 %v61
    %132 = vmatpush.msra.mxu0 %v60
    %133 = vmatpush.msra.mxu0 %v59
    %134 = vmatmul.f32.gmra.mxu0 %v95
    %v135 = vpop.f32.mrf.mxu0
    %v136 = vadd.f32 0.0, %v135
    %137 = vmatmul.f32.gmra.mxu0 %v98
    %v138 = vpop.f32.mrf.mxu0
    %v139 = vadd.f32 0.0, %v138
    %140 = vmatmul.f32.gmra.mxu0 %v101
    %v141 = vpop.f32.mrf.mxu0
    %v142 = vadd.f32 0.0, %v141
    %143 = vmatmul.f32.gmra.mxu0 %v104
    %v144 = vpop.f32.mrf.mxu0
    %v145 = vadd.f32 0.0, %v144
    %146 = vmatmul.f32.gmra.mxu0 %v107
    %v147 = vpop.f32.mrf.mxu0
    %v148 = vadd.f32 0.0, %v147
    %149 = vmatmul.f32.gmra.mxu0 %v110
    %v150 = vpop.f32.mrf.mxu0
    %v151 = vadd.f32 0.0, %v150
    %152 = vmatmul.f32.gmra.mxu0 %v113
    %v153 = vpop.f32.mrf.mxu0
    %v154 = vadd.f32 0.0, %v153
    %155 = vmatmul.f32.gmra.mxu0 %v116
    %v156 = vpop.f32.mrf.mxu0
    %v157 = vadd.f32 0.0, %v156
    %158 = vdwg.mxu0
    %v160 = vsel %vm93, %v35, 0
    %v163 = vsel %vm93, %v36, 0
    %v166 = vsel %vm93, %v37, 0
    %v169 = vsel %vm93, %v38, 0
    %v172 = vsel %vm93, %v39, 0
    %v175 = vsel %vm93, %v40, 0
    %v178 = vsel %vm93, %v41, 0
    %v181 = vsel %vm93, %v42, 0
    %183 = vmatpush.msra.mxu0 0.0
    %184 = vmatpush.msra.mxu0 0.0
    %185 = vmatpush.msra.mxu0 0.0
    %186 = vmatpush.msra.mxu0 0.0
    %187 = vmatpush.msra.mxu0 0.0
    %188 = vmatpush.msra.mxu0 0.0
    %189 = vmatpush.msra.mxu0 0.0
    %190 = vmatpush.msra.mxu0 0.0
    %191 = vmatpush.msra.mxu0 %v74
    %192 = vmatpush.msra.mxu0 %v73
    %193 = vmatpush.msra.mxu0 %v72
    %194 = vmatpush.msra.mxu0 %v71
    %195 = vmatpush.msra.mxu0 %v70
    %196 = vmatpush.msra.mxu0 %v69
    %197 = vmatpush.msra.mxu0 %v68
    %198 = vmatpush.msra.mxu0 %v67
    %199 = vmatmul.f32.gmra.mxu0 %v160
    %v200 = vpop.f32.mrf.mxu0
    %v201 = vadd.f32 0.0, %v200
    %202 = vmatmul.f32.gmra.mxu0 %v163
    %v203 = vpop.f32.mrf.mxu0
    %v204 = vadd.f32 0.0, %v203
    %205 = vmatmul.f32.gmra.mxu0 %v166
    %v206 = vpop.f32.mrf.mxu0
    %v207 = vadd.f32 0.0, %v206
    %208 = vmatmul.f32.gmra.mxu0 %v169
    %v209 = vpop.f32.mrf.mxu0
    %v210 = vadd.f32 0.0, %v209
    %211 = vmatmul.f32.gmra.mxu0 %v172
    %v212 = vpop.f32.mrf.mxu0
    %v213 = vadd.f32 0.0, %v212
    %214 = vmatmul.f32.gmra.mxu0 %v175
    %v215 = vpop.f32.mrf.mxu0
    %v216 = vadd.f32 0.0, %v215
    %217 = vmatmul.f32.gmra.mxu0 %v178
    %v218 = vpop.f32.mrf.mxu0
    %v219 = vadd.f32 0.0, %v218
    %220 = vmatmul.f32.gmra.mxu0 %v181
    %v221 = vpop.f32.mrf.mxu0
    %v222 = vadd.f32 0.0, %v221
    %223 = vdwg.mxu0
    %v225 = vsel %vm93, %v43, 0
    %v228 = vsel %vm93, %v44, 0
    %v231 = vsel %vm93, %v45, 0
    %v234 = vsel %vm93, %v46, 0
    %v237 = vsel %vm93, %v47, 0
    %v240 = vsel %vm93, %v48, 0
    %v243 = vsel %vm93, %v49, 0
    %v246 = vsel %vm93, %v50, 0
    %248 = vmatpush.msra.mxu0 0.0
    %249 = vmatpush.msra.mxu0 0.0
    %250 = vmatpush.msra.mxu0 0.0
    %251 = vmatpush.msra.mxu0 0.0
    %252 = vmatpush.msra.mxu0 0.0
    %253 = vmatpush.msra.mxu0 0.0
    %254 = vmatpush.msra.mxu0 0.0
    %255 = vmatpush.msra.mxu0 0.0
    %256 = vmatpush.msra.mxu0 %v82
    %257 = vmatpush.msra.mxu0 %v81
    %258 = vmatpush.msra.mxu0 %v80
    %259 = vmatpush.msra.mxu0 %v79
    %260 = vmatpush.msra.mxu0 %v78
    %261 = vmatpush.msra.mxu0 %v77
    %262 = vmatpush.msra.mxu0 %v76
    %263 = vmatpush.msra.mxu0 %v75
    %264 = vmatmul.f32.gmra.mxu0 %v225
    %v265 = vpop.f32.mrf.mxu0
    %v266 = vadd.f32 0.0, %v265
    %267 = vmatmul.f32.gmra.mxu0 %v228
    %v268 = vpop.f32.mrf.mxu0
    %v269 = vadd.f32 0.0, %v268
    %270 = vmatmul.f32.gmra.mxu0 %v231
    %v271 = vpop.f32.mrf.mxu0
    %v272 = vadd.f32 0.0, %v271
    %273 = vmatmul.f32.gmra.mxu0 %v234
    %v274 = vpop.f32.mrf.mxu0
    %v275 = vadd.f32 0.0, %v274
    %276 = vmatmul.f32.gmra.mxu0 %v237
    %v277 = vpop.f32.mrf.mxu0
    %v278 = vadd.f32 0.0, %v277
    %279 = vmatmul.f32.gmra.mxu0 %v240
    %v280 = vpop.f32.mrf.mxu0
    %v281 = vadd.f32 0.0, %v280
    %282 = vmatmul.f32.gmra.mxu0 %v243
    %v283 = vpop.f32.mrf.mxu0
    %v284 = vadd.f32 0.0, %v283
    %285 = vmatmul.f32.gmra.mxu0 %v246
    %v286 = vpop.f32.mrf.mxu0
    %v287 = vadd.f32 0.0, %v286
    %288 = vdwg.mxu0
    %v290 = vsel %vm93, %v51, 0
    %v293 = vsel %vm93, %v52, 0
    %v296 = vsel %vm93, %v53, 0
    %v299 = vsel %vm93, %v54, 0
    %v302 = vsel %vm93, %v55, 0
    %v305 = vsel %vm93, %v56, 0
    %v308 = vsel %vm93, %v57, 0
    %v311 = vsel %vm93, %v58, 0
    %313 = vmatpush.msra.mxu0 0.0
    %314 = vmatpush.msra.mxu0 0.0
    %315 = vmatpush.msra.mxu0 0.0
    %316 = vmatpush.msra.mxu0 0.0
    %317 = vmatpush.msra.mxu0 0.0
    %318 = vmatpush.msra.mxu0 0.0
    %319 = vmatpush.msra.mxu0 0.0
    %320 = vmatpush.msra.mxu0 0.0
    %321 = vmatpush.msra.mxu0 %v90
    %322 = vmatpush.msra.mxu0 %v89
    %323 = vmatpush.msra.mxu0 %v88
    %324 = vmatpush.msra.mxu0 %v87
    %325 = vmatpush.msra.mxu0 %v86
    %326 = vmatpush.msra.mxu0 %v85
    %327 = vmatpush.msra.mxu0 %v84
    %328 = vmatpush.msra.mxu0 %v83
    %329 = vmatmul.f32.gmra.mxu0 %v290
    %v330 = vpop.f32.mrf.mxu0
    %v331 = vadd.f32 0.0, %v330
    %332 = vmatmul.f32.gmra.mxu0 %v293
    %v333 = vpop.f32.mrf.mxu0
    %v334 = vadd.f32 0.0, %v333
    %335 = vmatmul.f32.gmra.mxu0 %v296
    %v336 = vpop.f32.mrf.mxu0
    %v337 = vadd.f32 0.0, %v336
    %338 = vmatmul.f32.gmra.mxu0 %v299
    %v339 = vpop.f32.mrf.mxu0
    %v340 = vadd.f32 0.0, %v339
    %341 = vmatmul.f32.gmra.mxu0 %v302
    %v342 = vpop.f32.mrf.mxu0
    %v343 = vadd.f32 0.0, %v342
    %344 = vmatmul.f32.gmra.mxu0 %v305
    %v345 = vpop.f32.mrf.mxu0
    %v346 = vadd.f32 0.0, %v345
    %347 = vmatmul.f32.gmra.mxu0 %v308
    %v348 = vpop.f32.mrf.mxu0
    %v349 = vadd.f32 0.0, %v348
    %350 = vmatmul.f32.gmra.mxu0 %v311
    %v351 = vpop.f32.mrf.mxu0
    %v352 = vadd.f32 0.0, %v351
    %353 = vdwg.mxu0
    %vm354 = vcmask 130048
    %v356 = vsel %vm354, %v136, 0
    %v359 = vsel %vm354, %v139, 0
    %v362 = vsel %vm354, %v142, 0
    %v365 = vsel %vm354, %v145, 0
    %v368 = vsel %vm354, %v148, 0
    %v371 = vsel %vm354, %v151, 0
    %v374 = vsel %vm354, %v154, 0
    %v377 = vsel %vm354, %v157, 0
    %v380 = vsel %vm354, %v201, 0
    %v383 = vsel %vm354, %v204, 0
    %v386 = vsel %vm354, %v207, 0
    %v389 = vsel %vm354, %v210, 0
    %v392 = vsel %vm354, %v213, 0
    %v395 = vsel %vm354, %v216, 0
    %v398 = vsel %vm354, %v219, 0
    %v401 = vsel %vm354, %v222, 0
    %v404 = vsel %vm354, %v266, 0
    %v407 = vsel %vm354, %v269, 0
    %v410 = vsel %vm354, %v272, 0
    %v413 = vsel %vm354, %v275, 0
    %v416 = vsel %vm354, %v278, 0
    %v419 = vsel %vm354, %v281, 0
    %v422 = vsel %vm354, %v284, 0
    %v425 = vsel %vm354, %v287, 0
    %v428 = vsel %vm354, %v331, 0
    %v431 = vsel %vm354, %v334, 0
    %v434 = vsel %vm354, %v337, 0
    %v437 = vsel %vm354, %v340, 0
    %v440 = vsel %vm354, %v343, 0
    %v443 = vsel %vm354, %v346, 0
    %v446 = vsel %vm354, %v349, 0
    %v449 = vsel %vm354, %v352, 0
    %451 = vmatpush.msra.mxu0 0.0
    %452 = vmatpush.msra.mxu0 0.0
    %453 = vmatpush.msra.mxu0 0.0
    %454 = vmatpush.msra.mxu0 0.0
    %455 = vmatpush.msra.mxu0 0.0
    %456 = vmatpush.msra.mxu0 0.0
    %457 = vmatpush.msra.mxu0 0.0
    %458 = vmatpush.msra.mxu0 0.0
    %459 = vmatpush.msra.mxu0 0.0
    %460 = vmatpush.msra.mxu0 0.0
    %461 = vmatpush.msra.mxu0 0.0
    %462 = vmatpush.msra.mxu0 0.0
    %463 = vmatpush.msra.mxu0 0.0
    %464 = vmatpush.msra.mxu0 0.0
    %465 = vmatpush.msra.mxu0 %v92
    %466 = vmatpush.msra.mxu0 %v91
    %467 = vmatmul.f32.gmra.mxu0 %v356
    %v468 = vpop.f32.mrf.mxu0
    %v469 = vadd.f32 0.0, %v468
    %470 = vmatmul.f32.gmra.mxu0 %v359
    %v471 = vpop.f32.mrf.mxu0
    %v472 = vadd.f32 0.0, %v471
    %473 = vmatmul.f32.gmra.mxu0 %v362
    %v474 = vpop.f32.mrf.mxu0
    %v475 = vadd.f32 0.0, %v474
    %476 = vmatmul.f32.gmra.mxu0 %v365
    %v477 = vpop.f32.mrf.mxu0
    %v478 = vadd.f32 0.0, %v477
    %479 = vmatmul.f32.gmra.mxu0 %v368
    %v480 = vpop.f32.mrf.mxu0
    %v481 = vadd.f32 0.0, %v480
    %482 = vmatmul.f32.gmra.mxu0 %v371
    %v483 = vpop.f32.mrf.mxu0
    %v484 = vadd.f32 0.0, %v483
    %485 = vmatmul.f32.gmra.mxu0 %v374
    %v486 = vpop.f32.mrf.mxu0
    %v487 = vadd.f32 0.0, %v486
    %488 = vmatmul.f32.gmra.mxu0 %v377
    %v489 = vpop.f32.mrf.mxu0
    %v490 = vadd.f32 0.0, %v489
    %491 = vmatmul.f32.gmra.mxu0 %v380
    %v492 = vpop.f32.mrf.mxu0
    %v493 = vadd.f32 0.0, %v492
    %494 = vmatmul.f32.gmra.mxu0 %v383
    %v495 = vpop.f32.mrf.mxu0
    %v496 = vadd.f32 0.0, %v495
    %497 = vmatmul.f32.gmra.mxu0 %v386
    %v498 = vpop.f32.mrf.mxu0
    %v499 = vadd.f32 0.0, %v498
    %500 = vmatmul.f32.gmra.mxu0 %v389
    %v501 = vpop.f32.mrf.mxu0
    %v502 = vadd.f32 0.0, %v501
    %503 = vmatmul.f32.gmra.mxu0 %v392
    %v504 = vpop.f32.mrf.mxu0
    %v505 = vadd.f32 0.0, %v504
    %506 = vmatmul.f32.gmra.mxu0 %v395
    %v507 = vpop.f32.mrf.mxu0
    %v508 = vadd.f32 0.0, %v507
    %509 = vmatmul.f32.gmra.mxu0 %v398
    %v510 = vpop.f32.mrf.mxu0
    %v511 = vadd.f32 0.0, %v510
    %512 = vmatmul.f32.gmra.mxu0 %v401
    %v513 = vpop.f32.mrf.mxu0
    %v514 = vadd.f32 0.0, %v513
    %515 = vmatmul.f32.gmra.mxu0 %v404
    %v516 = vpop.f32.mrf.mxu0
    %v517 = vadd.f32 0.0, %v516
    %518 = vmatmul.f32.gmra.mxu0 %v407
    %v519 = vpop.f32.mrf.mxu0
    %v520 = vadd.f32 0.0, %v519
    %521 = vmatmul.f32.gmra.mxu0 %v410
    %v522 = vpop.f32.mrf.mxu0
    %v523 = vadd.f32 0.0, %v522
    %524 = vmatmul.f32.gmra.mxu0 %v413
    %v525 = vpop.f32.mrf.mxu0
    %v526 = vadd.f32 0.0, %v525
    %527 = vmatmul.f32.gmra.mxu0 %v416
    %v528 = vpop.f32.mrf.mxu0
    %v529 = vadd.f32 0.0, %v528
    %530 = vmatmul.f32.gmra.mxu0 %v419
    %v531 = vpop.f32.mrf.mxu0
    %v532 = vadd.f32 0.0, %v531
    %533 = vmatmul.f32.gmra.mxu0 %v422
    %v534 = vpop.f32.mrf.mxu0
    %v535 = vadd.f32 0.0, %v534
    %536 = vmatmul.f32.gmra.mxu0 %v425
    %v537 = vpop.f32.mrf.mxu0
    %v538 = vadd.f32 0.0, %v537
    %539 = vmatmul.f32.gmra.mxu0 %v428
    %v540 = vpop.f32.mrf.mxu0
    %v541 = vadd.f32 0.0, %v540
    %542 = vmatmul.f32.gmra.mxu0 %v431
    %v543 = vpop.f32.mrf.mxu0
    %v544 = vadd.f32 0.0, %v543
    %545 = vmatmul.f32.gmra.mxu0 %v434
    %v546 = vpop.f32.mrf.mxu0
    %v547 = vadd.f32 0.0, %v546
    %548 = vmatmul.f32.gmra.mxu0 %v437
    %v549 = vpop.f32.mrf.mxu0
    %v550 = vadd.f32 0.0, %v549
    %551 = vmatmul.f32.gmra.mxu0 %v440
    %v552 = vpop.f32.mrf.mxu0
    %v553 = vadd.f32 0.0, %v552
    %554 = vmatmul.f32.gmra.mxu0 %v443
    %v555 = vpop.f32.mrf.mxu0
    %v556 = vadd.f32 0.0, %v555
    %557 = vmatmul.f32.gmra.mxu0 %v446
    %v558 = vpop.f32.mrf.mxu0
    %v559 = vadd.f32 0.0, %v558
    %560 = vmatmul.f32.gmra.mxu0 %v449
    %v561 = vpop.f32.mrf.mxu0
    %v562 = vadd.f32 0.0, %v561
    %563 = vdwg.mxu0
    %v564 = vmax.f32 %v469, 0.0
    %v565 = vmax.f32 %v472, 0.0
    %v566 = vmax.f32 %v475, 0.0
    %v567 = vmax.f32 %v478, 0.0
    %v568 = vmax.f32 %v481, 0.0
    %v569 = vmax.f32 %v484, 0.0
    %v570 = vmax.f32 %v487, 0.0
    %v571 = vmax.f32 %v490, 0.0
    %v572 = vmax.f32 %v493, 0.0
    %v573 = vmax.f32 %v496, 0.0
    %v574 = vmax.f32 %v499, 0.0
    %v575 = vmax.f32 %v502, 0.0
    %v576 = vmax.f32 %v505, 0.0
    %v577 = vmax.f32 %v508, 0.0
    %v578 = vmax.f32 %v511, 0.0
    %v579 = vmax.f32 %v514, 0.0
    %v580 = vmax.f32 %v517, 0.0
    %v581 = vmax.f32 %v520, 0.0
    %v582 = vmax.f32 %v523, 0.0
    %v583 = vmax.f32 %v526, 0.0
    %v584 = vmax.f32 %v529, 0.0
    %v585 = vmax.f32 %v532, 0.0
    %v586 = vmax.f32 %v535, 0.0
    %v587 = vmax.f32 %v538, 0.0
    %v588 = vmax.f32 %v541, 0.0
    %v589 = vmax.f32 %v544, 0.0
    %v590 = vmax.f32 %v547, 0.0
    %v591 = vmax.f32 %v550, 0.0
    %v592 = vmax.f32 %v553, 0.0
    %v593 = vmax.f32 %v556, 0.0
    %v594 = vmax.f32 %v559, 0.0
    %v595 = vmax.f32 %v562, 0.0
    %v596 = vmul.f32 %v564, %v564
    %v597 = vmul.f32 %v565, %v565
    %v598 = vmul.f32 %v566, %v566
    %v599 = vmul.f32 %v567, %v567
    %v600 = vmul.f32 %v568, %v568
    %v601 = vmul.f32 %v569, %v569
    %v602 = vmul.f32 %v570, %v570
    %v603 = vmul.f32 %v571, %v571
    %v604 = vmul.f32 %v572, %v572
    %v605 = vmul.f32 %v573, %v573
    %v606 = vmul.f32 %v574, %v574
    %v607 = vmul.f32 %v575, %v575
    %v608 = vmul.f32 %v576, %v576
    %v609 = vmul.f32 %v577, %v577
    %v610 = vmul.f32 %v578, %v578
    %v611 = vmul.f32 %v579, %v579
    %v612 = vmul.f32 %v580, %v580
    %v613 = vmul.f32 %v581, %v581
    %v614 = vmul.f32 %v582, %v582
    %v615 = vmul.f32 %v583, %v583
    %v616 = vmul.f32 %v584, %v584
    %v617 = vmul.f32 %v585, %v585
    %v618 = vmul.f32 %v586, %v586
    %v619 = vmul.f32 %v587, %v587
    %v620 = vmul.f32 %v588, %v588
    %v621 = vmul.f32 %v589, %v589
    %v622 = vmul.f32 %v590, %v590
    %v623 = vmul.f32 %v591, %v591
    %v624 = vmul.f32 %v592, %v592
    %v625 = vmul.f32 %v593, %v593
    %v626 = vmul.f32 %v594, %v594
    %v627 = vmul.f32 %v595, %v595
    %vm628 = vcmask 261120
    %v629 = vsel %vm628, %v596, 0.0
    %630 = vadd.xlane.f32.xlu0 %v629
    %v631 = vpop.xlane.xlu0 %630
    %v632 = vsel %vm628, %v597, 0.0
    %633 = vadd.xlane.f32.xlu0 %v632
    %v634 = vpop.xlane.xlu0 %633
    %v635 = vsel %vm628, %v598, 0.0
    %636 = vadd.xlane.f32.xlu0 %v635
    %v637 = vpop.xlane.xlu0 %636
    %v638 = vsel %vm628, %v599, 0.0
    %639 = vadd.xlane.f32.xlu0 %v638
    %v640 = vpop.xlane.xlu0 %639
    %v641 = vsel %vm628, %v600, 0.0
    %642 = vadd.xlane.f32.xlu0 %v641
    %v643 = vpop.xlane.xlu0 %642
    %v644 = vsel %vm628, %v601, 0.0
    %645 = vadd.xlane.f32.xlu0 %v644
    %v646 = vpop.xlane.xlu0 %645
    %v647 = vsel %vm628, %v602, 0.0
    %648 = vadd.xlane.f32.xlu0 %v647
    %v649 = vpop.xlane.xlu0 %648
    %v650 = vsel %vm628, %v603, 0.0
    %651 = vadd.xlane.f32.xlu0 %v650
    %v652 = vpop.xlane.xlu0 %651
    %v653 = vsel %vm628, %v604, 0.0
    %654 = vadd.xlane.f32.xlu0 %v653
    %v655 = vpop.xlane.xlu0 %654
    %v656 = vsel %vm628, %v605, 0.0
    %657 = vadd.xlane.f32.xlu0 %v656
    %v658 = vpop.xlane.xlu0 %657
    %v659 = vsel %vm628, %v606, 0.0
    %660 = vadd.xlane.f32.xlu0 %v659
    %v661 = vpop.xlane.xlu0 %660
    %v662 = vsel %vm628, %v607, 0.0
    %663 = vadd.xlane.f32.xlu0 %v662
    %v664 = vpop.xlane.xlu0 %663
    %v665 = vsel %vm628, %v608, 0.0
    %666 = vadd.xlane.f32.xlu0 %v665
    %v667 = vpop.xlane.xlu0 %666
    %v668 = vsel %vm628, %v609, 0.0
    %669 = vadd.xlane.f32.xlu0 %v668
    %v670 = vpop.xlane.xlu0 %669
    %v671 = vsel %vm628, %v610, 0.0
    %672 = vadd.xlane.f32.xlu0 %v671
    %v673 = vpop.xlane.xlu0 %672
    %v674 = vsel %vm628, %v611, 0.0
    %675 = vadd.xlane.f32.xlu0 %v674
    %v676 = vpop.xlane.xlu0 %675
    %v677 = vsel %vm628, %v612, 0.0
    %678 = vadd.xlane.f32.xlu0 %v677
    %v679 = vpop.xlane.xlu0 %678
    %v680 = vsel %vm628, %v613, 0.0
    %681 = vadd.xlane.f32.xlu0 %v680
    %v682 = vpop.xlane.xlu0 %681
    %v683 = vsel %vm628, %v614, 0.0
    %684 = vadd.xlane.f32.xlu0 %v683
    %v685 = vpop.xlane.xlu0 %684
    %v686 = vsel %vm628, %v615, 0.0
    %687 = vadd.xlane.f32.xlu0 %v686
    %v688 = vpop.xlane.xlu0 %687
    %v689 = vsel %vm628, %v616, 0.0
    %690 = vadd.xlane.f32.xlu0 %v689
    %v691 = vpop.xlane.xlu0 %690
    %v692 = vsel %vm628, %v617, 0.0
    %693 = vadd.xlane.f32.xlu0 %v692
    %v694 = vpop.xlane.xlu0 %693
    %v695 = vsel %vm628, %v618, 0.0
    %696 = vadd.xlane.f32.xlu0 %v695
    %v697 = vpop.xlane.xlu0 %696
    %v698 = vsel %vm628, %v619, 0.0
    %699 = vadd.xlane.f32.xlu0 %v698
    %v700 = vpop.xlane.xlu0 %699
    %v701 = vsel %vm628, %v620, 0.0
    %702 = vadd.xlane.f32.xlu0 %v701
    %v703 = vpop.xlane.xlu0 %702
    %v704 = vsel %vm628, %v621, 0.0
    %705 = vadd.xlane.f32.xlu0 %v704
    %v706 = vpop.xlane.xlu0 %705
    %v707 = vsel %vm628, %v622, 0.0
    %708 = vadd.xlane.f32.xlu0 %v707
    %v709 = vpop.xlane.xlu0 %708
    %v710 = vsel %vm628, %v623, 0.0
    %711 = vadd.xlane.f32.xlu0 %v710
    %v712 = vpop.xlane.xlu0 %711
    %v713 = vsel %vm628, %v624, 0.0
    %714 = vadd.xlane.f32.xlu0 %v713
    %v715 = vpop.xlane.xlu0 %714
    %v716 = vsel %vm628, %v625, 0.0
    %717 = vadd.xlane.f32.xlu0 %v716
    %v718 = vpop.xlane.xlu0 %717
    %v719 = vsel %vm628, %v626, 0.0
    %720 = vadd.xlane.f32.xlu0 %v719
    %v721 = vpop.xlane.xlu0 %720
    %v722 = vsel %vm628, %v627, 0.0
    %723 = vadd.xlane.f32.xlu0 %v722
    %v724 = vpop.xlane.xlu0 %723
    %v725 = vmax.f32 %v631, 1e-24
    %v726 = vmax.f32 %v634, 1e-24
    %v727 = vmax.f32 %v637, 1e-24
    %v728 = vmax.f32 %v640, 1e-24
    %v729 = vmax.f32 %v643, 1e-24
    %v730 = vmax.f32 %v646, 1e-24
    %v731 = vmax.f32 %v649, 1e-24
    %v732 = vmax.f32 %v652, 1e-24
    %v733 = vmax.f32 %v655, 1e-24
    %v734 = vmax.f32 %v658, 1e-24
    %v735 = vmax.f32 %v661, 1e-24
    %v736 = vmax.f32 %v664, 1e-24
    %v737 = vmax.f32 %v667, 1e-24
    %v738 = vmax.f32 %v670, 1e-24
    %v739 = vmax.f32 %v673, 1e-24
    %v740 = vmax.f32 %v676, 1e-24
    %v741 = vmax.f32 %v679, 1e-24
    %v742 = vmax.f32 %v682, 1e-24
    %v743 = vmax.f32 %v685, 1e-24
    %v744 = vmax.f32 %v688, 1e-24
    %v745 = vmax.f32 %v691, 1e-24
    %v746 = vmax.f32 %v694, 1e-24
    %v747 = vmax.f32 %v697, 1e-24
    %v748 = vmax.f32 %v700, 1e-24
    %v749 = vmax.f32 %v703, 1e-24
    %v750 = vmax.f32 %v706, 1e-24
    %v751 = vmax.f32 %v709, 1e-24
    %v752 = vmax.f32 %v712, 1e-24
    %v753 = vmax.f32 %v715, 1e-24
    %v754 = vmax.f32 %v718, 1e-24
    %v755 = vmax.f32 %v721, 1e-24
    %v756 = vmax.f32 %v724, 1e-24
    %v757 = vrsqrt.pop %v725
    %v758 = vmul.f32 %v757, %v725
    %v759 = vmul.f32 %v758, %v757
    %v760 = vmul.f32 0.5, %v759
    %v761 = vsub.f32 1.5, %v760
    %v762 = vmul.f32 %v757, %v761
    %vm763 = vweird.f32 %v725
    %vm764 = vweird.f32 %v757
    %vm765 = vmor %vm763, %vm764
    %v766 = vsel %vm765, %v757, %v762
    %v767 = vrsqrt.pop %v726
    %v768 = vmul.f32 %v767, %v726
    %v769 = vmul.f32 %v768, %v767
    %v770 = vmul.f32 0.5, %v769
    %v771 = vsub.f32 1.5, %v770
    %v772 = vmul.f32 %v767, %v771
    %vm773 = vweird.f32 %v726
    %vm774 = vweird.f32 %v767
    %vm775 = vmor %vm773, %vm774
    %v776 = vsel %vm775, %v767, %v772
    %v777 = vrsqrt.pop %v727
    %v778 = vmul.f32 %v777, %v727
    %v779 = vmul.f32 %v778, %v777
    %v780 = vmul.f32 0.5, %v779
    %v781 = vsub.f32 1.5, %v780
    %v782 = vmul.f32 %v777, %v781
    %vm783 = vweird.f32 %v727
    %vm784 = vweird.f32 %v777
    %vm785 = vmor %vm783, %vm784
    %v786 = vsel %vm785, %v777, %v782
    %v787 = vrsqrt.pop %v728
    %v788 = vmul.f32 %v787, %v728
    %v789 = vmul.f32 %v788, %v787
    %v790 = vmul.f32 0.5, %v789
    %v791 = vsub.f32 1.5, %v790
    %v792 = vmul.f32 %v787, %v791
    %vm793 = vweird.f32 %v728
    %vm794 = vweird.f32 %v787
    %vm795 = vmor %vm793, %vm794
    %v796 = vsel %vm795, %v787, %v792
    %v797 = vrsqrt.pop %v729
    %v798 = vmul.f32 %v797, %v729
    %v799 = vmul.f32 %v798, %v797
    %v800 = vmul.f32 0.5, %v799
    %v801 = vsub.f32 1.5, %v800
    %v802 = vmul.f32 %v797, %v801
    %vm803 = vweird.f32 %v729
    %vm804 = vweird.f32 %v797
    %vm805 = vmor %vm803, %vm804
    %v806 = vsel %vm805, %v797, %v802
    %v807 = vrsqrt.pop %v730
    %v808 = vmul.f32 %v807, %v730
    %v809 = vmul.f32 %v808, %v807
    %v810 = vmul.f32 0.5, %v809
    %v811 = vsub.f32 1.5, %v810
    %v812 = vmul.f32 %v807, %v811
    %vm813 = vweird.f32 %v730
    %vm814 = vweird.f32 %v807
    %vm815 = vmor %vm813, %vm814
    %v816 = vsel %vm815, %v807, %v812
    %v817 = vrsqrt.pop %v731
    %v818 = vmul.f32 %v817, %v731
    %v819 = vmul.f32 %v818, %v817
    %v820 = vmul.f32 0.5, %v819
    %v821 = vsub.f32 1.5, %v820
    %v822 = vmul.f32 %v817, %v821
    %vm823 = vweird.f32 %v731
    %vm824 = vweird.f32 %v817
    %vm825 = vmor %vm823, %vm824
    %v826 = vsel %vm825, %v817, %v822
    %v827 = vrsqrt.pop %v732
    %v828 = vmul.f32 %v827, %v732
    %v829 = vmul.f32 %v828, %v827
    %v830 = vmul.f32 0.5, %v829
    %v831 = vsub.f32 1.5, %v830
    %v832 = vmul.f32 %v827, %v831
    %vm833 = vweird.f32 %v732
    %vm834 = vweird.f32 %v827
    %vm835 = vmor %vm833, %vm834
    %v836 = vsel %vm835, %v827, %v832
    %v837 = vrsqrt.pop %v733
    %v838 = vmul.f32 %v837, %v733
    %v839 = vmul.f32 %v838, %v837
    %v840 = vmul.f32 0.5, %v839
    %v841 = vsub.f32 1.5, %v840
    %v842 = vmul.f32 %v837, %v841
    %vm843 = vweird.f32 %v733
    %vm844 = vweird.f32 %v837
    %vm845 = vmor %vm843, %vm844
    %v846 = vsel %vm845, %v837, %v842
    %v847 = vrsqrt.pop %v734
    %v848 = vmul.f32 %v847, %v734
    %v849 = vmul.f32 %v848, %v847
    %v850 = vmul.f32 0.5, %v849
    %v851 = vsub.f32 1.5, %v850
    %v852 = vmul.f32 %v847, %v851
    %vm853 = vweird.f32 %v734
    %vm854 = vweird.f32 %v847
    %vm855 = vmor %vm853, %vm854
    %v856 = vsel %vm855, %v847, %v852
    %v857 = vrsqrt.pop %v735
    %v858 = vmul.f32 %v857, %v735
    %v859 = vmul.f32 %v858, %v857
    %v860 = vmul.f32 0.5, %v859
    %v861 = vsub.f32 1.5, %v860
    %v862 = vmul.f32 %v857, %v861
    %vm863 = vweird.f32 %v735
    %vm864 = vweird.f32 %v857
    %vm865 = vmor %vm863, %vm864
    %v866 = vsel %vm865, %v857, %v862
    %v867 = vrsqrt.pop %v736
    %v868 = vmul.f32 %v867, %v736
    %v869 = vmul.f32 %v868, %v867
    %v870 = vmul.f32 0.5, %v869
    %v871 = vsub.f32 1.5, %v870
    %v872 = vmul.f32 %v867, %v871
    %vm873 = vweird.f32 %v736
    %vm874 = vweird.f32 %v867
    %vm875 = vmor %vm873, %vm874
    %v876 = vsel %vm875, %v867, %v872
    %v877 = vrsqrt.pop %v737
    %v878 = vmul.f32 %v877, %v737
    %v879 = vmul.f32 %v878, %v877
    %v880 = vmul.f32 0.5, %v879
    %v881 = vsub.f32 1.5, %v880
    %v882 = vmul.f32 %v877, %v881
    %vm883 = vweird.f32 %v737
    %vm884 = vweird.f32 %v877
    %vm885 = vmor %vm883, %vm884
    %v886 = vsel %vm885, %v877, %v882
    %v887 = vrsqrt.pop %v738
    %v888 = vmul.f32 %v887, %v738
    %v889 = vmul.f32 %v888, %v887
    %v890 = vmul.f32 0.5, %v889
    %v891 = vsub.f32 1.5, %v890
    %v892 = vmul.f32 %v887, %v891
    %vm893 = vweird.f32 %v738
    %vm894 = vweird.f32 %v887
    %vm895 = vmor %vm893, %vm894
    %v896 = vsel %vm895, %v887, %v892
    %v897 = vrsqrt.pop %v739
    %v898 = vmul.f32 %v897, %v739
    %v899 = vmul.f32 %v898, %v897
    %v900 = vmul.f32 0.5, %v899
    %v901 = vsub.f32 1.5, %v900
    %v902 = vmul.f32 %v897, %v901
    %vm903 = vweird.f32 %v739
    %vm904 = vweird.f32 %v897
    %vm905 = vmor %vm903, %vm904
    %v906 = vsel %vm905, %v897, %v902
    %v907 = vrsqrt.pop %v740
    %v908 = vmul.f32 %v907, %v740
    %v909 = vmul.f32 %v908, %v907
    %v910 = vmul.f32 0.5, %v909
    %v911 = vsub.f32 1.5, %v910
    %v912 = vmul.f32 %v907, %v911
    %vm913 = vweird.f32 %v740
    %vm914 = vweird.f32 %v907
    %vm915 = vmor %vm913, %vm914
    %v916 = vsel %vm915, %v907, %v912
    %v917 = vrsqrt.pop %v741
    %v918 = vmul.f32 %v917, %v741
    %v919 = vmul.f32 %v918, %v917
    %v920 = vmul.f32 0.5, %v919
    %v921 = vsub.f32 1.5, %v920
    %v922 = vmul.f32 %v917, %v921
    %vm923 = vweird.f32 %v741
    %vm924 = vweird.f32 %v917
    %vm925 = vmor %vm923, %vm924
    %v926 = vsel %vm925, %v917, %v922
    %v927 = vrsqrt.pop %v742
    %v928 = vmul.f32 %v927, %v742
    %v929 = vmul.f32 %v928, %v927
    %v930 = vmul.f32 0.5, %v929
    %v931 = vsub.f32 1.5, %v930
    %v932 = vmul.f32 %v927, %v931
    %vm933 = vweird.f32 %v742
    %vm934 = vweird.f32 %v927
    %vm935 = vmor %vm933, %vm934
    %v936 = vsel %vm935, %v927, %v932
    %v937 = vrsqrt.pop %v743
    %v938 = vmul.f32 %v937, %v743
    %v939 = vmul.f32 %v938, %v937
    %v940 = vmul.f32 0.5, %v939
    %v941 = vsub.f32 1.5, %v940
    %v942 = vmul.f32 %v937, %v941
    %vm943 = vweird.f32 %v743
    %vm944 = vweird.f32 %v937
    %vm945 = vmor %vm943, %vm944
    %v946 = vsel %vm945, %v937, %v942
    %v947 = vrsqrt.pop %v744
    %v948 = vmul.f32 %v947, %v744
    %v949 = vmul.f32 %v948, %v947
    %v950 = vmul.f32 0.5, %v949
    %v951 = vsub.f32 1.5, %v950
    %v952 = vmul.f32 %v947, %v951
    %vm953 = vweird.f32 %v744
    %vm954 = vweird.f32 %v947
    %vm955 = vmor %vm953, %vm954
    %v956 = vsel %vm955, %v947, %v952
    %v957 = vrsqrt.pop %v745
    %v958 = vmul.f32 %v957, %v745
    %v959 = vmul.f32 %v958, %v957
    %v960 = vmul.f32 0.5, %v959
    %v961 = vsub.f32 1.5, %v960
    %v962 = vmul.f32 %v957, %v961
    %vm963 = vweird.f32 %v745
    %vm964 = vweird.f32 %v957
    %vm965 = vmor %vm963, %vm964
    %v966 = vsel %vm965, %v957, %v962
    %v967 = vrsqrt.pop %v746
    %v968 = vmul.f32 %v967, %v746
    %v969 = vmul.f32 %v968, %v967
    %v970 = vmul.f32 0.5, %v969
    %v971 = vsub.f32 1.5, %v970
    %v972 = vmul.f32 %v967, %v971
    %vm973 = vweird.f32 %v746
    %vm974 = vweird.f32 %v967
    %vm975 = vmor %vm973, %vm974
    %v976 = vsel %vm975, %v967, %v972
    %v977 = vrsqrt.pop %v747
    %v978 = vmul.f32 %v977, %v747
    %v979 = vmul.f32 %v978, %v977
    %v980 = vmul.f32 0.5, %v979
    %v981 = vsub.f32 1.5, %v980
    %v982 = vmul.f32 %v977, %v981
    %vm983 = vweird.f32 %v747
    %vm984 = vweird.f32 %v977
    %vm985 = vmor %vm983, %vm984
    %v986 = vsel %vm985, %v977, %v982
    %v987 = vrsqrt.pop %v748
    %v988 = vmul.f32 %v987, %v748
    %v989 = vmul.f32 %v988, %v987
    %v990 = vmul.f32 0.5, %v989
    %v991 = vsub.f32 1.5, %v990
    %v992 = vmul.f32 %v987, %v991
    %vm993 = vweird.f32 %v748
    %vm994 = vweird.f32 %v987
    %vm995 = vmor %vm993, %vm994
    %v996 = vsel %vm995, %v987, %v992
    %v997 = vrsqrt.pop %v749
    %v998 = vmul.f32 %v997, %v749
    %v999 = vmul.f32 %v998, %v997
    %v1000 = vmul.f32 0.5, %v999
    %v1001 = vsub.f32 1.5, %v1000
    %v1002 = vmul.f32 %v997, %v1001
    %vm1003 = vweird.f32 %v749
    %vm1004 = vweird.f32 %v997
    %vm1005 = vmor %vm1003, %vm1004
    %v1006 = vsel %vm1005, %v997, %v1002
    %v1007 = vrsqrt.pop %v750
    %v1008 = vmul.f32 %v1007, %v750
    %v1009 = vmul.f32 %v1008, %v1007
    %v1010 = vmul.f32 0.5, %v1009
    %v1011 = vsub.f32 1.5, %v1010
    %v1012 = vmul.f32 %v1007, %v1011
    %vm1013 = vweird.f32 %v750
    %vm1014 = vweird.f32 %v1007
    %vm1015 = vmor %vm1013, %vm1014
    %v1016 = vsel %vm1015, %v1007, %v1012
    %v1017 = vrsqrt.pop %v751
    %v1018 = vmul.f32 %v1017, %v751
    %v1019 = vmul.f32 %v1018, %v1017
    %v1020 = vmul.f32 0.5, %v1019
    %v1021 = vsub.f32 1.5, %v1020
    %v1022 = vmul.f32 %v1017, %v1021
    %vm1023 = vweird.f32 %v751
    %vm1024 = vweird.f32 %v1017
    %vm1025 = vmor %vm1023, %vm1024
    %v1026 = vsel %vm1025, %v1017, %v1022
    %v1027 = vrsqrt.pop %v752
    %v1028 = vmul.f32 %v1027, %v752
    %v1029 = vmul.f32 %v1028, %v1027
    %v1030 = vmul.f32 0.5, %v1029
    %v1031 = vsub.f32 1.5, %v1030
    %v1032 = vmul.f32 %v1027, %v1031
    %vm1033 = vweird.f32 %v752
    %vm1034 = vweird.f32 %v1027
    %vm1035 = vmor %vm1033, %vm1034
    %v1036 = vsel %vm1035, %v1027, %v1032
    %v1037 = vrsqrt.pop %v753
    %v1038 = vmul.f32 %v1037, %v753
    %v1039 = vmul.f32 %v1038, %v1037
    %v1040 = vmul.f32 0.5, %v1039
    %v1041 = vsub.f32 1.5, %v1040
    %v1042 = vmul.f32 %v1037, %v1041
    %vm1043 = vweird.f32 %v753
    %vm1044 = vweird.f32 %v1037
    %vm1045 = vmor %vm1043, %vm1044
    %v1046 = vsel %vm1045, %v1037, %v1042
    %v1047 = vrsqrt.pop %v754
    %v1048 = vmul.f32 %v1047, %v754
    %v1049 = vmul.f32 %v1048, %v1047
    %v1050 = vmul.f32 0.5, %v1049
    %v1051 = vsub.f32 1.5, %v1050
    %v1052 = vmul.f32 %v1047, %v1051
    %vm1053 = vweird.f32 %v754
    %vm1054 = vweird.f32 %v1047
    %vm1055 = vmor %vm1053, %vm1054
    %v1056 = vsel %vm1055, %v1047, %v1052
    %v1057 = vrsqrt.pop %v755
    %v1058 = vmul.f32 %v1057, %v755
    %v1059 = vmul.f32 %v1058, %v1057
    %v1060 = vmul.f32 0.5, %v1059
    %v1061 = vsub.f32 1.5, %v1060
    %v1062 = vmul.f32 %v1057, %v1061
    %vm1063 = vweird.f32 %v755
    %vm1064 = vweird.f32 %v1057
    %vm1065 = vmor %vm1063, %vm1064
    %v1066 = vsel %vm1065, %v1057, %v1062
    %v1067 = vrsqrt.pop %v756
    %v1068 = vmul.f32 %v1067, %v756
    %v1069 = vmul.f32 %v1068, %v1067
    %v1070 = vmul.f32 0.5, %v1069
    %v1071 = vsub.f32 1.5, %v1070
    %v1072 = vmul.f32 %v1067, %v1071
    %vm1073 = vweird.f32 %v756
    %vm1074 = vweird.f32 %v1067
    %vm1075 = vmor %vm1073, %vm1074
    %v1076 = vsel %vm1075, %v1067, %v1072
    %v1077 = vmul.f32 %v564, %v766
    %v1078 = vmul.f32 %v565, %v776
    %v1079 = vmul.f32 %v566, %v786
    %v1080 = vmul.f32 %v567, %v796
    %v1081 = vmul.f32 %v568, %v806
    %v1082 = vmul.f32 %v569, %v816
    %v1083 = vmul.f32 %v570, %v826
    %v1084 = vmul.f32 %v571, %v836
    %v1085 = vmul.f32 %v572, %v846
    %v1086 = vmul.f32 %v573, %v856
    %v1087 = vmul.f32 %v574, %v866
    %v1088 = vmul.f32 %v575, %v876
    %v1089 = vmul.f32 %v576, %v886
    %v1090 = vmul.f32 %v577, %v896
    %v1091 = vmul.f32 %v578, %v906
    %v1092 = vmul.f32 %v579, %v916
    %v1093 = vmul.f32 %v580, %v926
    %v1094 = vmul.f32 %v581, %v936
    %v1095 = vmul.f32 %v582, %v946
    %v1096 = vmul.f32 %v583, %v956
    %v1097 = vmul.f32 %v584, %v966
    %v1098 = vmul.f32 %v585, %v976
    %v1099 = vmul.f32 %v586, %v986
    %v1100 = vmul.f32 %v587, %v996
    %v1101 = vmul.f32 %v588, %v1006
    %v1102 = vmul.f32 %v589, %v1016
    %v1103 = vmul.f32 %v590, %v1026
    %v1104 = vmul.f32 %v591, %v1036
    %v1105 = vmul.f32 %v592, %v1046
    %v1106 = vmul.f32 %v593, %v1056
    %v1107 = vmul.f32 %v594, %v1066
    %v1108 = vmul.f32 %v595, %v1076
    %v1109 = vld [vmem:[%s4] sm:$0xff]
    %v1110 = vld [vmem:[%s4 + $0x8] sm:$0xff]
    %v1111 = vld [vmem:[%s4 + $0x10] sm:$0xff]
    %v1112 = vld [vmem:[%s4 + $0x18] sm:$0xff]
    %1113 = vmatpush.msra.mxu0 0.0
    %1114 = vmatpush.msra.mxu0 0.0
    %1115 = vmatpush.msra.mxu0 0.0
    %1116 = vmatpush.msra.mxu0 0.0
    %1117 = vmatpush.msra.mxu0 0.0
    %1118 = vmatpush.msra.mxu0 0.0
    %1119 = vmatpush.msra.mxu0 0.0
    %1120 = vmatpush.msra.mxu0 0.0
    %1121 = vmatpush.msra.mxu0 %v1084
    %1122 = vmatpush.msra.mxu0 %v1083
    %1123 = vmatpush.msra.mxu0 %v1082
    %1124 = vmatpush.msra.mxu0 %v1081
    %1125 = vmatpush.msra.mxu0 %v1080
    %1126 = vmatpush.msra.mxu0 %v1079
    %1127 = vmatpush.msra.mxu0 %v1078
    %1128 = vmatpush.msra.mxu0 %v1077
    %1129 = vmatmul.f32.gmra.mxu0 %v95
    %v1130 = vpop.f32.mrf.mxu0
    %v1131 = vadd.f32 0.0, %v1130
    %1132 = vmatmul.f32.gmra.mxu0 %v98
    %v1133 = vpop.f32.mrf.mxu0
    %v1134 = vadd.f32 0.0, %v1133
    %1135 = vmatmul.f32.gmra.mxu0 %v101
    %v1136 = vpop.f32.mrf.mxu0
    %v1137 = vadd.f32 0.0, %v1136
    %1138 = vmatmul.f32.gmra.mxu0 %v104
    %v1139 = vpop.f32.mrf.mxu0
    %v1140 = vadd.f32 0.0, %v1139
    %1141 = vmatmul.f32.gmra.mxu0 %v107
    %v1142 = vpop.f32.mrf.mxu0
    %v1143 = vadd.f32 0.0, %v1142
    %1144 = vmatmul.f32.gmra.mxu0 %v110
    %v1145 = vpop.f32.mrf.mxu0
    %v1146 = vadd.f32 0.0, %v1145
    %1147 = vmatmul.f32.gmra.mxu0 %v113
    %v1148 = vpop.f32.mrf.mxu0
    %v1149 = vadd.f32 0.0, %v1148
    %1150 = vmatmul.f32.gmra.mxu0 %v116
    %v1151 = vpop.f32.mrf.mxu0
    %v1152 = vadd.f32 0.0, %v1151
    %1153 = vdwg.mxu0
    %1154 = vmatpush.msra.mxu0 0.0
    %1155 = vmatpush.msra.mxu0 0.0
    %1156 = vmatpush.msra.mxu0 0.0
    %1157 = vmatpush.msra.mxu0 0.0
    %1158 = vmatpush.msra.mxu0 0.0
    %1159 = vmatpush.msra.mxu0 0.0
    %1160 = vmatpush.msra.mxu0 0.0
    %1161 = vmatpush.msra.mxu0 0.0
    %1162 = vmatpush.msra.mxu0 %v1092
    %1163 = vmatpush.msra.mxu0 %v1091
    %1164 = vmatpush.msra.mxu0 %v1090
    %1165 = vmatpush.msra.mxu0 %v1089
    %1166 = vmatpush.msra.mxu0 %v1088
    %1167 = vmatpush.msra.mxu0 %v1087
    %1168 = vmatpush.msra.mxu0 %v1086
    %1169 = vmatpush.msra.mxu0 %v1085
    %1170 = vmatmul.f32.gmra.mxu0 %v160
    %v1171 = vpop.f32.mrf.mxu0
    %v1172 = vadd.f32 0.0, %v1171
    %1173 = vmatmul.f32.gmra.mxu0 %v163
    %v1174 = vpop.f32.mrf.mxu0
    %v1175 = vadd.f32 0.0, %v1174
    %1176 = vmatmul.f32.gmra.mxu0 %v166
    %v1177 = vpop.f32.mrf.mxu0
    %v1178 = vadd.f32 0.0, %v1177
    %1179 = vmatmul.f32.gmra.mxu0 %v169
    %v1180 = vpop.f32.mrf.mxu0
    %v1181 = vadd.f32 0.0, %v1180
    %1182 = vmatmul.f32.gmra.mxu0 %v172
    %v1183 = vpop.f32.mrf.mxu0
    %v1184 = vadd.f32 0.0, %v1183
    %1185 = vmatmul.f32.gmra.mxu0 %v175
    %v1186 = vpop.f32.mrf.mxu0
    %v1187 = vadd.f32 0.0, %v1186
    %1188 = vmatmul.f32.gmra.mxu0 %v178
    %v1189 = vpop.f32.mrf.mxu0
    %v1190 = vadd.f32 0.0, %v1189
    %1191 = vmatmul.f32.gmra.mxu0 %v181
    %v1192 = vpop.f32.mrf.mxu0
    %v1193 = vadd.f32 0.0, %v1192
    %1194 = vdwg.mxu0
    %1195 = vmatpush.msra.mxu0 0.0
    %1196 = vmatpush.msra.mxu0 0.0
    %1197 = vmatpush.msra.mxu0 0.0
    %1198 = vmatpush.msra.mxu0 0.0
    %1199 = vmatpush.msra.mxu0 0.0
    %1200 = vmatpush.msra.mxu0 0.0
    %1201 = vmatpush.msra.mxu0 0.0
    %1202 = vmatpush.msra.mxu0 0.0
    %1203 = vmatpush.msra.mxu0 %v1100
    %1204 = vmatpush.msra.mxu0 %v1099
    %1205 = vmatpush.msra.mxu0 %v1098
    %1206 = vmatpush.msra.mxu0 %v1097
    %1207 = vmatpush.msra.mxu0 %v1096
    %1208 = vmatpush.msra.mxu0 %v1095
    %1209 = vmatpush.msra.mxu0 %v1094
    %1210 = vmatpush.msra.mxu0 %v1093
    %1211 = vmatmul.f32.gmra.mxu0 %v225
    %v1212 = vpop.f32.mrf.mxu0
    %v1213 = vadd.f32 0.0, %v1212
    %1214 = vmatmul.f32.gmra.mxu0 %v228
    %v1215 = vpop.f32.mrf.mxu0
    %v1216 = vadd.f32 0.0, %v1215
    %1217 = vmatmul.f32.gmra.mxu0 %v231
    %v1218 = vpop.f32.mrf.mxu0
    %v1219 = vadd.f32 0.0, %v1218
    %1220 = vmatmul.f32.gmra.mxu0 %v234
    %v1221 = vpop.f32.mrf.mxu0
    %v1222 = vadd.f32 0.0, %v1221
    %1223 = vmatmul.f32.gmra.mxu0 %v237
    %v1224 = vpop.f32.mrf.mxu0
    %v1225 = vadd.f32 0.0, %v1224
    %1226 = vmatmul.f32.gmra.mxu0 %v240
    %v1227 = vpop.f32.mrf.mxu0
    %v1228 = vadd.f32 0.0, %v1227
    %1229 = vmatmul.f32.gmra.mxu0 %v243
    %v1230 = vpop.f32.mrf.mxu0
    %v1231 = vadd.f32 0.0, %v1230
    %1232 = vmatmul.f32.gmra.mxu0 %v246
    %v1233 = vpop.f32.mrf.mxu0
    %v1234 = vadd.f32 0.0, %v1233
    %1235 = vdwg.mxu0
    %1236 = vmatpush.msra.mxu0 0.0
    %1237 = vmatpush.msra.mxu0 0.0
    %1238 = vmatpush.msra.mxu0 0.0
    %1239 = vmatpush.msra.mxu0 0.0
    %1240 = vmatpush.msra.mxu0 0.0
    %1241 = vmatpush.msra.mxu0 0.0
    %1242 = vmatpush.msra.mxu0 0.0
    %1243 = vmatpush.msra.mxu0 0.0
    %1244 = vmatpush.msra.mxu0 %v1108
    %1245 = vmatpush.msra.mxu0 %v1107
    %1246 = vmatpush.msra.mxu0 %v1106
    %1247 = vmatpush.msra.mxu0 %v1105
    %1248 = vmatpush.msra.mxu0 %v1104
    %1249 = vmatpush.msra.mxu0 %v1103
    %1250 = vmatpush.msra.mxu0 %v1102
    %1251 = vmatpush.msra.mxu0 %v1101
    %1252 = vmatmul.f32.gmra.mxu0 %v290
    %v1253 = vpop.f32.mrf.mxu0
    %v1254 = vadd.f32 0.0, %v1253
    %1255 = vmatmul.f32.gmra.mxu0 %v293
    %v1256 = vpop.f32.mrf.mxu0
    %v1257 = vadd.f32 0.0, %v1256
    %1258 = vmatmul.f32.gmra.mxu0 %v296
    %v1259 = vpop.f32.mrf.mxu0
    %v1260 = vadd.f32 0.0, %v1259
    %1261 = vmatmul.f32.gmra.mxu0 %v299
    %v1262 = vpop.f32.mrf.mxu0
    %v1263 = vadd.f32 0.0, %v1262
    %1264 = vmatmul.f32.gmra.mxu0 %v302
    %v1265 = vpop.f32.mrf.mxu0
    %v1266 = vadd.f32 0.0, %v1265
    %1267 = vmatmul.f32.gmra.mxu0 %v305
    %v1268 = vpop.f32.mrf.mxu0
    %v1269 = vadd.f32 0.0, %v1268
    %1270 = vmatmul.f32.gmra.mxu0 %v308
    %v1271 = vpop.f32.mrf.mxu0
    %v1272 = vadd.f32 0.0, %v1271
    %1273 = vmatmul.f32.gmra.mxu0 %v311
    %v1274 = vpop.f32.mrf.mxu0
    %v1275 = vadd.f32 0.0, %v1274
    %1276 = vdwg.mxu0
    %v1278 = vsel %vm628, %v1131, 0
    %v1281 = vsel %vm628, %v1134, 0
    %v1284 = vsel %vm628, %v1137, 0
    %v1287 = vsel %vm628, %v1140, 0
    %v1290 = vsel %vm628, %v1143, 0
    %v1293 = vsel %vm628, %v1146, 0
    %v1296 = vsel %vm628, %v1149, 0
    %v1299 = vsel %vm628, %v1152, 0
    %v1302 = vsel %vm628, %v1172, 0
    %v1305 = vsel %vm628, %v1175, 0
    %v1308 = vsel %vm628, %v1178, 0
    %v1311 = vsel %vm628, %v1181, 0
    %v1314 = vsel %vm628, %v1184, 0
    %v1317 = vsel %vm628, %v1187, 0
    %v1320 = vsel %vm628, %v1190, 0
    %v1323 = vsel %vm628, %v1193, 0
    %v1326 = vsel %vm628, %v1213, 0
    %v1329 = vsel %vm628, %v1216, 0
    %v1332 = vsel %vm628, %v1219, 0
    %v1335 = vsel %vm628, %v1222, 0
    %v1338 = vsel %vm628, %v1225, 0
    %v1341 = vsel %vm628, %v1228, 0
    %v1344 = vsel %vm628, %v1231, 0
    %v1347 = vsel %vm628, %v1234, 0
    %v1350 = vsel %vm628, %v1254, 0
    %v1353 = vsel %vm628, %v1257, 0
    %v1356 = vsel %vm628, %v1260, 0
    %v1359 = vsel %vm628, %v1263, 0
    %v1362 = vsel %vm628, %v1266, 0
    %v1365 = vsel %vm628, %v1269, 0
    %v1368 = vsel %vm628, %v1272, 0
    %v1371 = vsel %vm628, %v1275, 0
    %1373 = vmatpush.msra.mxu0 0.0
    %1374 = vmatpush.msra.mxu0 0.0
    %1375 = vmatpush.msra.mxu0 0.0
    %1376 = vmatpush.msra.mxu0 0.0
    %1377 = vmatpush.msra.mxu0 0.0
    %1378 = vmatpush.msra.mxu0 0.0
    %1379 = vmatpush.msra.mxu0 0.0
    %1380 = vmatpush.msra.mxu0 0.0
    %1381 = vmatpush.msra.mxu0 0.0
    %1382 = vmatpush.msra.mxu0 0.0
    %1383 = vmatpush.msra.mxu0 0.0
    %1384 = vmatpush.msra.mxu0 0.0
    %1385 = vmatpush.msra.mxu0 %v1112
    %1386 = vmatpush.msra.mxu0 %v1111
    %1387 = vmatpush.msra.mxu0 %v1110
    %1388 = vmatpush.msra.mxu0 %v1109
    %1389 = vmatmul.f32.gmra.mxu0 %v1278
    %v1390 = vpop.f32.mrf.mxu0
    %v1391 = vadd.f32 0.0, %v1390
    %1392 = vmatmul.f32.gmra.mxu0 %v1281
    %v1393 = vpop.f32.mrf.mxu0
    %v1394 = vadd.f32 0.0, %v1393
    %1395 = vmatmul.f32.gmra.mxu0 %v1284
    %v1396 = vpop.f32.mrf.mxu0
    %v1397 = vadd.f32 0.0, %v1396
    %1398 = vmatmul.f32.gmra.mxu0 %v1287
    %v1399 = vpop.f32.mrf.mxu0
    %v1400 = vadd.f32 0.0, %v1399
    %1401 = vmatmul.f32.gmra.mxu0 %v1290
    %v1402 = vpop.f32.mrf.mxu0
    %v1403 = vadd.f32 0.0, %v1402
    %1404 = vmatmul.f32.gmra.mxu0 %v1293
    %v1405 = vpop.f32.mrf.mxu0
    %v1406 = vadd.f32 0.0, %v1405
    %1407 = vmatmul.f32.gmra.mxu0 %v1296
    %v1408 = vpop.f32.mrf.mxu0
    %v1409 = vadd.f32 0.0, %v1408
    %1410 = vmatmul.f32.gmra.mxu0 %v1299
    %v1411 = vpop.f32.mrf.mxu0
    %v1412 = vadd.f32 0.0, %v1411
    %1413 = vmatmul.f32.gmra.mxu0 %v1302
    %v1414 = vpop.f32.mrf.mxu0
    %v1415 = vadd.f32 0.0, %v1414
    %1416 = vmatmul.f32.gmra.mxu0 %v1305
    %v1417 = vpop.f32.mrf.mxu0
    %v1418 = vadd.f32 0.0, %v1417
    %1419 = vmatmul.f32.gmra.mxu0 %v1308
    %v1420 = vpop.f32.mrf.mxu0
    %v1421 = vadd.f32 0.0, %v1420
    %1422 = vmatmul.f32.gmra.mxu0 %v1311
    %v1423 = vpop.f32.mrf.mxu0
    %v1424 = vadd.f32 0.0, %v1423
    %1425 = vmatmul.f32.gmra.mxu0 %v1314
    %v1426 = vpop.f32.mrf.mxu0
    %v1427 = vadd.f32 0.0, %v1426
    %1428 = vmatmul.f32.gmra.mxu0 %v1317
    %v1429 = vpop.f32.mrf.mxu0
    %v1430 = vadd.f32 0.0, %v1429
    %1431 = vmatmul.f32.gmra.mxu0 %v1320
    %v1432 = vpop.f32.mrf.mxu0
    %v1433 = vadd.f32 0.0, %v1432
    %1434 = vmatmul.f32.gmra.mxu0 %v1323
    %v1435 = vpop.f32.mrf.mxu0
    %v1436 = vadd.f32 0.0, %v1435
    %1437 = vmatmul.f32.gmra.mxu0 %v1326
    %v1438 = vpop.f32.mrf.mxu0
    %v1439 = vadd.f32 0.0, %v1438
    %1440 = vmatmul.f32.gmra.mxu0 %v1329
    %v1441 = vpop.f32.mrf.mxu0
    %v1442 = vadd.f32 0.0, %v1441
    %1443 = vmatmul.f32.gmra.mxu0 %v1332
    %v1444 = vpop.f32.mrf.mxu0
    %v1445 = vadd.f32 0.0, %v1444
    %1446 = vmatmul.f32.gmra.mxu0 %v1335
    %v1447 = vpop.f32.mrf.mxu0
    %v1448 = vadd.f32 0.0, %v1447
    %1449 = vmatmul.f32.gmra.mxu0 %v1338
    %v1450 = vpop.f32.mrf.mxu0
    %v1451 = vadd.f32 0.0, %v1450
    %1452 = vmatmul.f32.gmra.mxu0 %v1341
    %v1453 = vpop.f32.mrf.mxu0
    %v1454 = vadd.f32 0.0, %v1453
    %1455 = vmatmul.f32.gmra.mxu0 %v1344
    %v1456 = vpop.f32.mrf.mxu0
    %v1457 = vadd.f32 0.0, %v1456
    %1458 = vmatmul.f32.gmra.mxu0 %v1347
    %v1459 = vpop.f32.mrf.mxu0
    %v1460 = vadd.f32 0.0, %v1459
    %1461 = vmatmul.f32.gmra.mxu0 %v1350
    %v1462 = vpop.f32.mrf.mxu0
    %v1463 = vadd.f32 0.0, %v1462
    %1464 = vmatmul.f32.gmra.mxu0 %v1353
    %v1465 = vpop.f32.mrf.mxu0
    %v1466 = vadd.f32 0.0, %v1465
    %1467 = vmatmul.f32.gmra.mxu0 %v1356
    %v1468 = vpop.f32.mrf.mxu0
    %v1469 = vadd.f32 0.0, %v1468
    %1470 = vmatmul.f32.gmra.mxu0 %v1359
    %v1471 = vpop.f32.mrf.mxu0
    %v1472 = vadd.f32 0.0, %v1471
    %1473 = vmatmul.f32.gmra.mxu0 %v1362
    %v1474 = vpop.f32.mrf.mxu0
    %v1475 = vadd.f32 0.0, %v1474
    %1476 = vmatmul.f32.gmra.mxu0 %v1365
    %v1477 = vpop.f32.mrf.mxu0
    %v1478 = vadd.f32 0.0, %v1477
    %1479 = vmatmul.f32.gmra.mxu0 %v1368
    %v1480 = vpop.f32.mrf.mxu0
    %v1481 = vadd.f32 0.0, %v1480
    %1482 = vmatmul.f32.gmra.mxu0 %v1371
    %v1483 = vpop.f32.mrf.mxu0
    %v1484 = vadd.f32 0.0, %v1483
    %1485 = vdwg.mxu0
    %v1486 = vmax.f32 %v1391, 0.0
    %v1487 = vmax.f32 %v1394, 0.0
    %v1488 = vmax.f32 %v1397, 0.0
    %v1489 = vmax.f32 %v1400, 0.0
    %v1490 = vmax.f32 %v1403, 0.0
    %v1491 = vmax.f32 %v1406, 0.0
    %v1492 = vmax.f32 %v1409, 0.0
    %v1493 = vmax.f32 %v1412, 0.0
    %v1494 = vmax.f32 %v1415, 0.0
    %v1495 = vmax.f32 %v1418, 0.0
    %v1496 = vmax.f32 %v1421, 0.0
    %v1497 = vmax.f32 %v1424, 0.0
    %v1498 = vmax.f32 %v1427, 0.0
    %v1499 = vmax.f32 %v1430, 0.0
    %v1500 = vmax.f32 %v1433, 0.0
    %v1501 = vmax.f32 %v1436, 0.0
    %v1502 = vmax.f32 %v1439, 0.0
    %v1503 = vmax.f32 %v1442, 0.0
    %v1504 = vmax.f32 %v1445, 0.0
    %v1505 = vmax.f32 %v1448, 0.0
    %v1506 = vmax.f32 %v1451, 0.0
    %v1507 = vmax.f32 %v1454, 0.0
    %v1508 = vmax.f32 %v1457, 0.0
    %v1509 = vmax.f32 %v1460, 0.0
    %v1510 = vmax.f32 %v1463, 0.0
    %v1511 = vmax.f32 %v1466, 0.0
    %v1512 = vmax.f32 %v1469, 0.0
    %v1513 = vmax.f32 %v1472, 0.0
    %v1514 = vmax.f32 %v1475, 0.0
    %v1515 = vmax.f32 %v1478, 0.0
    %v1516 = vmax.f32 %v1481, 0.0
    %v1517 = vmax.f32 %v1484, 0.0
    %v1518 = vmul.f32 %v1486, %v1486
    %v1519 = vmul.f32 %v1487, %v1487
    %v1520 = vmul.f32 %v1488, %v1488
    %v1521 = vmul.f32 %v1489, %v1489
    %v1522 = vmul.f32 %v1490, %v1490
    %v1523 = vmul.f32 %v1491, %v1491
    %v1524 = vmul.f32 %v1492, %v1492
    %v1525 = vmul.f32 %v1493, %v1493
    %v1526 = vmul.f32 %v1494, %v1494
    %v1527 = vmul.f32 %v1495, %v1495
    %v1528 = vmul.f32 %v1496, %v1496
    %v1529 = vmul.f32 %v1497, %v1497
    %v1530 = vmul.f32 %v1498, %v1498
    %v1531 = vmul.f32 %v1499, %v1499
    %v1532 = vmul.f32 %v1500, %v1500
    %v1533 = vmul.f32 %v1501, %v1501
    %v1534 = vmul.f32 %v1502, %v1502
    %v1535 = vmul.f32 %v1503, %v1503
    %v1536 = vmul.f32 %v1504, %v1504
    %v1537 = vmul.f32 %v1505, %v1505
    %v1538 = vmul.f32 %v1506, %v1506
    %v1539 = vmul.f32 %v1507, %v1507
    %v1540 = vmul.f32 %v1508, %v1508
    %v1541 = vmul.f32 %v1509, %v1509
    %v1542 = vmul.f32 %v1510, %v1510
    %v1543 = vmul.f32 %v1511, %v1511
    %v1544 = vmul.f32 %v1512, %v1512
    %v1545 = vmul.f32 %v1513, %v1513
    %v1546 = vmul.f32 %v1514, %v1514
    %v1547 = vmul.f32 %v1515, %v1515
    %v1548 = vmul.f32 %v1516, %v1516
    %v1549 = vmul.f32 %v1517, %v1517
    %v1550 = vsel %vm628, %v1518, 0.0
    %1551 = vadd.xlane.f32.xlu0 %v1550
    %v1552 = vpop.xlane.xlu0 %1551
    %v1553 = vsel %vm628, %v1519, 0.0
    %1554 = vadd.xlane.f32.xlu0 %v1553
    %v1555 = vpop.xlane.xlu0 %1554
    %v1556 = vsel %vm628, %v1520, 0.0
    %1557 = vadd.xlane.f32.xlu0 %v1556
    %v1558 = vpop.xlane.xlu0 %1557
    %v1559 = vsel %vm628, %v1521, 0.0
    %1560 = vadd.xlane.f32.xlu0 %v1559
    %v1561 = vpop.xlane.xlu0 %1560
    %v1562 = vsel %vm628, %v1522, 0.0
    %1563 = vadd.xlane.f32.xlu0 %v1562
    %v1564 = vpop.xlane.xlu0 %1563
    %v1565 = vsel %vm628, %v1523, 0.0
    %1566 = vadd.xlane.f32.xlu0 %v1565
    %v1567 = vpop.xlane.xlu0 %1566
    %v1568 = vsel %vm628, %v1524, 0.0
    %1569 = vadd.xlane.f32.xlu0 %v1568
    %v1570 = vpop.xlane.xlu0 %1569
    %v1571 = vsel %vm628, %v1525, 0.0
    %1572 = vadd.xlane.f32.xlu0 %v1571
    %v1573 = vpop.xlane.xlu0 %1572
    %v1574 = vsel %vm628, %v1526, 0.0
    %1575 = vadd.xlane.f32.xlu0 %v1574
    %v1576 = vpop.xlane.xlu0 %1575
    %v1577 = vsel %vm628, %v1527, 0.0
    %1578 = vadd.xlane.f32.xlu0 %v1577
    %v1579 = vpop.xlane.xlu0 %1578
    %v1580 = vsel %vm628, %v1528, 0.0
    %1581 = vadd.xlane.f32.xlu0 %v1580
    %v1582 = vpop.xlane.xlu0 %1581
    %v1583 = vsel %vm628, %v1529, 0.0
    %1584 = vadd.xlane.f32.xlu0 %v1583
    %v1585 = vpop.xlane.xlu0 %1584
    %v1586 = vsel %vm628, %v1530, 0.0
    %1587 = vadd.xlane.f32.xlu0 %v1586
    %v1588 = vpop.xlane.xlu0 %1587
    %v1589 = vsel %vm628, %v1531, 0.0
    %1590 = vadd.xlane.f32.xlu0 %v1589
    %v1591 = vpop.xlane.xlu0 %1590
    %v1592 = vsel %vm628, %v1532, 0.0
    %1593 = vadd.xlane.f32.xlu0 %v1592
    %v1594 = vpop.xlane.xlu0 %1593
    %v1595 = vsel %vm628, %v1533, 0.0
    %1596 = vadd.xlane.f32.xlu0 %v1595
    %v1597 = vpop.xlane.xlu0 %1596
    %v1598 = vsel %vm628, %v1534, 0.0
    %1599 = vadd.xlane.f32.xlu0 %v1598
    %v1600 = vpop.xlane.xlu0 %1599
    %v1601 = vsel %vm628, %v1535, 0.0
    %1602 = vadd.xlane.f32.xlu0 %v1601
    %v1603 = vpop.xlane.xlu0 %1602
    %v1604 = vsel %vm628, %v1536, 0.0
    %1605 = vadd.xlane.f32.xlu0 %v1604
    %v1606 = vpop.xlane.xlu0 %1605
    %v1607 = vsel %vm628, %v1537, 0.0
    %1608 = vadd.xlane.f32.xlu0 %v1607
    %v1609 = vpop.xlane.xlu0 %1608
    %v1610 = vsel %vm628, %v1538, 0.0
    %1611 = vadd.xlane.f32.xlu0 %v1610
    %v1612 = vpop.xlane.xlu0 %1611
    %v1613 = vsel %vm628, %v1539, 0.0
    %1614 = vadd.xlane.f32.xlu0 %v1613
    %v1615 = vpop.xlane.xlu0 %1614
    %v1616 = vsel %vm628, %v1540, 0.0
    %1617 = vadd.xlane.f32.xlu0 %v1616
    %v1618 = vpop.xlane.xlu0 %1617
    %v1619 = vsel %vm628, %v1541, 0.0
    %1620 = vadd.xlane.f32.xlu0 %v1619
    %v1621 = vpop.xlane.xlu0 %1620
    %v1622 = vsel %vm628, %v1542, 0.0
    %1623 = vadd.xlane.f32.xlu0 %v1622
    %v1624 = vpop.xlane.xlu0 %1623
    %v1625 = vsel %vm628, %v1543, 0.0
    %1626 = vadd.xlane.f32.xlu0 %v1625
    %v1627 = vpop.xlane.xlu0 %1626
    %v1628 = vsel %vm628, %v1544, 0.0
    %1629 = vadd.xlane.f32.xlu0 %v1628
    %v1630 = vpop.xlane.xlu0 %1629
    %v1631 = vsel %vm628, %v1545, 0.0
    %1632 = vadd.xlane.f32.xlu0 %v1631
    %v1633 = vpop.xlane.xlu0 %1632
    %v1634 = vsel %vm628, %v1546, 0.0
    %1635 = vadd.xlane.f32.xlu0 %v1634
    %v1636 = vpop.xlane.xlu0 %1635
    %v1637 = vsel %vm628, %v1547, 0.0
    %1638 = vadd.xlane.f32.xlu0 %v1637
    %v1639 = vpop.xlane.xlu0 %1638
    %v1640 = vsel %vm628, %v1548, 0.0
    %1641 = vadd.xlane.f32.xlu0 %v1640
    %v1642 = vpop.xlane.xlu0 %1641
    %v1643 = vsel %vm628, %v1549, 0.0
    %1644 = vadd.xlane.f32.xlu0 %v1643
    %v1645 = vpop.xlane.xlu0 %1644
    %v1646 = vmax.f32 %v1552, 1e-24
    %v1647 = vmax.f32 %v1555, 1e-24
    %v1648 = vmax.f32 %v1558, 1e-24
    %v1649 = vmax.f32 %v1561, 1e-24
    %v1650 = vmax.f32 %v1564, 1e-24
    %v1651 = vmax.f32 %v1567, 1e-24
    %v1652 = vmax.f32 %v1570, 1e-24
    %v1653 = vmax.f32 %v1573, 1e-24
    %v1654 = vmax.f32 %v1576, 1e-24
    %v1655 = vmax.f32 %v1579, 1e-24
    %v1656 = vmax.f32 %v1582, 1e-24
    %v1657 = vmax.f32 %v1585, 1e-24
    %v1658 = vmax.f32 %v1588, 1e-24
    %v1659 = vmax.f32 %v1591, 1e-24
    %v1660 = vmax.f32 %v1594, 1e-24
    %v1661 = vmax.f32 %v1597, 1e-24
    %v1662 = vmax.f32 %v1600, 1e-24
    %v1663 = vmax.f32 %v1603, 1e-24
    %v1664 = vmax.f32 %v1606, 1e-24
    %v1665 = vmax.f32 %v1609, 1e-24
    %v1666 = vmax.f32 %v1612, 1e-24
    %v1667 = vmax.f32 %v1615, 1e-24
    %v1668 = vmax.f32 %v1618, 1e-24
    %v1669 = vmax.f32 %v1621, 1e-24
    %v1670 = vmax.f32 %v1624, 1e-24
    %v1671 = vmax.f32 %v1627, 1e-24
    %v1672 = vmax.f32 %v1630, 1e-24
    %v1673 = vmax.f32 %v1633, 1e-24
    %v1674 = vmax.f32 %v1636, 1e-24
    %v1675 = vmax.f32 %v1639, 1e-24
    %v1676 = vmax.f32 %v1642, 1e-24
    %v1677 = vmax.f32 %v1645, 1e-24
    %v1678 = vrsqrt.pop %v1646
    %v1679 = vmul.f32 %v1678, %v1646
    %v1680 = vmul.f32 %v1679, %v1678
    %v1681 = vmul.f32 0.5, %v1680
    %v1682 = vsub.f32 1.5, %v1681
    %v1683 = vmul.f32 %v1678, %v1682
    %vm1684 = vweird.f32 %v1646
    %vm1685 = vweird.f32 %v1678
    %vm1686 = vmor %vm1684, %vm1685
    %v1687 = vsel %vm1686, %v1678, %v1683
    %v1688 = vrsqrt.pop %v1647
    %v1689 = vmul.f32 %v1688, %v1647
    %v1690 = vmul.f32 %v1689, %v1688
    %v1691 = vmul.f32 0.5, %v1690
    %v1692 = vsub.f32 1.5, %v1691
    %v1693 = vmul.f32 %v1688, %v1692
    %vm1694 = vweird.f32 %v1647
    %vm1695 = vweird.f32 %v1688
    %vm1696 = vmor %vm1694, %vm1695
    %v1697 = vsel %vm1696, %v1688, %v1693
    %v1698 = vrsqrt.pop %v1648
    %v1699 = vmul.f32 %v1698, %v1648
    %v1700 = vmul.f32 %v1699, %v1698
    %v1701 = vmul.f32 0.5, %v1700
    %v1702 = vsub.f32 1.5, %v1701
    %v1703 = vmul.f32 %v1698, %v1702
    %vm1704 = vweird.f32 %v1648
    %vm1705 = vweird.f32 %v1698
    %vm1706 = vmor %vm1704, %vm1705
    %v1707 = vsel %vm1706, %v1698, %v1703
    %v1708 = vrsqrt.pop %v1649
    %v1709 = vmul.f32 %v1708, %v1649
    %v1710 = vmul.f32 %v1709, %v1708
    %v1711 = vmul.f32 0.5, %v1710
    %v1712 = vsub.f32 1.5, %v1711
    %v1713 = vmul.f32 %v1708, %v1712
    %vm1714 = vweird.f32 %v1649
    %vm1715 = vweird.f32 %v1708
    %vm1716 = vmor %vm1714, %vm1715
    %v1717 = vsel %vm1716, %v1708, %v1713
    %v1718 = vrsqrt.pop %v1650
    %v1719 = vmul.f32 %v1718, %v1650
    %v1720 = vmul.f32 %v1719, %v1718
    %v1721 = vmul.f32 0.5, %v1720
    %v1722 = vsub.f32 1.5, %v1721
    %v1723 = vmul.f32 %v1718, %v1722
    %vm1724 = vweird.f32 %v1650
    %vm1725 = vweird.f32 %v1718
    %vm1726 = vmor %vm1724, %vm1725
    %v1727 = vsel %vm1726, %v1718, %v1723
    %v1728 = vrsqrt.pop %v1651
    %v1729 = vmul.f32 %v1728, %v1651
    %v1730 = vmul.f32 %v1729, %v1728
    %v1731 = vmul.f32 0.5, %v1730
    %v1732 = vsub.f32 1.5, %v1731
    %v1733 = vmul.f32 %v1728, %v1732
    %vm1734 = vweird.f32 %v1651
    %vm1735 = vweird.f32 %v1728
    %vm1736 = vmor %vm1734, %vm1735
    %v1737 = vsel %vm1736, %v1728, %v1733
    %v1738 = vrsqrt.pop %v1652
    %v1739 = vmul.f32 %v1738, %v1652
    %v1740 = vmul.f32 %v1739, %v1738
    %v1741 = vmul.f32 0.5, %v1740
    %v1742 = vsub.f32 1.5, %v1741
    %v1743 = vmul.f32 %v1738, %v1742
    %vm1744 = vweird.f32 %v1652
    %vm1745 = vweird.f32 %v1738
    %vm1746 = vmor %vm1744, %vm1745
    %v1747 = vsel %vm1746, %v1738, %v1743
    %v1748 = vrsqrt.pop %v1653
    %v1749 = vmul.f32 %v1748, %v1653
    %v1750 = vmul.f32 %v1749, %v1748
    %v1751 = vmul.f32 0.5, %v1750
    %v1752 = vsub.f32 1.5, %v1751
    %v1753 = vmul.f32 %v1748, %v1752
    %vm1754 = vweird.f32 %v1653
    %vm1755 = vweird.f32 %v1748
    %vm1756 = vmor %vm1754, %vm1755
    %v1757 = vsel %vm1756, %v1748, %v1753
    %v1758 = vrsqrt.pop %v1654
    %v1759 = vmul.f32 %v1758, %v1654
    %v1760 = vmul.f32 %v1759, %v1758
    %v1761 = vmul.f32 0.5, %v1760
    %v1762 = vsub.f32 1.5, %v1761
    %v1763 = vmul.f32 %v1758, %v1762
    %vm1764 = vweird.f32 %v1654
    %vm1765 = vweird.f32 %v1758
    %vm1766 = vmor %vm1764, %vm1765
    %v1767 = vsel %vm1766, %v1758, %v1763
    %v1768 = vrsqrt.pop %v1655
    %v1769 = vmul.f32 %v1768, %v1655
    %v1770 = vmul.f32 %v1769, %v1768
    %v1771 = vmul.f32 0.5, %v1770
    %v1772 = vsub.f32 1.5, %v1771
    %v1773 = vmul.f32 %v1768, %v1772
    %vm1774 = vweird.f32 %v1655
    %vm1775 = vweird.f32 %v1768
    %vm1776 = vmor %vm1774, %vm1775
    %v1777 = vsel %vm1776, %v1768, %v1773
    %v1778 = vrsqrt.pop %v1656
    %v1779 = vmul.f32 %v1778, %v1656
    %v1780 = vmul.f32 %v1779, %v1778
    %v1781 = vmul.f32 0.5, %v1780
    %v1782 = vsub.f32 1.5, %v1781
    %v1783 = vmul.f32 %v1778, %v1782
    %vm1784 = vweird.f32 %v1656
    %vm1785 = vweird.f32 %v1778
    %vm1786 = vmor %vm1784, %vm1785
    %v1787 = vsel %vm1786, %v1778, %v1783
    %v1788 = vrsqrt.pop %v1657
    %v1789 = vmul.f32 %v1788, %v1657
    %v1790 = vmul.f32 %v1789, %v1788
    %v1791 = vmul.f32 0.5, %v1790
    %v1792 = vsub.f32 1.5, %v1791
    %v1793 = vmul.f32 %v1788, %v1792
    %vm1794 = vweird.f32 %v1657
    %vm1795 = vweird.f32 %v1788
    %vm1796 = vmor %vm1794, %vm1795
    %v1797 = vsel %vm1796, %v1788, %v1793
    %v1798 = vrsqrt.pop %v1658
    %v1799 = vmul.f32 %v1798, %v1658
    %v1800 = vmul.f32 %v1799, %v1798
    %v1801 = vmul.f32 0.5, %v1800
    %v1802 = vsub.f32 1.5, %v1801
    %v1803 = vmul.f32 %v1798, %v1802
    %vm1804 = vweird.f32 %v1658
    %vm1805 = vweird.f32 %v1798
    %vm1806 = vmor %vm1804, %vm1805
    %v1807 = vsel %vm1806, %v1798, %v1803
    %v1808 = vrsqrt.pop %v1659
    %v1809 = vmul.f32 %v1808, %v1659
    %v1810 = vmul.f32 %v1809, %v1808
    %v1811 = vmul.f32 0.5, %v1810
    %v1812 = vsub.f32 1.5, %v1811
    %v1813 = vmul.f32 %v1808, %v1812
    %vm1814 = vweird.f32 %v1659
    %vm1815 = vweird.f32 %v1808
    %vm1816 = vmor %vm1814, %vm1815
    %v1817 = vsel %vm1816, %v1808, %v1813
    %v1818 = vrsqrt.pop %v1660
    %v1819 = vmul.f32 %v1818, %v1660
    %v1820 = vmul.f32 %v1819, %v1818
    %v1821 = vmul.f32 0.5, %v1820
    %v1822 = vsub.f32 1.5, %v1821
    %v1823 = vmul.f32 %v1818, %v1822
    %vm1824 = vweird.f32 %v1660
    %vm1825 = vweird.f32 %v1818
    %vm1826 = vmor %vm1824, %vm1825
    %v1827 = vsel %vm1826, %v1818, %v1823
    %v1828 = vrsqrt.pop %v1661
    %v1829 = vmul.f32 %v1828, %v1661
    %v1830 = vmul.f32 %v1829, %v1828
    %v1831 = vmul.f32 0.5, %v1830
    %v1832 = vsub.f32 1.5, %v1831
    %v1833 = vmul.f32 %v1828, %v1832
    %vm1834 = vweird.f32 %v1661
    %vm1835 = vweird.f32 %v1828
    %vm1836 = vmor %vm1834, %vm1835
    %v1837 = vsel %vm1836, %v1828, %v1833
    %v1838 = vrsqrt.pop %v1662
    %v1839 = vmul.f32 %v1838, %v1662
    %v1840 = vmul.f32 %v1839, %v1838
    %v1841 = vmul.f32 0.5, %v1840
    %v1842 = vsub.f32 1.5, %v1841
    %v1843 = vmul.f32 %v1838, %v1842
    %vm1844 = vweird.f32 %v1662
    %vm1845 = vweird.f32 %v1838
    %vm1846 = vmor %vm1844, %vm1845
    %v1847 = vsel %vm1846, %v1838, %v1843
    %v1848 = vrsqrt.pop %v1663
    %v1849 = vmul.f32 %v1848, %v1663
    %v1850 = vmul.f32 %v1849, %v1848
    %v1851 = vmul.f32 0.5, %v1850
    %v1852 = vsub.f32 1.5, %v1851
    %v1853 = vmul.f32 %v1848, %v1852
    %vm1854 = vweird.f32 %v1663
    %vm1855 = vweird.f32 %v1848
    %vm1856 = vmor %vm1854, %vm1855
    %v1857 = vsel %vm1856, %v1848, %v1853
    %v1858 = vrsqrt.pop %v1664
    %v1859 = vmul.f32 %v1858, %v1664
    %v1860 = vmul.f32 %v1859, %v1858
    %v1861 = vmul.f32 0.5, %v1860
    %v1862 = vsub.f32 1.5, %v1861
    %v1863 = vmul.f32 %v1858, %v1862
    %vm1864 = vweird.f32 %v1664
    %vm1865 = vweird.f32 %v1858
    %vm1866 = vmor %vm1864, %vm1865
    %v1867 = vsel %vm1866, %v1858, %v1863
    %v1868 = vrsqrt.pop %v1665
    %v1869 = vmul.f32 %v1868, %v1665
    %v1870 = vmul.f32 %v1869, %v1868
    %v1871 = vmul.f32 0.5, %v1870
    %v1872 = vsub.f32 1.5, %v1871
    %v1873 = vmul.f32 %v1868, %v1872
    %vm1874 = vweird.f32 %v1665
    %vm1875 = vweird.f32 %v1868
    %vm1876 = vmor %vm1874, %vm1875
    %v1877 = vsel %vm1876, %v1868, %v1873
    %v1878 = vrsqrt.pop %v1666
    %v1879 = vmul.f32 %v1878, %v1666
    %v1880 = vmul.f32 %v1879, %v1878
    %v1881 = vmul.f32 0.5, %v1880
    %v1882 = vsub.f32 1.5, %v1881
    %v1883 = vmul.f32 %v1878, %v1882
    %vm1884 = vweird.f32 %v1666
    %vm1885 = vweird.f32 %v1878
    %vm1886 = vmor %vm1884, %vm1885
    %v1887 = vsel %vm1886, %v1878, %v1883
    %v1888 = vrsqrt.pop %v1667
    %v1889 = vmul.f32 %v1888, %v1667
    %v1890 = vmul.f32 %v1889, %v1888
    %v1891 = vmul.f32 0.5, %v1890
    %v1892 = vsub.f32 1.5, %v1891
    %v1893 = vmul.f32 %v1888, %v1892
    %vm1894 = vweird.f32 %v1667
    %vm1895 = vweird.f32 %v1888
    %vm1896 = vmor %vm1894, %vm1895
    %v1897 = vsel %vm1896, %v1888, %v1893
    %v1898 = vrsqrt.pop %v1668
    %v1899 = vmul.f32 %v1898, %v1668
    %v1900 = vmul.f32 %v1899, %v1898
    %v1901 = vmul.f32 0.5, %v1900
    %v1902 = vsub.f32 1.5, %v1901
    %v1903 = vmul.f32 %v1898, %v1902
    %vm1904 = vweird.f32 %v1668
    %vm1905 = vweird.f32 %v1898
    %vm1906 = vmor %vm1904, %vm1905
    %v1907 = vsel %vm1906, %v1898, %v1903
    %v1908 = vrsqrt.pop %v1669
    %v1909 = vmul.f32 %v1908, %v1669
    %v1910 = vmul.f32 %v1909, %v1908
    %v1911 = vmul.f32 0.5, %v1910
    %v1912 = vsub.f32 1.5, %v1911
    %v1913 = vmul.f32 %v1908, %v1912
    %vm1914 = vweird.f32 %v1669
    %vm1915 = vweird.f32 %v1908
    %vm1916 = vmor %vm1914, %vm1915
    %v1917 = vsel %vm1916, %v1908, %v1913
    %v1918 = vrsqrt.pop %v1670
    %v1919 = vmul.f32 %v1918, %v1670
    %v1920 = vmul.f32 %v1919, %v1918
    %v1921 = vmul.f32 0.5, %v1920
    %v1922 = vsub.f32 1.5, %v1921
    %v1923 = vmul.f32 %v1918, %v1922
    %vm1924 = vweird.f32 %v1670
    %vm1925 = vweird.f32 %v1918
    %vm1926 = vmor %vm1924, %vm1925
    %v1927 = vsel %vm1926, %v1918, %v1923
    %v1928 = vrsqrt.pop %v1671
    %v1929 = vmul.f32 %v1928, %v1671
    %v1930 = vmul.f32 %v1929, %v1928
    %v1931 = vmul.f32 0.5, %v1930
    %v1932 = vsub.f32 1.5, %v1931
    %v1933 = vmul.f32 %v1928, %v1932
    %vm1934 = vweird.f32 %v1671
    %vm1935 = vweird.f32 %v1928
    %vm1936 = vmor %vm1934, %vm1935
    %v1937 = vsel %vm1936, %v1928, %v1933
    %v1938 = vrsqrt.pop %v1672
    %v1939 = vmul.f32 %v1938, %v1672
    %v1940 = vmul.f32 %v1939, %v1938
    %v1941 = vmul.f32 0.5, %v1940
    %v1942 = vsub.f32 1.5, %v1941
    %v1943 = vmul.f32 %v1938, %v1942
    %vm1944 = vweird.f32 %v1672
    %vm1945 = vweird.f32 %v1938
    %vm1946 = vmor %vm1944, %vm1945
    %v1947 = vsel %vm1946, %v1938, %v1943
    %v1948 = vrsqrt.pop %v1673
    %v1949 = vmul.f32 %v1948, %v1673
    %v1950 = vmul.f32 %v1949, %v1948
    %v1951 = vmul.f32 0.5, %v1950
    %v1952 = vsub.f32 1.5, %v1951
    %v1953 = vmul.f32 %v1948, %v1952
    %vm1954 = vweird.f32 %v1673
    %vm1955 = vweird.f32 %v1948
    %vm1956 = vmor %vm1954, %vm1955
    %v1957 = vsel %vm1956, %v1948, %v1953
    %v1958 = vrsqrt.pop %v1674
    %v1959 = vmul.f32 %v1958, %v1674
    %v1960 = vmul.f32 %v1959, %v1958
    %v1961 = vmul.f32 0.5, %v1960
    %v1962 = vsub.f32 1.5, %v1961
    %v1963 = vmul.f32 %v1958, %v1962
    %vm1964 = vweird.f32 %v1674
    %vm1965 = vweird.f32 %v1958
    %vm1966 = vmor %vm1964, %vm1965
    %v1967 = vsel %vm1966, %v1958, %v1963
    %v1968 = vrsqrt.pop %v1675
    %v1969 = vmul.f32 %v1968, %v1675
    %v1970 = vmul.f32 %v1969, %v1968
    %v1971 = vmul.f32 0.5, %v1970
    %v1972 = vsub.f32 1.5, %v1971
    %v1973 = vmul.f32 %v1968, %v1972
    %vm1974 = vweird.f32 %v1675
    %vm1975 = vweird.f32 %v1968
    %vm1976 = vmor %vm1974, %vm1975
    %v1977 = vsel %vm1976, %v1968, %v1973
    %v1978 = vrsqrt.pop %v1676
    %v1979 = vmul.f32 %v1978, %v1676
    %v1980 = vmul.f32 %v1979, %v1978
    %v1981 = vmul.f32 0.5, %v1980
    %v1982 = vsub.f32 1.5, %v1981
    %v1983 = vmul.f32 %v1978, %v1982
    %vm1984 = vweird.f32 %v1676
    %vm1985 = vweird.f32 %v1978
    %vm1986 = vmor %vm1984, %vm1985
    %v1987 = vsel %vm1986, %v1978, %v1983
    %v1988 = vrsqrt.pop %v1677
    %v1989 = vmul.f32 %v1988, %v1677
    %v1990 = vmul.f32 %v1989, %v1988
    %v1991 = vmul.f32 0.5, %v1990
    %v1992 = vsub.f32 1.5, %v1991
    %v1993 = vmul.f32 %v1988, %v1992
    %vm1994 = vweird.f32 %v1677
    %vm1995 = vweird.f32 %v1988
    %vm1996 = vmor %vm1994, %vm1995
    %v1997 = vsel %vm1996, %v1988, %v1993
    %v1998 = vmul.f32 %v1486, %v1687
    %v1999 = vmul.f32 %v1487, %v1697
    %v2000 = vmul.f32 %v1488, %v1707
    %v2001 = vmul.f32 %v1489, %v1717
    %v2002 = vmul.f32 %v1490, %v1727
    %v2003 = vmul.f32 %v1491, %v1737
    %v2004 = vmul.f32 %v1492, %v1747
    %v2005 = vmul.f32 %v1493, %v1757
    %v2006 = vmul.f32 %v1494, %v1767
    %v2007 = vmul.f32 %v1495, %v1777
    %v2008 = vmul.f32 %v1496, %v1787
    %v2009 = vmul.f32 %v1497, %v1797
    %v2010 = vmul.f32 %v1498, %v1807
    %v2011 = vmul.f32 %v1499, %v1817
    %v2012 = vmul.f32 %v1500, %v1827
    %v2013 = vmul.f32 %v1501, %v1837
    %v2014 = vmul.f32 %v1502, %v1847
    %v2015 = vmul.f32 %v1503, %v1857
    %v2016 = vmul.f32 %v1504, %v1867
    %v2017 = vmul.f32 %v1505, %v1877
    %v2018 = vmul.f32 %v1506, %v1887
    %v2019 = vmul.f32 %v1507, %v1897
    %v2020 = vmul.f32 %v1508, %v1907
    %v2021 = vmul.f32 %v1509, %v1917
    %v2022 = vmul.f32 %v1510, %v1927
    %v2023 = vmul.f32 %v1511, %v1937
    %v2024 = vmul.f32 %v1512, %v1947
    %v2025 = vmul.f32 %v1513, %v1957
    %v2026 = vmul.f32 %v1514, %v1967
    %v2027 = vmul.f32 %v1515, %v1977
    %v2028 = vmul.f32 %v1516, %v1987
    %v2029 = vmul.f32 %v1517, %v1997
    %v2030 = vld [vmem:[%s5] sm:$0xff]
    %v2031 = vld [vmem:[%s5 + $0x8] sm:$0xff]
    %v2032 = vld [vmem:[%s5 + $0x10] sm:$0xff]
    %v2033 = vld [vmem:[%s5 + $0x18] sm:$0xff]
    %v2034 = vld [vmem:[%s5 + $0x20] sm:$0x1]
    %v2035 = vld [vmem:[%s5 + $0x21] sm:$0xff]
    %v2036 = vld [vmem:[%s5 + $0x29] sm:$0xff]
    %v2037 = vld [vmem:[%s5 + $0x31] sm:$0xff]
    %v2038 = vld [vmem:[%s5 + $0x39] sm:$0xff]
    %v2039 = vld [vmem:[%s5 + $0x41] sm:$0xff]
    %v2040 = vld [vmem:[%s5 + $0x49] sm:$0xff]
    %v2041 = vld [vmem:[%s5 + $0x51] sm:$0xff]
    %v2042 = vld [vmem:[%s5 + $0x59] sm:$0xff]
    %v2043 = vld [vmem:[%s5 + $0x61] sm:$0x1]
    %v2044 = vld [vmem:[%s5 + $0x62] sm:$0x1]
    %v2045 = vmul.f32 %v2006, 2.0
    %v2046 = vmul.f32 %v2007, 2.0
    %v2047 = vmul.f32 %v2008, 2.0
    %v2048 = vmul.f32 %v2009, 2.0
    %v2049 = vmul.f32 %v2010, 2.0
    %v2050 = vmul.f32 %v2011, 2.0
    %v2051 = vmul.f32 %v2012, 2.0
    %v2052 = vmul.f32 %v2013, 2.0
    %v2053 = vmul.f32 %v2014, 2.0
    %v2054 = vmul.f32 %v2015, 2.0
    %v2055 = vmul.f32 %v2016, 2.0
    %v2056 = vmul.f32 %v2017, 2.0
    %v2057 = vmul.f32 %v2018, 2.0
    %v2058 = vmul.f32 %v2019, 2.0
    %v2059 = vmul.f32 %v2020, 2.0
    %v2060 = vmul.f32 %v2021, 2.0
    %v2061 = vmul.f32 %v2022, 2.0
    %v2062 = vmul.f32 %v2023, 2.0
    %v2063 = vmul.f32 %v2024, 2.0
    %v2064 = vmul.f32 %v2025, 2.0
    %v2065 = vmul.f32 %v2026, 2.0
    %v2066 = vmul.f32 %v2027, 2.0
    %v2067 = vmul.f32 %v2028, 2.0
    %v2068 = vmul.f32 %v2029, 2.0
    %v2069 = vperm.slane %v2034, 0
    %v2071 = vsel %vm628, %v2045, 0
    %v2074 = vsel %vm628, %v2046, 0
    %v2077 = vsel %vm628, %v2047, 0
    %v2080 = vsel %vm628, %v2048, 0
    %v2083 = vsel %vm628, %v2049, 0
    %v2086 = vsel %vm628, %v2050, 0
    %v2089 = vsel %vm628, %v2051, 0
    %v2092 = vsel %vm628, %v2052, 0
    %v2095 = vsel %vm628, %v2053, 0
    %v2098 = vsel %vm628, %v2054, 0
    %v2101 = vsel %vm628, %v2055, 0
    %v2104 = vsel %vm628, %v2056, 0
    %v2107 = vsel %vm628, %v2057, 0
    %v2110 = vsel %vm628, %v2058, 0
    %v2113 = vsel %vm628, %v2059, 0
    %v2116 = vsel %vm628, %v2060, 0
    %v2119 = vsel %vm628, %v2061, 0
    %v2122 = vsel %vm628, %v2062, 0
    %v2125 = vsel %vm628, %v2063, 0
    %v2128 = vsel %vm628, %v2064, 0
    %v2131 = vsel %vm628, %v2065, 0
    %v2134 = vsel %vm628, %v2066, 0
    %v2137 = vsel %vm628, %v2067, 0
    %v2140 = vsel %vm628, %v2068, 0
    %2142 = vmatpush.msra.mxu0 0.0
    %2143 = vmatpush.msra.mxu0 0.0
    %2144 = vmatpush.msra.mxu0 0.0
    %2145 = vmatpush.msra.mxu0 0.0
    %2146 = vmatpush.msra.mxu0 0.0
    %2147 = vmatpush.msra.mxu0 0.0
    %2148 = vmatpush.msra.mxu0 0.0
    %2149 = vmatpush.msra.mxu0 0.0
    %2150 = vmatpush.msra.mxu0 0.0
    %2151 = vmatpush.msra.mxu0 0.0
    %2152 = vmatpush.msra.mxu0 0.0
    %2153 = vmatpush.msra.mxu0 0.0
    %2154 = vmatpush.msra.mxu0 %v2033
    %2155 = vmatpush.msra.mxu0 %v2032
    %2156 = vmatpush.msra.mxu0 %v2031
    %2157 = vmatpush.msra.mxu0 %v2030
    %2158 = vmatmul.f32.gmra.mxu0 %v2071
    %v2159 = vpop.f32.mrf.mxu0
    %v2160 = vadd.f32 %v2069, %v2159
    %2161 = vmatmul.f32.gmra.mxu0 %v2074
    %v2162 = vpop.f32.mrf.mxu0
    %v2163 = vadd.f32 %v2069, %v2162
    %2164 = vmatmul.f32.gmra.mxu0 %v2077
    %v2165 = vpop.f32.mrf.mxu0
    %v2166 = vadd.f32 %v2069, %v2165
    %2167 = vmatmul.f32.gmra.mxu0 %v2080
    %v2168 = vpop.f32.mrf.mxu0
    %v2169 = vadd.f32 %v2069, %v2168
    %2170 = vmatmul.f32.gmra.mxu0 %v2083
    %v2171 = vpop.f32.mrf.mxu0
    %v2172 = vadd.f32 %v2069, %v2171
    %2173 = vmatmul.f32.gmra.mxu0 %v2086
    %v2174 = vpop.f32.mrf.mxu0
    %v2175 = vadd.f32 %v2069, %v2174
    %2176 = vmatmul.f32.gmra.mxu0 %v2089
    %v2177 = vpop.f32.mrf.mxu0
    %v2178 = vadd.f32 %v2069, %v2177
    %2179 = vmatmul.f32.gmra.mxu0 %v2092
    %v2180 = vpop.f32.mrf.mxu0
    %v2181 = vadd.f32 %v2069, %v2180
    %2182 = vmatmul.f32.gmra.mxu0 %v2095
    %v2183 = vpop.f32.mrf.mxu0
    %v2184 = vadd.f32 %v2069, %v2183
    %2185 = vmatmul.f32.gmra.mxu0 %v2098
    %v2186 = vpop.f32.mrf.mxu0
    %v2187 = vadd.f32 %v2069, %v2186
    %2188 = vmatmul.f32.gmra.mxu0 %v2101
    %v2189 = vpop.f32.mrf.mxu0
    %v2190 = vadd.f32 %v2069, %v2189
    %2191 = vmatmul.f32.gmra.mxu0 %v2104
    %v2192 = vpop.f32.mrf.mxu0
    %v2193 = vadd.f32 %v2069, %v2192
    %2194 = vmatmul.f32.gmra.mxu0 %v2107
    %v2195 = vpop.f32.mrf.mxu0
    %v2196 = vadd.f32 %v2069, %v2195
    %2197 = vmatmul.f32.gmra.mxu0 %v2110
    %v2198 = vpop.f32.mrf.mxu0
    %v2199 = vadd.f32 %v2069, %v2198
    %2200 = vmatmul.f32.gmra.mxu0 %v2113
    %v2201 = vpop.f32.mrf.mxu0
    %v2202 = vadd.f32 %v2069, %v2201
    %2203 = vmatmul.f32.gmra.mxu0 %v2116
    %v2204 = vpop.f32.mrf.mxu0
    %v2205 = vadd.f32 %v2069, %v2204
    %2206 = vmatmul.f32.gmra.mxu0 %v2119
    %v2207 = vpop.f32.mrf.mxu0
    %v2208 = vadd.f32 %v2069, %v2207
    %2209 = vmatmul.f32.gmra.mxu0 %v2122
    %v2210 = vpop.f32.mrf.mxu0
    %v2211 = vadd.f32 %v2069, %v2210
    %2212 = vmatmul.f32.gmra.mxu0 %v2125
    %v2213 = vpop.f32.mrf.mxu0
    %v2214 = vadd.f32 %v2069, %v2213
    %2215 = vmatmul.f32.gmra.mxu0 %v2128
    %v2216 = vpop.f32.mrf.mxu0
    %v2217 = vadd.f32 %v2069, %v2216
    %2218 = vmatmul.f32.gmra.mxu0 %v2131
    %v2219 = vpop.f32.mrf.mxu0
    %v2220 = vadd.f32 %v2069, %v2219
    %2221 = vmatmul.f32.gmra.mxu0 %v2134
    %v2222 = vpop.f32.mrf.mxu0
    %v2223 = vadd.f32 %v2069, %v2222
    %2224 = vmatmul.f32.gmra.mxu0 %v2137
    %v2225 = vpop.f32.mrf.mxu0
    %v2226 = vadd.f32 %v2069, %v2225
    %2227 = vmatmul.f32.gmra.mxu0 %v2140
    %v2228 = vpop.f32.mrf.mxu0
    %v2229 = vadd.f32 %v2069, %v2228
    %2230 = vdwg.mxu0
    %v2231 = vperm.slane %v2043, 0
    %v2232 = vmul.f32 %v2006, %v2231
    %v2233 = vmul.f32 %v2007, %v2231
    %v2234 = vmul.f32 %v2008, %v2231
    %v2235 = vmul.f32 %v2009, %v2231
    %v2236 = vmul.f32 %v2010, %v2231
    %v2237 = vmul.f32 %v2011, %v2231
    %v2238 = vmul.f32 %v2012, %v2231
    %v2239 = vmul.f32 %v2013, %v2231
    %v2240 = vmul.f32 %v2014, %v2231
    %v2241 = vmul.f32 %v2015, %v2231
    %v2242 = vmul.f32 %v2016, %v2231
    %v2243 = vmul.f32 %v2017, %v2231
    %v2244 = vmul.f32 %v2018, %v2231
    %v2245 = vmul.f32 %v2019, %v2231
    %v2246 = vmul.f32 %v2020, %v2231
    %v2247 = vmul.f32 %v2021, %v2231
    %v2248 = vmul.f32 %v2022, %v2231
    %v2249 = vmul.f32 %v2023, %v2231
    %v2250 = vmul.f32 %v2024, %v2231
    %v2251 = vmul.f32 %v2025, %v2231
    %v2252 = vmul.f32 %v2026, %v2231
    %v2253 = vmul.f32 %v2027, %v2231
    %v2254 = vmul.f32 %v2028, %v2231
    %v2255 = vmul.f32 %v2029, %v2231
    %v2256 = vsel %vm628, %v2232, 0.0
    %2257 = vadd.xlane.f32.xlu0 %v2256
    %v2258 = vpop.xlane.xlu0 %2257
    %v2259 = vsel %vm628, %v2233, 0.0
    %2260 = vadd.xlane.f32.xlu0 %v2259
    %v2261 = vpop.xlane.xlu0 %2260
    %v2262 = vsel %vm628, %v2234, 0.0
    %2263 = vadd.xlane.f32.xlu0 %v2262
    %v2264 = vpop.xlane.xlu0 %2263
    %v2265 = vsel %vm628, %v2235, 0.0
    %2266 = vadd.xlane.f32.xlu0 %v2265
    %v2267 = vpop.xlane.xlu0 %2266
    %v2268 = vsel %vm628, %v2236, 0.0
    %2269 = vadd.xlane.f32.xlu0 %v2268
    %v2270 = vpop.xlane.xlu0 %2269
    %v2271 = vsel %vm628, %v2237, 0.0
    %2272 = vadd.xlane.f32.xlu0 %v2271
    %v2273 = vpop.xlane.xlu0 %2272
    %v2274 = vsel %vm628, %v2238, 0.0
    %2275 = vadd.xlane.f32.xlu0 %v2274
    %v2276 = vpop.xlane.xlu0 %2275
    %v2277 = vsel %vm628, %v2239, 0.0
    %2278 = vadd.xlane.f32.xlu0 %v2277
    %v2279 = vpop.xlane.xlu0 %2278
    %v2280 = vsel %vm628, %v2240, 0.0
    %2281 = vadd.xlane.f32.xlu0 %v2280
    %v2282 = vpop.xlane.xlu0 %2281
    %v2283 = vsel %vm628, %v2241, 0.0
    %2284 = vadd.xlane.f32.xlu0 %v2283
    %v2285 = vpop.xlane.xlu0 %2284
    %v2286 = vsel %vm628, %v2242, 0.0
    %2287 = vadd.xlane.f32.xlu0 %v2286
    %v2288 = vpop.xlane.xlu0 %2287
    %v2289 = vsel %vm628, %v2243, 0.0
    %2290 = vadd.xlane.f32.xlu0 %v2289
    %v2291 = vpop.xlane.xlu0 %2290
    %v2292 = vsel %vm628, %v2244, 0.0
    %2293 = vadd.xlane.f32.xlu0 %v2292
    %v2294 = vpop.xlane.xlu0 %2293
    %v2295 = vsel %vm628, %v2245, 0.0
    %2296 = vadd.xlane.f32.xlu0 %v2295
    %v2297 = vpop.xlane.xlu0 %2296
    %v2298 = vsel %vm628, %v2246, 0.0
    %2299 = vadd.xlane.f32.xlu0 %v2298
    %v2300 = vpop.xlane.xlu0 %2299
    %v2301 = vsel %vm628, %v2247, 0.0
    %2302 = vadd.xlane.f32.xlu0 %v2301
    %v2303 = vpop.xlane.xlu0 %2302
    %v2304 = vsel %vm628, %v2248, 0.0
    %2305 = vadd.xlane.f32.xlu0 %v2304
    %v2306 = vpop.xlane.xlu0 %2305
    %v2307 = vsel %vm628, %v2249, 0.0
    %2308 = vadd.xlane.f32.xlu0 %v2307
    %v2309 = vpop.xlane.xlu0 %2308
    %v2310 = vsel %vm628, %v2250, 0.0
    %2311 = vadd.xlane.f32.xlu0 %v2310
    %v2312 = vpop.xlane.xlu0 %2311
    %v2313 = vsel %vm628, %v2251, 0.0
    %2314 = vadd.xlane.f32.xlu0 %v2313
    %v2315 = vpop.xlane.xlu0 %2314
    %v2316 = vsel %vm628, %v2252, 0.0
    %2317 = vadd.xlane.f32.xlu0 %v2316
    %v2318 = vpop.xlane.xlu0 %2317
    %v2319 = vsel %vm628, %v2253, 0.0
    %2320 = vadd.xlane.f32.xlu0 %v2319
    %v2321 = vpop.xlane.xlu0 %2320
    %v2322 = vsel %vm628, %v2254, 0.0
    %2323 = vadd.xlane.f32.xlu0 %v2322
    %v2324 = vpop.xlane.xlu0 %2323
    %v2325 = vsel %vm628, %v2255, 0.0
    %2326 = vadd.xlane.f32.xlu0 %v2325
    %v2327 = vpop.xlane.xlu0 %2326
    %s2329 = vtos %v2044
    %v2330 = vstv %s2329
    %v2332 = vadd.f32 %v2258, %v2330
    %v2333 = vadd.f32 %v2261, %v2330
    %v2334 = vadd.f32 %v2264, %v2330
    %v2335 = vadd.f32 %v2267, %v2330
    %v2336 = vadd.f32 %v2270, %v2330
    %v2337 = vadd.f32 %v2273, %v2330
    %v2338 = vadd.f32 %v2276, %v2330
    %v2339 = vadd.f32 %v2279, %v2330
    %v2340 = vadd.f32 %v2282, %v2330
    %v2341 = vadd.f32 %v2285, %v2330
    %v2342 = vadd.f32 %v2288, %v2330
    %v2343 = vadd.f32 %v2291, %v2330
    %v2344 = vadd.f32 %v2294, %v2330
    %v2345 = vadd.f32 %v2297, %v2330
    %v2346 = vadd.f32 %v2300, %v2330
    %v2347 = vadd.f32 %v2303, %v2330
    %v2348 = vadd.f32 %v2306, %v2330
    %v2349 = vadd.f32 %v2309, %v2330
    %v2350 = vadd.f32 %v2312, %v2330
    %v2351 = vadd.f32 %v2315, %v2330
    %v2352 = vadd.f32 %v2318, %v2330
    %v2353 = vadd.f32 %v2321, %v2330
    %v2354 = vadd.f32 %v2324, %v2330
    %v2355 = vadd.f32 %v2327, %v2330
    %v2356 = vld [vmem:[%s2] sm:$0x7]
    %v2358 = vperm.slane %v2356, 0
    %v2359 = vlaneseq
    %v2360 = vshrl.u32 %v2359, 7
    %2362 = vset.pattern.permute.xlu0 %v2360
    %2363 = vperm.xlu0 %2362, %v2358
    %v2364 = vpop.permute.xlu0 %2363
    %v2365 = vlaneseq
    %v2366 = vshrl.u32 %v2365, 7
    %v2367 = vadd.s32 %v2366, 8
    %2368 = vset.pattern.permute.xlu0 %v2367
    %2369 = vperm.xlu0 %2368, %v2358
    %v2370 = vpop.permute.xlu0 %2369
    %v2371 = vlaneseq
    %v2372 = vshrl.u32 %v2371, 7
    %v2373 = vadd.s32 %v2372, 16
    %2374 = vset.pattern.permute.xlu0 %v2373
    %2375 = vperm.xlu0 %2374, %v2358
    %v2376 = vpop.permute.xlu0 %2375
    %v2377 = vlaneseq
    %v2378 = vshrl.u32 %v2377, 7
    %v2379 = vadd.s32 %v2378, 24
    %2380 = vset.pattern.permute.xlu0 %v2379
    %2381 = vperm.xlu0 %2380, %v2358
    %v2382 = vpop.permute.xlu0 %2381
    %v2383 = vlaneseq
    %v2384 = vshrl.u32 %v2383, 7
    %v2385 = vadd.s32 %v2384, 32
    %2386 = vset.pattern.permute.xlu0 %v2385
    %2387 = vperm.xlu0 %2386, %v2358
    %v2388 = vpop.permute.xlu0 %2387
    %v2389 = vlaneseq
    %v2390 = vshrl.u32 %v2389, 7
    %v2391 = vadd.s32 %v2390, 40
    %2392 = vset.pattern.permute.xlu0 %v2391
    %2393 = vperm.xlu0 %2392, %v2358
    %v2394 = vpop.permute.xlu0 %2393
    %v2395 = vlaneseq
    %v2396 = vshrl.u32 %v2395, 7
    %v2397 = vadd.s32 %v2396, 48
    %2398 = vset.pattern.permute.xlu0 %v2397
    %2399 = vperm.xlu0 %2398, %v2358
    %v2400 = vpop.permute.xlu0 %2399
    %v2401 = vlaneseq
    %v2402 = vshrl.u32 %v2401, 7
    %v2403 = vadd.s32 %v2402, 56
    %2404 = vset.pattern.permute.xlu0 %v2403
    %2405 = vperm.xlu0 %2404, %v2358
    %v2406 = vpop.permute.xlu0 %2405
    %v2407 = vperm.slane %v2356, 1
    %v2408 = vlaneseq
    %v2409 = vshrl.u32 %v2408, 7
    %2411 = vset.pattern.permute.xlu0 %v2409
    %2412 = vperm.xlu0 %2411, %v2407
    %v2413 = vpop.permute.xlu0 %2412
    %v2414 = vlaneseq
    %v2415 = vshrl.u32 %v2414, 7
    %v2416 = vadd.s32 %v2415, 8
    %2417 = vset.pattern.permute.xlu0 %v2416
    %2418 = vperm.xlu0 %2417, %v2407
    %v2419 = vpop.permute.xlu0 %2418
    %v2420 = vlaneseq
    %v2421 = vshrl.u32 %v2420, 7
    %v2422 = vadd.s32 %v2421, 16
    %2423 = vset.pattern.permute.xlu0 %v2422
    %2424 = vperm.xlu0 %2423, %v2407
    %v2425 = vpop.permute.xlu0 %2424
    %v2426 = vlaneseq
    %v2427 = vshrl.u32 %v2426, 7
    %v2428 = vadd.s32 %v2427, 24
    %2429 = vset.pattern.permute.xlu0 %v2428
    %2430 = vperm.xlu0 %2429, %v2407
    %v2431 = vpop.permute.xlu0 %2430
    %v2432 = vlaneseq
    %v2433 = vshrl.u32 %v2432, 7
    %v2434 = vadd.s32 %v2433, 32
    %2435 = vset.pattern.permute.xlu0 %v2434
    %2436 = vperm.xlu0 %2435, %v2407
    %v2437 = vpop.permute.xlu0 %2436
    %v2438 = vlaneseq
    %v2439 = vshrl.u32 %v2438, 7
    %v2440 = vadd.s32 %v2439, 40
    %2441 = vset.pattern.permute.xlu0 %v2440
    %2442 = vperm.xlu0 %2441, %v2407
    %v2443 = vpop.permute.xlu0 %2442
    %v2444 = vlaneseq
    %v2445 = vshrl.u32 %v2444, 7
    %v2446 = vadd.s32 %v2445, 48
    %2447 = vset.pattern.permute.xlu0 %v2446
    %2448 = vperm.xlu0 %2447, %v2407
    %v2449 = vpop.permute.xlu0 %2448
    %v2450 = vlaneseq
    %v2451 = vshrl.u32 %v2450, 7
    %v2452 = vadd.s32 %v2451, 56
    %2453 = vset.pattern.permute.xlu0 %v2452
    %2454 = vperm.xlu0 %2453, %v2407
    %v2455 = vpop.permute.xlu0 %2454
    %v2456 = vperm.slane %v2356, 2
    %v2457 = vlaneseq
    %v2458 = vshrl.u32 %v2457, 7
    %2460 = vset.pattern.permute.xlu0 %v2458
    %2461 = vperm.xlu0 %2460, %v2456
    %v2462 = vpop.permute.xlu0 %2461
    %v2463 = vlaneseq
    %v2464 = vshrl.u32 %v2463, 7
    %v2465 = vadd.s32 %v2464, 8
    %2466 = vset.pattern.permute.xlu0 %v2465
    %2467 = vperm.xlu0 %2466, %v2456
    %v2468 = vpop.permute.xlu0 %2467
    %v2469 = vlaneseq
    %v2470 = vshrl.u32 %v2469, 7
    %v2471 = vadd.s32 %v2470, 16
    %2472 = vset.pattern.permute.xlu0 %v2471
    %2473 = vperm.xlu0 %2472, %v2456
    %v2474 = vpop.permute.xlu0 %2473
    %v2475 = vlaneseq
    %v2476 = vshrl.u32 %v2475, 7
    %v2477 = vadd.s32 %v2476, 24
    %2478 = vset.pattern.permute.xlu0 %v2477
    %2479 = vperm.xlu0 %2478, %v2456
    %v2480 = vpop.permute.xlu0 %2479
    %v2481 = vlaneseq
    %v2482 = vshrl.u32 %v2481, 7
    %v2483 = vadd.s32 %v2482, 32
    %2484 = vset.pattern.permute.xlu0 %v2483
    %2485 = vperm.xlu0 %2484, %v2456
    %v2486 = vpop.permute.xlu0 %2485
    %v2487 = vlaneseq
    %v2488 = vshrl.u32 %v2487, 7
    %v2489 = vadd.s32 %v2488, 40
    %2490 = vset.pattern.permute.xlu0 %v2489
    %2491 = vperm.xlu0 %2490, %v2456
    %v2492 = vpop.permute.xlu0 %2491
    %v2493 = vlaneseq
    %v2494 = vshrl.u32 %v2493, 7
    %v2495 = vadd.s32 %v2494, 48
    %2496 = vset.pattern.permute.xlu0 %v2495
    %2497 = vperm.xlu0 %2496, %v2456
    %v2498 = vpop.permute.xlu0 %2497
    %v2499 = vlaneseq
    %v2500 = vshrl.u32 %v2499, 7
    %v2501 = vadd.s32 %v2500, 56
    %2502 = vset.pattern.permute.xlu0 %v2501
    %2503 = vperm.xlu0 %2502, %v2456
    %v2504 = vpop.permute.xlu0 %2503
    %v2529 = vsub.f32 %v2332, %v2364
    %v2530 = vsub.f32 %v2333, %v2370
    %v2531 = vsub.f32 %v2334, %v2376
    %v2532 = vsub.f32 %v2335, %v2382
    %v2533 = vsub.f32 %v2336, %v2388
    %v2534 = vsub.f32 %v2337, %v2394
    %v2535 = vsub.f32 %v2338, %v2400
    %v2536 = vsub.f32 %v2339, %v2406
    %v2537 = vsub.f32 %v2340, %v2413
    %v2538 = vsub.f32 %v2341, %v2419
    %v2539 = vsub.f32 %v2342, %v2425
    %v2540 = vsub.f32 %v2343, %v2431
    %v2541 = vsub.f32 %v2344, %v2437
    %v2542 = vsub.f32 %v2345, %v2443
    %v2543 = vsub.f32 %v2346, %v2449
    %v2544 = vsub.f32 %v2347, %v2455
    %v2545 = vsub.f32 %v2348, %v2462
    %v2546 = vsub.f32 %v2349, %v2468
    %v2547 = vsub.f32 %v2350, %v2474
    %v2548 = vsub.f32 %v2351, %v2480
    %v2549 = vsub.f32 %v2352, %v2486
    %v2550 = vsub.f32 %v2353, %v2492
    %v2551 = vsub.f32 %v2354, %v2498
    %v2552 = vsub.f32 %v2355, %v2504
    %v2553 = vmul.f32 %v2529, %v2529
    %v2554 = vmul.f32 %v2530, %v2530
    %v2555 = vmul.f32 %v2531, %v2531
    %v2556 = vmul.f32 %v2532, %v2532
    %v2557 = vmul.f32 %v2533, %v2533
    %v2558 = vmul.f32 %v2534, %v2534
    %v2559 = vmul.f32 %v2535, %v2535
    %v2560 = vmul.f32 %v2536, %v2536
    %v2561 = vmul.f32 %v2537, %v2537
    %v2562 = vmul.f32 %v2538, %v2538
    %v2563 = vmul.f32 %v2539, %v2539
    %v2564 = vmul.f32 %v2540, %v2540
    %v2565 = vmul.f32 %v2541, %v2541
    %v2566 = vmul.f32 %v2542, %v2542
    %v2567 = vmul.f32 %v2543, %v2543
    %v2568 = vmul.f32 %v2544, %v2544
    %v2569 = vmul.f32 %v2545, %v2545
    %v2570 = vmul.f32 %v2546, %v2546
    %v2571 = vmul.f32 %v2547, %v2547
    %v2572 = vmul.f32 %v2548, %v2548
    %v2573 = vmul.f32 %v2549, %v2549
    %v2574 = vmul.f32 %v2550, %v2550
    %v2575 = vmul.f32 %v2551, %v2551
    %v2576 = vmul.f32 %v2552, %v2552
    %2601 = vset.pattern.permute.xlu0 0
    %2602 = vperm.xlu0 %2601, %v2553
    %v2603 = vpop.permute.xlu0 %2602
    %2604 = vset.pattern.permute.xlu0 0
    %2605 = vperm.xlu0 %2604, %v2554
    %v2606 = vpop.permute.xlu0 %2605
    %2607 = vset.pattern.permute.xlu0 0
    %2608 = vperm.xlu0 %2607, %v2555
    %v2609 = vpop.permute.xlu0 %2608
    %2610 = vset.pattern.permute.xlu0 0
    %2611 = vperm.xlu0 %2610, %v2556
    %v2612 = vpop.permute.xlu0 %2611
    %2613 = vset.pattern.permute.xlu0 0
    %2614 = vperm.xlu0 %2613, %v2557
    %v2615 = vpop.permute.xlu0 %2614
    %2616 = vset.pattern.permute.xlu0 0
    %2617 = vperm.xlu0 %2616, %v2558
    %v2618 = vpop.permute.xlu0 %2617
    %2619 = vset.pattern.permute.xlu0 0
    %2620 = vperm.xlu0 %2619, %v2559
    %v2621 = vpop.permute.xlu0 %2620
    %2622 = vset.pattern.permute.xlu0 0
    %2623 = vperm.xlu0 %2622, %v2560
    %v2624 = vpop.permute.xlu0 %2623
    %2625 = vset.pattern.permute.xlu0 0
    %2626 = vperm.xlu0 %2625, %v2561
    %v2627 = vpop.permute.xlu0 %2626
    %2628 = vset.pattern.permute.xlu0 0
    %2629 = vperm.xlu0 %2628, %v2562
    %v2630 = vpop.permute.xlu0 %2629
    %2631 = vset.pattern.permute.xlu0 0
    %2632 = vperm.xlu0 %2631, %v2563
    %v2633 = vpop.permute.xlu0 %2632
    %2634 = vset.pattern.permute.xlu0 0
    %2635 = vperm.xlu0 %2634, %v2564
    %v2636 = vpop.permute.xlu0 %2635
    %2637 = vset.pattern.permute.xlu0 0
    %2638 = vperm.xlu0 %2637, %v2565
    %v2639 = vpop.permute.xlu0 %2638
    %2640 = vset.pattern.permute.xlu0 0
    %2641 = vperm.xlu0 %2640, %v2566
    %v2642 = vpop.permute.xlu0 %2641
    %2643 = vset.pattern.permute.xlu0 0
    %2644 = vperm.xlu0 %2643, %v2567
    %v2645 = vpop.permute.xlu0 %2644
    %2646 = vset.pattern.permute.xlu0 0
    %2647 = vperm.xlu0 %2646, %v2568
    %v2648 = vpop.permute.xlu0 %2647
    %2649 = vset.pattern.permute.xlu0 0
    %2650 = vperm.xlu0 %2649, %v2569
    %v2651 = vpop.permute.xlu0 %2650
    %2652 = vset.pattern.permute.xlu0 0
    %2653 = vperm.xlu0 %2652, %v2570
    %v2654 = vpop.permute.xlu0 %2653
    %2655 = vset.pattern.permute.xlu0 0
    %2656 = vperm.xlu0 %2655, %v2571
    %v2657 = vpop.permute.xlu0 %2656
    %2658 = vset.pattern.permute.xlu0 0
    %2659 = vperm.xlu0 %2658, %v2572
    %v2660 = vpop.permute.xlu0 %2659
    %2661 = vset.pattern.permute.xlu0 0
    %2662 = vperm.xlu0 %2661, %v2573
    %v2663 = vpop.permute.xlu0 %2662
    %2664 = vset.pattern.permute.xlu0 0
    %2665 = vperm.xlu0 %2664, %v2574
    %v2666 = vpop.permute.xlu0 %2665
    %2667 = vset.pattern.permute.xlu0 0
    %2668 = vperm.xlu0 %2667, %v2575
    %v2669 = vpop.permute.xlu0 %2668
    %2670 = vset.pattern.permute.xlu0 0
    %2671 = vperm.xlu0 %2670, %v2576
    %v2672 = vpop.permute.xlu0 %2671
    %v2673 = vlaneseq
    %v2674 = vand.u32 %v2673, 127
    %v2675 = vperm.slane %v2603, %v2674
    %v2676 = vadd.s32 %v2674, 4294967288
    %v2677 = vperm.slane %v2606, %v2676
    %vm2678 = vcmask 130112
    %v2679 = vsel %vm2678, %v2677, %v2675
    %v2680 = vadd.s32 %v2674, 4294967280
    %v2681 = vperm.slane %v2609, %v2680
    %vm2682 = vcmask 195712
    %v2683 = vsel %vm2682, %v2681, %v2679
    %v2684 = vadd.s32 %v2674, 4294967272
    %v2685 = vperm.slane %v2612, %v2684
    %vm2686 = vcmask 261312
    %v2687 = vsel %vm2686, %v2685, %v2683
    %v2688 = vadd.s32 %v2674, 4294967264
    %v2689 = vperm.slane %v2615, %v2688
    %vm2690 = vcmask 326912
    %v2691 = vsel %vm2690, %v2689, %v2687
    %v2692 = vadd.s32 %v2674, 4294967256
    %v2693 = vperm.slane %v2618, %v2692
    %vm2694 = vcmask 392512
    %v2695 = vsel %vm2694, %v2693, %v2691
    %v2696 = vadd.s32 %v2674, 4294967248
    %v2697 = vperm.slane %v2621, %v2696
    %vm2698 = vcmask 458112
    %v2699 = vsel %vm2698, %v2697, %v2695
    %v2700 = vadd.s32 %v2674, 4294967240
    %v2701 = vperm.slane %v2624, %v2700
    %vm2702 = vcmask 523712
    %v2703 = vsel %vm2702, %v2701, %v2699
    %v2704 = vperm.slane %v2627, %v2674
    %v2705 = vperm.slane %v2630, %v2676
    %v2706 = vsel %vm2678, %v2705, %v2704
    %v2707 = vperm.slane %v2633, %v2680
    %v2708 = vsel %vm2682, %v2707, %v2706
    %v2709 = vperm.slane %v2636, %v2684
    %v2710 = vsel %vm2686, %v2709, %v2708
    %v2711 = vperm.slane %v2639, %v2688
    %v2712 = vsel %vm2690, %v2711, %v2710
    %v2713 = vperm.slane %v2642, %v2692
    %v2714 = vsel %vm2694, %v2713, %v2712
    %v2715 = vperm.slane %v2645, %v2696
    %v2716 = vsel %vm2698, %v2715, %v2714
    %v2717 = vperm.slane %v2648, %v2700
    %v2718 = vsel %vm2702, %v2717, %v2716
    %v2719 = vperm.slane %v2651, %v2674
    %v2720 = vperm.slane %v2654, %v2676
    %v2721 = vsel %vm2678, %v2720, %v2719
    %v2722 = vperm.slane %v2657, %v2680
    %v2723 = vsel %vm2682, %v2722, %v2721
    %v2724 = vperm.slane %v2660, %v2684
    %v2725 = vsel %vm2686, %v2724, %v2723
    %v2726 = vperm.slane %v2663, %v2688
    %v2727 = vsel %vm2690, %v2726, %v2725
    %v2728 = vperm.slane %v2666, %v2692
    %v2729 = vsel %vm2694, %v2728, %v2727
    %v2730 = vperm.slane %v2669, %v2696
    %v2731 = vsel %vm2698, %v2730, %v2729
    %v2732 = vperm.slane %v2672, %v2700
    %v2733 = vsel %vm2702, %v2732, %v2731
    %vm2734 = vcmask 1041409
    %v2735 = vsel %vm2734, %v2718, %v2703
    %vm2736 = vcmask 1042434
    %v2737 = vsel %vm2736, %v2733, %v2735
    %vm2739 = vcmask 518144
    %v2740 = vsel %vm2739, %v2737, 0.0
    %2741 = vadd.xlane.f32.xlu0 %v2740
    %v2742 = vpop.xlane.xlu0 %2741
    %vm2743 = vcmask 1042432
    %v2744 = vsel %vm2743, %v2742, 0.0
    %v2745 = vrot.slane %v2744, 4
    %v2746 = vadd.f32 %v2744, %v2745
    %v2747 = vrot.slane %v2746, 2
    %v2748 = vadd.f32 %v2746, %v2747
    %v2749 = vrot.slane %v2748, 1
    %v2750 = vadd.f32 %v2748, %v2749
    %v2751 = vrcp.pop 192.0
    %v2752 = vmul.f32 192.0, %v2751
    %v2753 = vsub.f32 1.0, %v2752
    %v2754 = vmul.f32 %v2751, %v2753
    %v2755 = vadd.f32 %v2751, %v2754
    %vm2756 = vweird.f32 %v2751
    %v2757 = vsel %vm2756, %v2751, %v2755
    %v2758 = vmul.f32 %v2750, %v2757
    %vm2759 = vcmask 0
    %2760 = vst.msk [vmem:[#allocation4] sm:$0x1] %vm2759, %v2758
    %v2762 = vsel %vm628, %v1998, 0
    %v2765 = vsel %vm628, %v1999, 0
    %v2768 = vsel %vm628, %v2000, 0
    %v2771 = vsel %vm628, %v2001, 0
    %v2774 = vsel %vm628, %v2002, 0
    %v2777 = vsel %vm628, %v2003, 0
    %v2780 = vsel %vm628, %v2004, 0
    %v2783 = vsel %vm628, %v2005, 0
    %2785 = vmatpush.msra.mxu0 0.0
    %2786 = vmatpush.msra.mxu0 0.0
    %2787 = vmatpush.msra.mxu0 0.0
    %2788 = vmatpush.msra.mxu0 0.0
    %2789 = vmatpush.msra.mxu0 0.0
    %2790 = vmatpush.msra.mxu0 0.0
    %2791 = vmatpush.msra.mxu0 0.0
    %2792 = vmatpush.msra.mxu0 0.0
    %2793 = vmatpush.msra.mxu0 0.0
    %2794 = vmatpush.msra.mxu0 0.0
    %2795 = vmatpush.msra.mxu0 0.0
    %2796 = vmatpush.msra.mxu0 0.0
    %2797 = vmatpush.msra.mxu0 %v2038
    %2798 = vmatpush.msra.mxu0 %v2037
    %2799 = vmatpush.msra.mxu0 %v2036
    %2800 = vmatpush.msra.mxu0 %v2035
    %2801 = vmatmul.f32.gmra.mxu0 %v2762
    %v2802 = vpop.f32.mrf.mxu0
    %v2803 = vadd.f32 0.0, %v2802
    %2804 = vmatmul.f32.gmra.mxu0 %v2765
    %v2805 = vpop.f32.mrf.mxu0
    %v2806 = vadd.f32 0.0, %v2805
    %2807 = vmatmul.f32.gmra.mxu0 %v2768
    %v2808 = vpop.f32.mrf.mxu0
    %v2809 = vadd.f32 0.0, %v2808
    %2810 = vmatmul.f32.gmra.mxu0 %v2771
    %v2811 = vpop.f32.mrf.mxu0
    %v2812 = vadd.f32 0.0, %v2811
    %2813 = vmatmul.f32.gmra.mxu0 %v2774
    %v2814 = vpop.f32.mrf.mxu0
    %v2815 = vadd.f32 0.0, %v2814
    %2816 = vmatmul.f32.gmra.mxu0 %v2777
    %v2817 = vpop.f32.mrf.mxu0
    %v2818 = vadd.f32 0.0, %v2817
    %2819 = vmatmul.f32.gmra.mxu0 %v2780
    %v2820 = vpop.f32.mrf.mxu0
    %v2821 = vadd.f32 0.0, %v2820
    %2822 = vmatmul.f32.gmra.mxu0 %v2783
    %v2823 = vpop.f32.mrf.mxu0
    %v2824 = vadd.f32 0.0, %v2823
    %2825 = vdwg.mxu0
    %v2827 = vsel %vm628, %v2160, 0
    %v2830 = vsel %vm628, %v2163, 0
    %v2833 = vsel %vm628, %v2166, 0
    %v2836 = vsel %vm628, %v2169, 0
    %v2839 = vsel %vm628, %v2172, 0
    %v2842 = vsel %vm628, %v2175, 0
    %v2845 = vsel %vm628, %v2178, 0
    %v2848 = vsel %vm628, %v2181, 0
    %v2851 = vsel %vm628, %v2184, 0
    %v2854 = vsel %vm628, %v2187, 0
    %v2857 = vsel %vm628, %v2190, 0
    %v2860 = vsel %vm628, %v2193, 0
    %v2863 = vsel %vm628, %v2196, 0
    %v2866 = vsel %vm628, %v2199, 0
    %v2869 = vsel %vm628, %v2202, 0
    %v2872 = vsel %vm628, %v2205, 0
    %v2875 = vsel %vm628, %v2208, 0
    %v2878 = vsel %vm628, %v2211, 0
    %v2881 = vsel %vm628, %v2214, 0
    %v2884 = vsel %vm628, %v2217, 0
    %v2887 = vsel %vm628, %v2220, 0
    %v2890 = vsel %vm628, %v2223, 0
    %v2893 = vsel %vm628, %v2226, 0
    %v2896 = vsel %vm628, %v2229, 0
    %2898 = vmatpush.msra.mxu0 0.0
    %2899 = vmatpush.msra.mxu0 0.0
    %2900 = vmatpush.msra.mxu0 0.0
    %2901 = vmatpush.msra.mxu0 0.0
    %2902 = vmatpush.msra.mxu0 0.0
    %2903 = vmatpush.msra.mxu0 0.0
    %2904 = vmatpush.msra.mxu0 0.0
    %2905 = vmatpush.msra.mxu0 0.0
    %2906 = vmatpush.msra.mxu0 0.0
    %2907 = vmatpush.msra.mxu0 0.0
    %2908 = vmatpush.msra.mxu0 0.0
    %2909 = vmatpush.msra.mxu0 0.0
    %2910 = vmatpush.msra.mxu0 %v2042
    %2911 = vmatpush.msra.mxu0 %v2041
    %2912 = vmatpush.msra.mxu0 %v2040
    %2913 = vmatpush.msra.mxu0 %v2039
    %2914 = vmatmul.f32.gmra.mxu0 %v2827
    %v2915 = vpop.f32.mrf.mxu0
    %v2916 = vadd.f32 0.0, %v2915
    %2917 = vmatmul.f32.gmra.mxu0 %v2830
    %v2918 = vpop.f32.mrf.mxu0
    %v2919 = vadd.f32 0.0, %v2918
    %2920 = vmatmul.f32.gmra.mxu0 %v2833
    %v2921 = vpop.f32.mrf.mxu0
    %v2922 = vadd.f32 0.0, %v2921
    %2923 = vmatmul.f32.gmra.mxu0 %v2836
    %v2924 = vpop.f32.mrf.mxu0
    %v2925 = vadd.f32 0.0, %v2924
    %2926 = vmatmul.f32.gmra.mxu0 %v2839
    %v2927 = vpop.f32.mrf.mxu0
    %v2928 = vadd.f32 0.0, %v2927
    %2929 = vmatmul.f32.gmra.mxu0 %v2842
    %v2930 = vpop.f32.mrf.mxu0
    %v2931 = vadd.f32 0.0, %v2930
    %2932 = vmatmul.f32.gmra.mxu0 %v2845
    %v2933 = vpop.f32.mrf.mxu0
    %v2934 = vadd.f32 0.0, %v2933
    %2935 = vmatmul.f32.gmra.mxu0 %v2848
    %v2936 = vpop.f32.mrf.mxu0
    %v2937 = vadd.f32 0.0, %v2936
    %2938 = vmatmul.f32.gmra.mxu0 %v2851
    %v2939 = vpop.f32.mrf.mxu0
    %v2940 = vadd.f32 0.0, %v2939
    %2941 = vmatmul.f32.gmra.mxu0 %v2854
    %v2942 = vpop.f32.mrf.mxu0
    %v2943 = vadd.f32 0.0, %v2942
    %2944 = vmatmul.f32.gmra.mxu0 %v2857
    %v2945 = vpop.f32.mrf.mxu0
    %v2946 = vadd.f32 0.0, %v2945
    %2947 = vmatmul.f32.gmra.mxu0 %v2860
    %v2948 = vpop.f32.mrf.mxu0
    %v2949 = vadd.f32 0.0, %v2948
    %2950 = vmatmul.f32.gmra.mxu0 %v2863
    %v2951 = vpop.f32.mrf.mxu0
    %v2952 = vadd.f32 0.0, %v2951
    %2953 = vmatmul.f32.gmra.mxu0 %v2866
    %v2954 = vpop.f32.mrf.mxu0
    %v2955 = vadd.f32 0.0, %v2954
    %2956 = vmatmul.f32.gmra.mxu0 %v2869
    %v2957 = vpop.f32.mrf.mxu0
    %v2958 = vadd.f32 0.0, %v2957
    %2959 = vmatmul.f32.gmra.mxu0 %v2872
    %v2960 = vpop.f32.mrf.mxu0
    %v2961 = vadd.f32 0.0, %v2960
    %2962 = vmatmul.f32.gmra.mxu0 %v2875
    %v2963 = vpop.f32.mrf.mxu0
    %v2964 = vadd.f32 0.0, %v2963
    %2965 = vmatmul.f32.gmra.mxu0 %v2878
    %v2966 = vpop.f32.mrf.mxu0
    %v2967 = vadd.f32 0.0, %v2966
    %2968 = vmatmul.f32.gmra.mxu0 %v2881
    %v2969 = vpop.f32.mrf.mxu0
    %v2970 = vadd.f32 0.0, %v2969
    %2971 = vmatmul.f32.gmra.mxu0 %v2884
    %v2972 = vpop.f32.mrf.mxu0
    %v2973 = vadd.f32 0.0, %v2972
    %2974 = vmatmul.f32.gmra.mxu0 %v2887
    %v2975 = vpop.f32.mrf.mxu0
    %v2976 = vadd.f32 0.0, %v2975
    %2977 = vmatmul.f32.gmra.mxu0 %v2890
    %v2978 = vpop.f32.mrf.mxu0
    %v2979 = vadd.f32 0.0, %v2978
    %2980 = vmatmul.f32.gmra.mxu0 %v2893
    %v2981 = vpop.f32.mrf.mxu0
    %v2982 = vadd.f32 0.0, %v2981
    %2983 = vmatmul.f32.gmra.mxu0 %v2896
    %v2984 = vpop.f32.mrf.mxu0
    %v2985 = vadd.f32 0.0, %v2984
    %2986 = vdwg.mxu0
    %v2987 = vmul.f32 %v2803, %v2916
    %v2988 = vmul.f32 %v2806, %v2919
    %v2989 = vmul.f32 %v2809, %v2922
    %v2990 = vmul.f32 %v2812, %v2925
    %v2991 = vmul.f32 %v2815, %v2928
    %v2992 = vmul.f32 %v2818, %v2931
    %v2993 = vmul.f32 %v2821, %v2934
    %v2994 = vmul.f32 %v2824, %v2937
    %v2995 = vmul.f32 %v2803, %v2940
    %v2996 = vmul.f32 %v2806, %v2943
    %v2997 = vmul.f32 %v2809, %v2946
    %v2998 = vmul.f32 %v2812, %v2949
    %v2999 = vmul.f32 %v2815, %v2952
    %v3000 = vmul.f32 %v2818, %v2955
    %v3001 = vmul.f32 %v2821, %v2958
    %v3002 = vmul.f32 %v2824, %v2961
    %v3003 = vmul.f32 %v2803, %v2964
    %v3004 = vmul.f32 %v2806, %v2967
    %v3005 = vmul.f32 %v2809, %v2970
    %v3006 = vmul.f32 %v2812, %v2973
    %v3007 = vmul.f32 %v2815, %v2976
    %v3008 = vmul.f32 %v2818, %v2979
    %v3009 = vmul.f32 %v2821, %v2982
    %v3010 = vmul.f32 %v2824, %v2985
    %v3011 = vsel %vm628, %v2987, 0.0
    %3012 = vadd.xlane.f32.xlu0 %v3011
    %v3013 = vpop.xlane.xlu0 %3012
    %v3014 = vsel %vm628, %v2988, 0.0
    %3015 = vadd.xlane.f32.xlu0 %v3014
    %v3016 = vpop.xlane.xlu0 %3015
    %v3017 = vsel %vm628, %v2989, 0.0
    %3018 = vadd.xlane.f32.xlu0 %v3017
    %v3019 = vpop.xlane.xlu0 %3018
    %v3020 = vsel %vm628, %v2990, 0.0
    %3021 = vadd.xlane.f32.xlu0 %v3020
    %v3022 = vpop.xlane.xlu0 %3021
    %v3023 = vsel %vm628, %v2991, 0.0
    %3024 = vadd.xlane.f32.xlu0 %v3023
    %v3025 = vpop.xlane.xlu0 %3024
    %v3026 = vsel %vm628, %v2992, 0.0
    %3027 = vadd.xlane.f32.xlu0 %v3026
    %v3028 = vpop.xlane.xlu0 %3027
    %v3029 = vsel %vm628, %v2993, 0.0
    %3030 = vadd.xlane.f32.xlu0 %v3029
    %v3031 = vpop.xlane.xlu0 %3030
    %v3032 = vsel %vm628, %v2994, 0.0
    %3033 = vadd.xlane.f32.xlu0 %v3032
    %v3034 = vpop.xlane.xlu0 %3033
    %v3035 = vsel %vm628, %v2995, 0.0
    %3036 = vadd.xlane.f32.xlu0 %v3035
    %v3037 = vpop.xlane.xlu0 %3036
    %v3038 = vsel %vm628, %v2996, 0.0
    %3039 = vadd.xlane.f32.xlu0 %v3038
    %v3040 = vpop.xlane.xlu0 %3039
    %v3041 = vsel %vm628, %v2997, 0.0
    %3042 = vadd.xlane.f32.xlu0 %v3041
    %v3043 = vpop.xlane.xlu0 %3042
    %v3044 = vsel %vm628, %v2998, 0.0
    %3045 = vadd.xlane.f32.xlu0 %v3044
    %v3046 = vpop.xlane.xlu0 %3045
    %v3047 = vsel %vm628, %v2999, 0.0
    %3048 = vadd.xlane.f32.xlu0 %v3047
    %v3049 = vpop.xlane.xlu0 %3048
    %v3050 = vsel %vm628, %v3000, 0.0
    %3051 = vadd.xlane.f32.xlu0 %v3050
    %v3052 = vpop.xlane.xlu0 %3051
    %v3053 = vsel %vm628, %v3001, 0.0
    %3054 = vadd.xlane.f32.xlu0 %v3053
    %v3055 = vpop.xlane.xlu0 %3054
    %v3056 = vsel %vm628, %v3002, 0.0
    %3057 = vadd.xlane.f32.xlu0 %v3056
    %v3058 = vpop.xlane.xlu0 %3057
    %v3059 = vsel %vm628, %v3003, 0.0
    %3060 = vadd.xlane.f32.xlu0 %v3059
    %v3061 = vpop.xlane.xlu0 %3060
    %v3062 = vsel %vm628, %v3004, 0.0
    %3063 = vadd.xlane.f32.xlu0 %v3062
    %v3064 = vpop.xlane.xlu0 %3063
    %v3065 = vsel %vm628, %v3005, 0.0
    %3066 = vadd.xlane.f32.xlu0 %v3065
    %v3067 = vpop.xlane.xlu0 %3066
    %v3068 = vsel %vm628, %v3006, 0.0
    %3069 = vadd.xlane.f32.xlu0 %v3068
    %v3070 = vpop.xlane.xlu0 %3069
    %v3071 = vsel %vm628, %v3007, 0.0
    %3072 = vadd.xlane.f32.xlu0 %v3071
    %v3073 = vpop.xlane.xlu0 %3072
    %v3074 = vsel %vm628, %v3008, 0.0
    %3075 = vadd.xlane.f32.xlu0 %v3074
    %v3076 = vpop.xlane.xlu0 %3075
    %v3077 = vsel %vm628, %v3009, 0.0
    %3078 = vadd.xlane.f32.xlu0 %v3077
    %v3079 = vpop.xlane.xlu0 %3078
    %v3080 = vsel %vm628, %v3010, 0.0
    %3081 = vadd.xlane.f32.xlu0 %v3080
    %v3082 = vpop.xlane.xlu0 %3081
    %v3083 = vxor.u32 %v3013, 2147483648
    %v3084 = vxor.u32 %v3016, 2147483648
    %v3085 = vxor.u32 %v3019, 2147483648
    %v3086 = vxor.u32 %v3022, 2147483648
    %v3087 = vxor.u32 %v3025, 2147483648
    %v3088 = vxor.u32 %v3028, 2147483648
    %v3089 = vxor.u32 %v3031, 2147483648
    %v3090 = vxor.u32 %v3034, 2147483648
    %v3091 = vxor.u32 %v3037, 2147483648
    %v3092 = vxor.u32 %v3040, 2147483648
    %v3093 = vxor.u32 %v3043, 2147483648
    %v3094 = vxor.u32 %v3046, 2147483648
    %v3095 = vxor.u32 %v3049, 2147483648
    %v3096 = vxor.u32 %v3052, 2147483648
    %v3097 = vxor.u32 %v3055, 2147483648
    %v3098 = vxor.u32 %v3058, 2147483648
    %v3099 = vxor.u32 %v3061, 2147483648
    %v3100 = vxor.u32 %v3064, 2147483648
    %v3101 = vxor.u32 %v3067, 2147483648
    %v3102 = vxor.u32 %v3070, 2147483648
    %v3103 = vxor.u32 %v3073, 2147483648
    %v3104 = vxor.u32 %v3076, 2147483648
    %v3105 = vxor.u32 %v3079, 2147483648
    %v3106 = vxor.u32 %v3082, 2147483648
    %v3107 = vmul.f32 %v3083, 1.442695
    %v3108 = vpow.pop %v3107
    %v3109 = vmul.f32 %v3084, 1.442695
    %v3110 = vpow.pop %v3109
    %v3111 = vmul.f32 %v3085, 1.442695
    %v3112 = vpow.pop %v3111
    %v3113 = vmul.f32 %v3086, 1.442695
    %v3114 = vpow.pop %v3113
    %v3115 = vmul.f32 %v3087, 1.442695
    %v3116 = vpow.pop %v3115
    %v3117 = vmul.f32 %v3088, 1.442695
    %v3118 = vpow.pop %v3117
    %v3119 = vmul.f32 %v3089, 1.442695
    %v3120 = vpow.pop %v3119
    %v3121 = vmul.f32 %v3090, 1.442695
    %v3122 = vpow.pop %v3121
    %v3123 = vmul.f32 %v3091, 1.442695
    %v3124 = vpow.pop %v3123
    %v3125 = vmul.f32 %v3092, 1.442695
    %v3126 = vpow.pop %v3125
    %v3127 = vmul.f32 %v3093, 1.442695
    %v3128 = vpow.pop %v3127
    %v3129 = vmul.f32 %v3094, 1.442695
    %v3130 = vpow.pop %v3129
    %v3131 = vmul.f32 %v3095, 1.442695
    %v3132 = vpow.pop %v3131
    %v3133 = vmul.f32 %v3096, 1.442695
    %v3134 = vpow.pop %v3133
    %v3135 = vmul.f32 %v3097, 1.442695
    %v3136 = vpow.pop %v3135
    %v3137 = vmul.f32 %v3098, 1.442695
    %v3138 = vpow.pop %v3137
    %v3139 = vmul.f32 %v3099, 1.442695
    %v3140 = vpow.pop %v3139
    %v3141 = vmul.f32 %v3100, 1.442695
    %v3142 = vpow.pop %v3141
    %v3143 = vmul.f32 %v3101, 1.442695
    %v3144 = vpow.pop %v3143
    %v3145 = vmul.f32 %v3102, 1.442695
    %v3146 = vpow.pop %v3145
    %v3147 = vmul.f32 %v3103, 1.442695
    %v3148 = vpow.pop %v3147
    %v3149 = vmul.f32 %v3104, 1.442695
    %v3150 = vpow.pop %v3149
    %v3151 = vmul.f32 %v3105, 1.442695
    %v3152 = vpow.pop %v3151
    %v3153 = vmul.f32 %v3106, 1.442695
    %v3154 = vpow.pop %v3153
    %v3155 = vadd.f32 %v3108, 1.0
    %v3156 = vadd.f32 %v3110, 1.0
    %v3157 = vadd.f32 %v3112, 1.0
    %v3158 = vadd.f32 %v3114, 1.0
    %v3159 = vadd.f32 %v3116, 1.0
    %v3160 = vadd.f32 %v3118, 1.0
    %v3161 = vadd.f32 %v3120, 1.0
    %v3162 = vadd.f32 %v3122, 1.0
    %v3163 = vadd.f32 %v3124, 1.0
    %v3164 = vadd.f32 %v3126, 1.0
    %v3165 = vadd.f32 %v3128, 1.0
    %v3166 = vadd.f32 %v3130, 1.0
    %v3167 = vadd.f32 %v3132, 1.0
    %v3168 = vadd.f32 %v3134, 1.0
    %v3169 = vadd.f32 %v3136, 1.0
    %v3170 = vadd.f32 %v3138, 1.0
    %v3171 = vadd.f32 %v3140, 1.0
    %v3172 = vadd.f32 %v3142, 1.0
    %v3173 = vadd.f32 %v3144, 1.0
    %v3174 = vadd.f32 %v3146, 1.0
    %v3175 = vadd.f32 %v3148, 1.0
    %v3176 = vadd.f32 %v3150, 1.0
    %v3177 = vadd.f32 %v3152, 1.0
    %v3178 = vadd.f32 %v3154, 1.0
    %v3179 = vrcp.pop %v3155
    %v3180 = vmul.f32 %v3155, %v3179
    %v3181 = vsub.f32 1.0, %v3180
    %v3182 = vmul.f32 %v3179, %v3181
    %v3183 = vadd.f32 %v3179, %v3182
    %vm3184 = vweird.f32 %v3155
    %vm3185 = vweird.f32 %v3179
    %vm3186 = vmor %vm3184, %vm3185
    %v3187 = vsel %vm3186, %v3179, %v3183
    %v3188 = vand.u32 2147483647, %v3155
    %vm3189 = vcmp.eq.f32.partialorder %v3188, 8.507059e+37
    %v3190 = vand.u32 %v3155, 2147483648
    %v3191 = vor.u32 1.1754944e-38, %v3190
    %v3192 = vsel %vm3189, %v3191, %v3187
    %v3193 = vmul.f32 1.0, %v3192
    %v3194 = vrcp.pop %v3156
    %v3195 = vmul.f32 %v3156, %v3194
    %v3196 = vsub.f32 1.0, %v3195
    %v3197 = vmul.f32 %v3194, %v3196
    %v3198 = vadd.f32 %v3194, %v3197
    %vm3199 = vweird.f32 %v3156
    %vm3200 = vweird.f32 %v3194
    %vm3201 = vmor %vm3199, %vm3200
    %v3202 = vsel %vm3201, %v3194, %v3198
    %v3203 = vand.u32 2147483647, %v3156
    %vm3204 = vcmp.eq.f32.partialorder %v3203, 8.507059e+37
    %v3205 = vand.u32 %v3156, 2147483648
    %v3206 = vor.u32 1.1754944e-38, %v3205
    %v3207 = vsel %vm3204, %v3206, %v3202
    %v3208 = vmul.f32 1.0, %v3207
    %v3209 = vrcp.pop %v3157
    %v3210 = vmul.f32 %v3157, %v3209
    %v3211 = vsub.f32 1.0, %v3210
    %v3212 = vmul.f32 %v3209, %v3211
    %v3213 = vadd.f32 %v3209, %v3212
    %vm3214 = vweird.f32 %v3157
    %vm3215 = vweird.f32 %v3209
    %vm3216 = vmor %vm3214, %vm3215
    %v3217 = vsel %vm3216, %v3209, %v3213
    %v3218 = vand.u32 2147483647, %v3157
    %vm3219 = vcmp.eq.f32.partialorder %v3218, 8.507059e+37
    %v3220 = vand.u32 %v3157, 2147483648
    %v3221 = vor.u32 1.1754944e-38, %v3220
    %v3222 = vsel %vm3219, %v3221, %v3217
    %v3223 = vmul.f32 1.0, %v3222
    %v3224 = vrcp.pop %v3158
    %v3225 = vmul.f32 %v3158, %v3224
    %v3226 = vsub.f32 1.0, %v3225
    %v3227 = vmul.f32 %v3224, %v3226
    %v3228 = vadd.f32 %v3224, %v3227
    %vm3229 = vweird.f32 %v3158
    %vm3230 = vweird.f32 %v3224
    %vm3231 = vmor %vm3229, %vm3230
    %v3232 = vsel %vm3231, %v3224, %v3228
    %v3233 = vand.u32 2147483647, %v3158
    %vm3234 = vcmp.eq.f32.partialorder %v3233, 8.507059e+37
    %v3235 = vand.u32 %v3158, 2147483648
    %v3236 = vor.u32 1.1754944e-38, %v3235
    %v3237 = vsel %vm3234, %v3236, %v3232
    %v3238 = vmul.f32 1.0, %v3237
    %v3239 = vrcp.pop %v3159
    %v3240 = vmul.f32 %v3159, %v3239
    %v3241 = vsub.f32 1.0, %v3240
    %v3242 = vmul.f32 %v3239, %v3241
    %v3243 = vadd.f32 %v3239, %v3242
    %vm3244 = vweird.f32 %v3159
    %vm3245 = vweird.f32 %v3239
    %vm3246 = vmor %vm3244, %vm3245
    %v3247 = vsel %vm3246, %v3239, %v3243
    %v3248 = vand.u32 2147483647, %v3159
    %vm3249 = vcmp.eq.f32.partialorder %v3248, 8.507059e+37
    %v3250 = vand.u32 %v3159, 2147483648
    %v3251 = vor.u32 1.1754944e-38, %v3250
    %v3252 = vsel %vm3249, %v3251, %v3247
    %v3253 = vmul.f32 1.0, %v3252
    %v3254 = vrcp.pop %v3160
    %v3255 = vmul.f32 %v3160, %v3254
    %v3256 = vsub.f32 1.0, %v3255
    %v3257 = vmul.f32 %v3254, %v3256
    %v3258 = vadd.f32 %v3254, %v3257
    %vm3259 = vweird.f32 %v3160
    %vm3260 = vweird.f32 %v3254
    %vm3261 = vmor %vm3259, %vm3260
    %v3262 = vsel %vm3261, %v3254, %v3258
    %v3263 = vand.u32 2147483647, %v3160
    %vm3264 = vcmp.eq.f32.partialorder %v3263, 8.507059e+37
    %v3265 = vand.u32 %v3160, 2147483648
    %v3266 = vor.u32 1.1754944e-38, %v3265
    %v3267 = vsel %vm3264, %v3266, %v3262
    %v3268 = vmul.f32 1.0, %v3267
    %v3269 = vrcp.pop %v3161
    %v3270 = vmul.f32 %v3161, %v3269
    %v3271 = vsub.f32 1.0, %v3270
    %v3272 = vmul.f32 %v3269, %v3271
    %v3273 = vadd.f32 %v3269, %v3272
    %vm3274 = vweird.f32 %v3161
    %vm3275 = vweird.f32 %v3269
    %vm3276 = vmor %vm3274, %vm3275
    %v3277 = vsel %vm3276, %v3269, %v3273
    %v3278 = vand.u32 2147483647, %v3161
    %vm3279 = vcmp.eq.f32.partialorder %v3278, 8.507059e+37
    %v3280 = vand.u32 %v3161, 2147483648
    %v3281 = vor.u32 1.1754944e-38, %v3280
    %v3282 = vsel %vm3279, %v3281, %v3277
    %v3283 = vmul.f32 1.0, %v3282
    %v3284 = vrcp.pop %v3162
    %v3285 = vmul.f32 %v3162, %v3284
    %v3286 = vsub.f32 1.0, %v3285
    %v3287 = vmul.f32 %v3284, %v3286
    %v3288 = vadd.f32 %v3284, %v3287
    %vm3289 = vweird.f32 %v3162
    %vm3290 = vweird.f32 %v3284
    %vm3291 = vmor %vm3289, %vm3290
    %v3292 = vsel %vm3291, %v3284, %v3288
    %v3293 = vand.u32 2147483647, %v3162
    %vm3294 = vcmp.eq.f32.partialorder %v3293, 8.507059e+37
    %v3295 = vand.u32 %v3162, 2147483648
    %v3296 = vor.u32 1.1754944e-38, %v3295
    %v3297 = vsel %vm3294, %v3296, %v3292
    %v3298 = vmul.f32 1.0, %v3297
    %v3299 = vrcp.pop %v3163
    %v3300 = vmul.f32 %v3163, %v3299
    %v3301 = vsub.f32 1.0, %v3300
    %v3302 = vmul.f32 %v3299, %v3301
    %v3303 = vadd.f32 %v3299, %v3302
    %vm3304 = vweird.f32 %v3163
    %vm3305 = vweird.f32 %v3299
    %vm3306 = vmor %vm3304, %vm3305
    %v3307 = vsel %vm3306, %v3299, %v3303
    %v3308 = vand.u32 2147483647, %v3163
    %vm3309 = vcmp.eq.f32.partialorder %v3308, 8.507059e+37
    %v3310 = vand.u32 %v3163, 2147483648
    %v3311 = vor.u32 1.1754944e-38, %v3310
    %v3312 = vsel %vm3309, %v3311, %v3307
    %v3313 = vmul.f32 1.0, %v3312
    %v3314 = vrcp.pop %v3164
    %v3315 = vmul.f32 %v3164, %v3314
    %v3316 = vsub.f32 1.0, %v3315
    %v3317 = vmul.f32 %v3314, %v3316
    %v3318 = vadd.f32 %v3314, %v3317
    %vm3319 = vweird.f32 %v3164
    %vm3320 = vweird.f32 %v3314
    %vm3321 = vmor %vm3319, %vm3320
    %v3322 = vsel %vm3321, %v3314, %v3318
    %v3323 = vand.u32 2147483647, %v3164
    %vm3324 = vcmp.eq.f32.partialorder %v3323, 8.507059e+37
    %v3325 = vand.u32 %v3164, 2147483648
    %v3326 = vor.u32 1.1754944e-38, %v3325
    %v3327 = vsel %vm3324, %v3326, %v3322
    %v3328 = vmul.f32 1.0, %v3327
    %v3329 = vrcp.pop %v3165
    %v3330 = vmul.f32 %v3165, %v3329
    %v3331 = vsub.f32 1.0, %v3330
    %v3332 = vmul.f32 %v3329, %v3331
    %v3333 = vadd.f32 %v3329, %v3332
    %vm3334 = vweird.f32 %v3165
    %vm3335 = vweird.f32 %v3329
    %vm3336 = vmor %vm3334, %vm3335
    %v3337 = vsel %vm3336, %v3329, %v3333
    %v3338 = vand.u32 2147483647, %v3165
    %vm3339 = vcmp.eq.f32.partialorder %v3338, 8.507059e+37
    %v3340 = vand.u32 %v3165, 2147483648
    %v3341 = vor.u32 1.1754944e-38, %v3340
    %v3342 = vsel %vm3339, %v3341, %v3337
    %v3343 = vmul.f32 1.0, %v3342
    %v3344 = vrcp.pop %v3166
    %v3345 = vmul.f32 %v3166, %v3344
    %v3346 = vsub.f32 1.0, %v3345
    %v3347 = vmul.f32 %v3344, %v3346
    %v3348 = vadd.f32 %v3344, %v3347
    %vm3349 = vweird.f32 %v3166
    %vm3350 = vweird.f32 %v3344
    %vm3351 = vmor %vm3349, %vm3350
    %v3352 = vsel %vm3351, %v3344, %v3348
    %v3353 = vand.u32 2147483647, %v3166
    %vm3354 = vcmp.eq.f32.partialorder %v3353, 8.507059e+37
    %v3355 = vand.u32 %v3166, 2147483648
    %v3356 = vor.u32 1.1754944e-38, %v3355
    %v3357 = vsel %vm3354, %v3356, %v3352
    %v3358 = vmul.f32 1.0, %v3357
    %v3359 = vrcp.pop %v3167
    %v3360 = vmul.f32 %v3167, %v3359
    %v3361 = vsub.f32 1.0, %v3360
    %v3362 = vmul.f32 %v3359, %v3361
    %v3363 = vadd.f32 %v3359, %v3362
    %vm3364 = vweird.f32 %v3167
    %vm3365 = vweird.f32 %v3359
    %vm3366 = vmor %vm3364, %vm3365
    %v3367 = vsel %vm3366, %v3359, %v3363
    %v3368 = vand.u32 2147483647, %v3167
    %vm3369 = vcmp.eq.f32.partialorder %v3368, 8.507059e+37
    %v3370 = vand.u32 %v3167, 2147483648
    %v3371 = vor.u32 1.1754944e-38, %v3370
    %v3372 = vsel %vm3369, %v3371, %v3367
    %v3373 = vmul.f32 1.0, %v3372
    %v3374 = vrcp.pop %v3168
    %v3375 = vmul.f32 %v3168, %v3374
    %v3376 = vsub.f32 1.0, %v3375
    %v3377 = vmul.f32 %v3374, %v3376
    %v3378 = vadd.f32 %v3374, %v3377
    %vm3379 = vweird.f32 %v3168
    %vm3380 = vweird.f32 %v3374
    %vm3381 = vmor %vm3379, %vm3380
    %v3382 = vsel %vm3381, %v3374, %v3378
    %v3383 = vand.u32 2147483647, %v3168
    %vm3384 = vcmp.eq.f32.partialorder %v3383, 8.507059e+37
    %v3385 = vand.u32 %v3168, 2147483648
    %v3386 = vor.u32 1.1754944e-38, %v3385
    %v3387 = vsel %vm3384, %v3386, %v3382
    %v3388 = vmul.f32 1.0, %v3387
    %v3389 = vrcp.pop %v3169
    %v3390 = vmul.f32 %v3169, %v3389
    %v3391 = vsub.f32 1.0, %v3390
    %v3392 = vmul.f32 %v3389, %v3391
    %v3393 = vadd.f32 %v3389, %v3392
    %vm3394 = vweird.f32 %v3169
    %vm3395 = vweird.f32 %v3389
    %vm3396 = vmor %vm3394, %vm3395
    %v3397 = vsel %vm3396, %v3389, %v3393
    %v3398 = vand.u32 2147483647, %v3169
    %vm3399 = vcmp.eq.f32.partialorder %v3398, 8.507059e+37
    %v3400 = vand.u32 %v3169, 2147483648
    %v3401 = vor.u32 1.1754944e-38, %v3400
    %v3402 = vsel %vm3399, %v3401, %v3397
    %v3403 = vmul.f32 1.0, %v3402
    %v3404 = vrcp.pop %v3170
    %v3405 = vmul.f32 %v3170, %v3404
    %v3406 = vsub.f32 1.0, %v3405
    %v3407 = vmul.f32 %v3404, %v3406
    %v3408 = vadd.f32 %v3404, %v3407
    %vm3409 = vweird.f32 %v3170
    %vm3410 = vweird.f32 %v3404
    %vm3411 = vmor %vm3409, %vm3410
    %v3412 = vsel %vm3411, %v3404, %v3408
    %v3413 = vand.u32 2147483647, %v3170
    %vm3414 = vcmp.eq.f32.partialorder %v3413, 8.507059e+37
    %v3415 = vand.u32 %v3170, 2147483648
    %v3416 = vor.u32 1.1754944e-38, %v3415
    %v3417 = vsel %vm3414, %v3416, %v3412
    %v3418 = vmul.f32 1.0, %v3417
    %v3419 = vrcp.pop %v3171
    %v3420 = vmul.f32 %v3171, %v3419
    %v3421 = vsub.f32 1.0, %v3420
    %v3422 = vmul.f32 %v3419, %v3421
    %v3423 = vadd.f32 %v3419, %v3422
    %vm3424 = vweird.f32 %v3171
    %vm3425 = vweird.f32 %v3419
    %vm3426 = vmor %vm3424, %vm3425
    %v3427 = vsel %vm3426, %v3419, %v3423
    %v3428 = vand.u32 2147483647, %v3171
    %vm3429 = vcmp.eq.f32.partialorder %v3428, 8.507059e+37
    %v3430 = vand.u32 %v3171, 2147483648
    %v3431 = vor.u32 1.1754944e-38, %v3430
    %v3432 = vsel %vm3429, %v3431, %v3427
    %v3433 = vmul.f32 1.0, %v3432
    %v3434 = vrcp.pop %v3172
    %v3435 = vmul.f32 %v3172, %v3434
    %v3436 = vsub.f32 1.0, %v3435
    %v3437 = vmul.f32 %v3434, %v3436
    %v3438 = vadd.f32 %v3434, %v3437
    %vm3439 = vweird.f32 %v3172
    %vm3440 = vweird.f32 %v3434
    %vm3441 = vmor %vm3439, %vm3440
    %v3442 = vsel %vm3441, %v3434, %v3438
    %v3443 = vand.u32 2147483647, %v3172
    %vm3444 = vcmp.eq.f32.partialorder %v3443, 8.507059e+37
    %v3445 = vand.u32 %v3172, 2147483648
    %v3446 = vor.u32 1.1754944e-38, %v3445
    %v3447 = vsel %vm3444, %v3446, %v3442
    %v3448 = vmul.f32 1.0, %v3447
    %v3449 = vrcp.pop %v3173
    %v3450 = vmul.f32 %v3173, %v3449
    %v3451 = vsub.f32 1.0, %v3450
    %v3452 = vmul.f32 %v3449, %v3451
    %v3453 = vadd.f32 %v3449, %v3452
    %vm3454 = vweird.f32 %v3173
    %vm3455 = vweird.f32 %v3449
    %vm3456 = vmor %vm3454, %vm3455
    %v3457 = vsel %vm3456, %v3449, %v3453
    %v3458 = vand.u32 2147483647, %v3173
    %vm3459 = vcmp.eq.f32.partialorder %v3458, 8.507059e+37
    %v3460 = vand.u32 %v3173, 2147483648
    %v3461 = vor.u32 1.1754944e-38, %v3460
    %v3462 = vsel %vm3459, %v3461, %v3457
    %v3463 = vmul.f32 1.0, %v3462
    %v3464 = vrcp.pop %v3174
    %v3465 = vmul.f32 %v3174, %v3464
    %v3466 = vsub.f32 1.0, %v3465
    %v3467 = vmul.f32 %v3464, %v3466
    %v3468 = vadd.f32 %v3464, %v3467
    %vm3469 = vweird.f32 %v3174
    %vm3470 = vweird.f32 %v3464
    %vm3471 = vmor %vm3469, %vm3470
    %v3472 = vsel %vm3471, %v3464, %v3468
    %v3473 = vand.u32 2147483647, %v3174
    %vm3474 = vcmp.eq.f32.partialorder %v3473, 8.507059e+37
    %v3475 = vand.u32 %v3174, 2147483648
    %v3476 = vor.u32 1.1754944e-38, %v3475
    %v3477 = vsel %vm3474, %v3476, %v3472
    %v3478 = vmul.f32 1.0, %v3477
    %v3479 = vrcp.pop %v3175
    %v3480 = vmul.f32 %v3175, %v3479
    %v3481 = vsub.f32 1.0, %v3480
    %v3482 = vmul.f32 %v3479, %v3481
    %v3483 = vadd.f32 %v3479, %v3482
    %vm3484 = vweird.f32 %v3175
    %vm3485 = vweird.f32 %v3479
    %vm3486 = vmor %vm3484, %vm3485
    %v3487 = vsel %vm3486, %v3479, %v3483
    %v3488 = vand.u32 2147483647, %v3175
    %vm3489 = vcmp.eq.f32.partialorder %v3488, 8.507059e+37
    %v3490 = vand.u32 %v3175, 2147483648
    %v3491 = vor.u32 1.1754944e-38, %v3490
    %v3492 = vsel %vm3489, %v3491, %v3487
    %v3493 = vmul.f32 1.0, %v3492
    %v3494 = vrcp.pop %v3176
    %v3495 = vmul.f32 %v3176, %v3494
    %v3496 = vsub.f32 1.0, %v3495
    %v3497 = vmul.f32 %v3494, %v3496
    %v3498 = vadd.f32 %v3494, %v3497
    %vm3499 = vweird.f32 %v3176
    %vm3500 = vweird.f32 %v3494
    %vm3501 = vmor %vm3499, %vm3500
    %v3502 = vsel %vm3501, %v3494, %v3498
    %v3503 = vand.u32 2147483647, %v3176
    %vm3504 = vcmp.eq.f32.partialorder %v3503, 8.507059e+37
    %v3505 = vand.u32 %v3176, 2147483648
    %v3506 = vor.u32 1.1754944e-38, %v3505
    %v3507 = vsel %vm3504, %v3506, %v3502
    %v3508 = vmul.f32 1.0, %v3507
    %v3509 = vrcp.pop %v3177
    %v3510 = vmul.f32 %v3177, %v3509
    %v3511 = vsub.f32 1.0, %v3510
    %v3512 = vmul.f32 %v3509, %v3511
    %v3513 = vadd.f32 %v3509, %v3512
    %vm3514 = vweird.f32 %v3177
    %vm3515 = vweird.f32 %v3509
    %vm3516 = vmor %vm3514, %vm3515
    %v3517 = vsel %vm3516, %v3509, %v3513
    %v3518 = vand.u32 2147483647, %v3177
    %vm3519 = vcmp.eq.f32.partialorder %v3518, 8.507059e+37
    %v3520 = vand.u32 %v3177, 2147483648
    %v3521 = vor.u32 1.1754944e-38, %v3520
    %v3522 = vsel %vm3519, %v3521, %v3517
    %v3523 = vmul.f32 1.0, %v3522
    %v3524 = vrcp.pop %v3178
    %v3525 = vmul.f32 %v3178, %v3524
    %v3526 = vsub.f32 1.0, %v3525
    %v3527 = vmul.f32 %v3524, %v3526
    %v3528 = vadd.f32 %v3524, %v3527
    %vm3529 = vweird.f32 %v3178
    %vm3530 = vweird.f32 %v3524
    %vm3531 = vmor %vm3529, %vm3530
    %v3532 = vsel %vm3531, %v3524, %v3528
    %v3533 = vand.u32 2147483647, %v3178
    %vm3534 = vcmp.eq.f32.partialorder %v3533, 8.507059e+37
    %v3535 = vand.u32 %v3178, 2147483648
    %v3536 = vor.u32 1.1754944e-38, %v3535
    %v3537 = vsel %vm3534, %v3536, %v3532
    %v3538 = vmul.f32 1.0, %v3537
    %v3539 = vrcp.pop 64.0
    %v3540 = vmul.f32 64.0, %v3539
    %v3541 = vsub.f32 1.0, %v3540
    %v3542 = vmul.f32 %v3539, %v3541
    %v3543 = vadd.f32 %v3539, %v3542
    %vm3544 = vweird.f32 %v3539
    %v3545 = vsel %vm3544, %v3539, %v3543
    %v3546 = vmul.f32 %v3193, %v3545
    %v3547 = vmul.f32 %v3208, %v3545
    %v3548 = vmul.f32 %v3223, %v3545
    %v3549 = vmul.f32 %v3238, %v3545
    %v3550 = vmul.f32 %v3253, %v3545
    %v3551 = vmul.f32 %v3268, %v3545
    %v3552 = vmul.f32 %v3283, %v3545
    %v3553 = vmul.f32 %v3298, %v3545
    %v3554 = vmul.f32 %v3313, %v3545
    %v3555 = vmul.f32 %v3328, %v3545
    %v3556 = vmul.f32 %v3343, %v3545
    %v3557 = vmul.f32 %v3358, %v3545
    %v3558 = vmul.f32 %v3373, %v3545
    %v3559 = vmul.f32 %v3388, %v3545
    %v3560 = vmul.f32 %v3403, %v3545
    %v3561 = vmul.f32 %v3418, %v3545
    %v3562 = vmul.f32 %v3433, %v3545
    %v3563 = vmul.f32 %v3448, %v3545
    %v3564 = vmul.f32 %v3463, %v3545
    %v3565 = vmul.f32 %v3478, %v3545
    %v3566 = vmul.f32 %v3493, %v3545
    %v3567 = vmul.f32 %v3508, %v3545
    %v3568 = vmul.f32 %v3523, %v3545
    %v3569 = vmul.f32 %v3538, %v3545
    %v3570 = vmul.f32 %v3546, %v2160
    %v3571 = vmul.f32 %v3547, %v2163
    %v3572 = vmul.f32 %v3548, %v2166
    %v3573 = vmul.f32 %v3549, %v2169
    %v3574 = vmul.f32 %v3550, %v2172
    %v3575 = vmul.f32 %v3551, %v2175
    %v3576 = vmul.f32 %v3552, %v2178
    %v3577 = vmul.f32 %v3553, %v2181
    %v3578 = vmul.f32 %v3554, %v2184
    %v3579 = vmul.f32 %v3555, %v2187
    %v3580 = vmul.f32 %v3556, %v2190
    %v3581 = vmul.f32 %v3557, %v2193
    %v3582 = vmul.f32 %v3558, %v2196
    %v3583 = vmul.f32 %v3559, %v2199
    %v3584 = vmul.f32 %v3560, %v2202
    %v3585 = vmul.f32 %v3561, %v2205
    %v3586 = vmul.f32 %v3562, %v2208
    %v3587 = vmul.f32 %v3563, %v2211
    %v3588 = vmul.f32 %v3564, %v2214
    %v3589 = vmul.f32 %v3565, %v2217
    %v3590 = vmul.f32 %v3566, %v2220
    %v3591 = vmul.f32 %v3567, %v2223
    %v3592 = vmul.f32 %v3568, %v2226
    %v3593 = vmul.f32 %v3569, %v2229
    %v3594 = vsel %vm628, %v3570, 0.0
    %v3595 = vsel %vm628, %v3578, 0.0
    %v3596 = vadd.f32 %v3594, %v3595
    %v3597 = vsel %vm628, %v3586, 0.0
    %v3598 = vadd.f32 %v3596, %v3597
    %v3599 = vsel %vm628, %v3571, 0.0
    %v3600 = vsel %vm628, %v3579, 0.0
    %v3601 = vadd.f32 %v3599, %v3600
    %v3602 = vsel %vm628, %v3587, 0.0
    %v3603 = vadd.f32 %v3601, %v3602
    %v3604 = vsel %vm628, %v3572, 0.0
    %v3605 = vsel %vm628, %v3580, 0.0
    %v3606 = vadd.f32 %v3604, %v3605
    %v3607 = vsel %vm628, %v3588, 0.0
    %v3608 = vadd.f32 %v3606, %v3607
    %v3609 = vsel %vm628, %v3573, 0.0
    %v3610 = vsel %vm628, %v3581, 0.0
    %v3611 = vadd.f32 %v3609, %v3610
    %v3612 = vsel %vm628, %v3589, 0.0
    %v3613 = vadd.f32 %v3611, %v3612
    %v3614 = vsel %vm628, %v3574, 0.0
    %v3615 = vsel %vm628, %v3582, 0.0
    %v3616 = vadd.f32 %v3614, %v3615
    %v3617 = vsel %vm628, %v3590, 0.0
    %v3618 = vadd.f32 %v3616, %v3617
    %v3619 = vsel %vm628, %v3575, 0.0
    %v3620 = vsel %vm628, %v3583, 0.0
    %v3621 = vadd.f32 %v3619, %v3620
    %v3622 = vsel %vm628, %v3591, 0.0
    %v3623 = vadd.f32 %v3621, %v3622
    %v3624 = vsel %vm628, %v3576, 0.0
    %v3625 = vsel %vm628, %v3584, 0.0
    %v3626 = vadd.f32 %v3624, %v3625
    %v3627 = vsel %vm628, %v3592, 0.0
    %v3628 = vadd.f32 %v3626, %v3627
    %v3629 = vsel %vm628, %v3577, 0.0
    %v3630 = vsel %vm628, %v3585, 0.0
    %v3631 = vadd.f32 %v3629, %v3630
    %v3632 = vsel %vm628, %v3593, 0.0
    %v3633 = vadd.f32 %v3631, %v3632
    %3634 = vst.msk [vmem:[#allocation2] sm:$0xff] %vm628, %v3598
    %3635 = vst.msk [vmem:[#allocation2 + $0x8] sm:$0xff] %vm628, %v3603
    %3636 = vst.msk [vmem:[#allocation2 + $0x10] sm:$0xff] %vm628, %v3608
    %3637 = vst.msk [vmem:[#allocation2 + $0x18] sm:$0xff] %vm628, %v3613
    %3638 = vst.msk [vmem:[#allocation2 + $0x20] sm:$0xff] %vm628, %v3618
    %3639 = vst.msk [vmem:[#allocation2 + $0x28] sm:$0xff] %vm628, %v3623
    %3640 = vst.msk [vmem:[#allocation2 + $0x30] sm:$0xff] %vm628, %v3628
    %3641 = vst.msk [vmem:[#allocation2 + $0x38] sm:$0xff] %vm628, %v3633
    %3642 = vrot.lane.b32.xlu0 %v1998, 32
    %v3643 = vpop.permute.xlu0 %3642
    %3644 = vrot.lane.b32.xlu0 %v1999, 32
    %v3645 = vpop.permute.xlu0 %3644
    %3646 = vrot.lane.b32.xlu0 %v2000, 32
    %v3647 = vpop.permute.xlu0 %3646
    %3648 = vrot.lane.b32.xlu0 %v2001, 32
    %v3649 = vpop.permute.xlu0 %3648
    %3650 = vrot.lane.b32.xlu0 %v2002, 32
    %v3651 = vpop.permute.xlu0 %3650
    %3652 = vrot.lane.b32.xlu0 %v2003, 32
    %v3653 = vpop.permute.xlu0 %3652
    %3654 = vrot.lane.b32.xlu0 %v2004, 32
    %v3655 = vpop.permute.xlu0 %3654
    %3656 = vrot.lane.b32.xlu0 %v2005, 32
    %v3657 = vpop.permute.xlu0 %3656
    %vm3666 = vcmask 523520
    %3667 = vst.msk [vmem:[#allocation2] sm:$0xff] %vm3666, %v3643
    %3668 = vst.msk [vmem:[#allocation2 + $0x8] sm:$0xff] %vm3666, %v3645
    %3669 = vst.msk [vmem:[#allocation2 + $0x10] sm:$0xff] %vm3666, %v3647
    %3670 = vst.msk [vmem:[#allocation2 + $0x18] sm:$0xff] %vm3666, %v3649
    %3671 = vst.msk [vmem:[#allocation2 + $0x20] sm:$0xff] %vm3666, %v3651
    %3672 = vst.msk [vmem:[#allocation2 + $0x28] sm:$0xff] %vm3666, %v3653
    %3673 = vst.msk [vmem:[#allocation2 + $0x30] sm:$0xff] %vm3666, %v3655
    %3674 = vst.msk [vmem:[#allocation2 + $0x38] sm:$0xff] %vm3666, %v3657
    // Predicated region
    $region26: #{stgsn_enc_forward.1} parent=1 // pred_check
      _
    $region27: #{stgsn_enc_forward.1} parent=1 // pred_check_branch
      %3676 = sbr.rel (0) target = $region29
    $region28: #{stgsn_enc_forward.1} parent=1 // pred_region
      %3678 = vsyncadd [#allocation3], 0
      %s3679 = sshll.u32 [#allocation2], 4
      %s3680 = int_to_ptr.vmem [resolvable:$true] %s3679
      %s3681 = sshll.u32 %s6, 4
      %s3682 = int_to_ptr.hbm [resolvable:$true] %s3681
      %3687 = dma.vmem_to_hbm [thread:$0]  %s3680, 1024, %s3682, [#allocation3], 128, 128, 8
    $region29: #{stgsn_enc_forward.1} parent=1 // pred_fallthru
      _
    // Predicated region
    $region30: #{stgsn_enc_forward.1} parent=1 // pred_check
      _
    $region31: #{stgsn_enc_forward.1} parent=1 // pred_check_branch
      %3689 = sbr.rel (0) target = $region33
    $region32: #{stgsn_enc_forward.1} parent=1 // pred_region
      %3691 = vsyncadd [#allocation5], 0
      %s3693 = sshll.u32 [#allocation4], 4
      %s3694 = int_to_ptr.vmem [resolvable:$true] %s3693
      %s3695 = sshll.u32 %s7, 4
      %s3696 = int_to_ptr.hbm [resolvable:$true] %s3695
      %3698 = dma.vmem_to_hbm [thread:$0]  %s3694, 16, %s3696, [#allocation5]
    $region33: #{stgsn_enc_forward.1} parent=1 // pred_fallthru
      _
    // Predicated region
    $region34: #{stgsn_enc_forward.1} parent=1 // pred_check
      _
    $region35: #{stgsn_enc_forward.1} parent=1 // pred_check_branch
      %3700 = sbr.rel (0) target = $region37
    $region36: #{stgsn_enc_forward.1} parent=1 // pred_region
      %3702 = dma.done [#allocation3], 1024
    $region37: #{stgsn_enc_forward.1} parent=1 // pred_fallthru
      _
    // Predicated region
    $region38: #{stgsn_enc_forward.1} parent=1 // pred_check
      _
    $region39: #{stgsn_enc_forward.1} parent=1 // pred_check_branch
      %3704 = sbr.rel (0) target = $region41
    $region40: #{stgsn_enc_forward.1} parent=1 // pred_region
      %3706 = dma.done [#allocation5], 16
    $region41: #{stgsn_enc_forward.1} parent=1 // pred_fallthru
      _
    %3707 = vsyncpa [#allocation3], 1
    %3708 = vsyncpa [#allocation5], 1

</llo_original>
